<compile_context>
chip_gen: v6e
topology: v6e:2x2x1
jax: 0.10.0
libtpu: 0.0.40
codegen_flags: <defaults>
</compile_context>

<pallas_src>
import math

import jax
import jax.numpy as jnp
from jax.experimental import pallas as pl
from jax.experimental.pallas import tpu as pltpu

# ----------------------------- configuration -------------------------------
N = 2            # batch
C = 16           # feature channels
H = W = 16       # feature spatial size
MID = 16         # hidden channels of the 3x3 conv in the RPN head
A = 2            # anchors per location
IMG_H = IMG_W = 128
STRIDE = IMG_H // H
ANCHOR_SIZES = (16.0, 32.0)

PRE_NMS_TOP_N = {"training": 64, "testing": 32}
POST_NMS_TOP_N = {"training": 32, "testing": 16}
NMS_THRESH = 0.7
SCORE_THRESH = 0.0
MIN_SIZE = 0.001
BBOX_XFORM_CLIP = math.log(1000.0 / 16.0)

HWA = H * W * A                  # anchors per image
HP = H + 2                       # padded height
FLAT_ROWS = N * HP * W           # rows of the flattened padded map (576)
Q = FLAT_ROWS - 2 * W            # rows the kernel computes (544)
K3 = 3 * C                       # per-tap reduction width (48)
HEAD_OUT = 3 * A                 # fused 1x1 head columns: [logit | dy | dh]
CONST_LEN = MID + 4 * A          # [conv_b | cls_b | dy_b | dh_b | anchor sizes]
OUT_LANES = 128                  # lane-dense output slab width
W_SHIFT = int(math.log2(W))
assert (1 << W_SHIFT) == W
assert Q % 8 == 0 and FLAT_ROWS % 8 == 0


# -------------------- Pallas kernel: fused RPN head + decode ----------------
def rpn_fused_kernel(x_ref, w1_ref, w2_ref, c_ref, out_ref):
    """Fused: 3x3 conv + ReLU + 1x1 cls/reg convs + box decode + sigmoid.

    x_ref:   (FLAT_ROWS, 3C)  row-flattened padded NHWC map, W-shifts packed
                              into the channel axis (j*C + c).
    w1_ref:  (3, 3C, MID)     per-kh-row im2col conv weight.
    w2_ref:  (MID, 3A)        fused 1x1 head, columns [cls | dy | dh].
    c_ref:   (1, MID + 4A)    [conv_b | cls_b | dy_b | dh_b | anchor sizes].
    out_ref: (Q, 128)         lane-dense slab, cols [logits | scores | lo | hi | 0...].
    """
    # 3x3 conv as three row-shifted matmuls (shift offsets are tile aligned).
    acc = jnp.dot(x_ref[0:Q, :], w1_ref[0], preferred_element_type=jnp.float32)
    acc = acc + jnp.dot(x_ref[W:W + Q, :], w1_ref[1],
                        preferred_element_type=jnp.float32)
    acc = acc + jnp.dot(x_ref[2 * W:2 * W + Q, :], w1_ref[2],
                        preferred_element_type=jnp.float32)
    hid = jnp.maximum(acc + c_ref[:, 0:MID], 0.0)                 # (Q, MID)

    # Fused 1x1 objectness + bbox-delta convs.
    t = jnp.dot(hid, w2_ref[...], preferred_element_type=jnp.float32)
    t = t + c_ref[:, MID:MID + HEAD_OUT]                          # (Q, 3A)
    logits = t[:, 0:A]
    dy = t[:, A:2 * A]
    dh = jnp.minimum(t[:, 2 * A:3 * A], BBOX_XFORM_CLIP)          # box_coder clamp

    # Anchor geometry computed in-kernel: height = anchor size (per a),
    # centre = h * STRIDE where h is the row within the (padded) image.
    qi = jax.lax.broadcasted_iota(jnp.int32, (Q, 1), 0)
    rowf = (qi >> W_SHIFT).astype(jnp.float32)                    # n*HP + h
    imgf = jnp.floor((rowf + 0.5) * (1.0 / HP))                   # image index n
    ctr = (rowf - HP * imgf) * float(STRIDE)                      # (Q, 1)
    heights = c_ref[:, MID + HEAD_OUT:MID + HEAD_OUT + A]         # (1, A)

    pred_ctr = dy * heights + ctr                                 # weights = (1, 1)
    pred_h = jnp.exp(dh) * heights
    lo = pred_ctr - 0.5 * pred_h
    hi = pred_ctr + 0.5 * pred_h

    # Lane-dense packed output slab (column-slice writes; no lane concats).
    out_ref[...] = jnp.zeros_like(out_ref)
    out_ref[:, 0:A] = logits
    out_ref[:, A:2 * A] = jax.nn.sigmoid(logits)
    out_ref[:, 2 * A:3 * A] = lo
    out_ref[:, 3 * A:4 * A] = hi


def _rpn_head_decode(xflat, w1, w2, consts):
    return pl.pallas_call(
        rpn_fused_kernel,
        out_shape=jax.ShapeDtypeStruct((Q, OUT_LANES), jnp.float32),
        in_specs=[pl.BlockSpec(memory_space=pltpu.MemorySpace.VMEM)] * 4,
        out_specs=pl.BlockSpec(memory_space=pltpu.MemorySpace.VMEM),
    )(xflat, w1, w2, consts)


# ------------------------- post-processing (vmapped) ------------------------
def greedy_nms_keep(boxes, valid, iou_thresh):
    """Greedy NMS over score-sorted boxes; returns a fixed-size keep mask."""
    m = boxes.shape[0]
    x1, y1, x2, y2 = boxes[:, 0], boxes[:, 1], boxes[:, 2], boxes[:, 3]
    area = jnp.clip(x2 - x1, 0.0) * jnp.clip(y2 - y1, 0.0)
    ix1 = jnp.maximum(x1[:, None], x1[None, :])
    iy1 = jnp.maximum(y1[:, None], y1[None, :])
    ix2 = jnp.minimum(x2[:, None], x2[None, :])
    iy2 = jnp.minimum(y2[:, None], y2[None, :])
    inter = jnp.clip(ix2 - ix1, 0.0) * jnp.clip(iy2 - iy1, 0.0)
    iou = inter / jnp.maximum(area[:, None] + area[None, :] - inter, 1e-9)
    idx = jnp.arange(m)

    def body(i, keep):
        cur = keep[i]
        suppress = cur & (iou[i] > iou_thresh) & (idx > i)
        return jnp.where(suppress, False, keep)

    return jax.lax.fori_loop(0, m, body, valid)


def _filter_one(lo, hi, logits, scores, img_hw):
    """Per-image clip + small-box/score filter + greedy NMS + top-k."""
    # TODO(synk): torch returns variable-length per-image lists; here invalid
    # slots are zero-padded to keep shapes static.
    pre_n = min(PRE_NMS_TOP_N["testing"], logits.shape[0])
    post_n = POST_NMS_TOP_N["testing"]

    _, top_idx = jax.lax.top_k(logits, pre_n)          # top-k on objectness logits
    s = scores[top_idx]
    img_h, img_w = img_hw[0], img_hw[1]
    x1 = jnp.clip(jnp.zeros((pre_n,), jnp.float32), 0.0, img_w)
    y1 = jnp.clip(lo[top_idx], 0.0, img_h)
    x2 = jnp.clip(jnp.ones((pre_n,), jnp.float32), 0.0, img_w)
    y2 = jnp.clip(hi[top_idx], 0.0, img_h)
    b = jnp.stack([x1, y1, x2, y2], axis=1)
    valid = ((x2 - x1) >= MIN_SIZE) & ((y2 - y1) >= MIN_SIZE) & (s >= SCORE_THRESH)
    keep = greedy_nms_keep(b, valid, NMS_THRESH)       # single level -> plain NMS
    masked = jnp.where(keep, s, -1.0)
    vals, idx = jax.lax.top_k(masked, post_n)
    ok = vals > -1.0
    return jnp.where(ok[:, None], b[idx], 0.0), jnp.where(ok, s[idx], 0.0)


# --------------------------------- forward ----------------------------------
def _rpn_forward_impl(features, params, image_shapes):
    w1, w2, consts = params

    # Cheap layout plumbing: pad spatially, NCHW -> NHWC, pack the 3 W-shifts
    # into the channel axis, flatten (n, h_padded, w) rows.
    xpad = jnp.pad(features, ((0, 0), (0, 0), (1, 1), (1, 1)))     # (N,C,H+2,W+2)
    xn = jnp.transpose(xpad, (0, 2, 3, 1))                         # (N,H+2,W+2,C)
    xsh = jnp.concatenate([xn[:, :, j:j + W, :] for j in range(3)], axis=-1)
    xflat = xsh.reshape(FLAT_ROWS, K3)                             # (576, 48)

    out = _rpn_head_decode(xflat, w1, w2, consts)                  # (544, 128)

    # Drop the per-image bottom padding rows, then slice the useful columns.
    per_img = jnp.stack(
        [out[n * HP * W:n * HP * W + H * W] for n in range(N)], axis=0)
    logits = per_img[..., 0:A].reshape(N, HWA)       # (n, h, w, a) order
    scores = per_img[..., A:2 * A].reshape(N, HWA)
    lo = per_img[..., 2 * A:3 * A].reshape(N, HWA)
    hi = per_img[..., 3 * A:4 * A].reshape(N, HWA)

    boxes, final_scores = jax.vmap(_filter_one)(lo, hi, logits, scores,
                                                image_shapes)
    return boxes, final_scores


_rpn_forward_jit = jax.jit(_rpn_forward_impl)


def rpn_forward(features, params, image_shapes):
    """Eval-mode RegionProposalNetwork.forward (losses == {})."""
    boxes, scores = _rpn_forward_jit(features, params, image_shapes)
    # TODO(synk): training branch (Matcher / BalancedPositiveNegativeSampler /
    # smooth_l1 + BCE losses) is not exercised in this eval-mode forward.
    return boxes, scores, {}


# --------------------------------- params -----------------------------------
def init_params(key):
    ks = jax.random.split(key, 3)
    conv_w = 0.01 * jax.random.normal(ks[0], (MID, C, 3, 3), jnp.float32)
    conv_b = jnp.zeros((MID,), jnp.float32)
    cls_w = 0.01 * jax.random.normal(ks[1], (A, MID), jnp.float32)
    cls_b = jnp.zeros((A,), jnp.float32)
    reg_w = 0.01 * jax.random.normal(ks[2], (2 * A, MID), jnp.float32)  # rows (a, c)
    reg_b = jnp.zeros((2 * A,), jnp.float32)

    # conv (out, in, kh, kw) -> per-kh-row im2col weight: w1[i, j*C + c, m].
    w1 = jnp.transpose(conv_w, (2, 3, 1, 0)).reshape(3, K3, MID)
    # Fused 1x1 head, columns [cls(A) | dy(A) | dh(A)].
    w2 = jnp.concatenate([cls_w.T, reg_w[0::2].T, reg_w[1::2].T], axis=1)
    # One constants operand: biases (column order matching w2) + anchor sizes.
    consts = jnp.concatenate(
        [conv_b, cls_b, reg_b[0::2], reg_b[1::2],
         jnp.asarray(ANCHOR_SIZES, jnp.float32)])[None, :]
    assert consts.shape == (1, CONST_LEN)
    return (w1, w2, consts)


if __name__ == "__main__":
    key = jax.random.PRNGKey(0)
    k_feat, k_par = jax.random.split(key)
    features = jax.random.normal(k_feat, (N, C, H, W), jnp.float32)   # NCHW
    params = init_params(k_par)
    image_shapes = jnp.array([[IMG_H, IMG_W]] * N, jnp.float32)

    boxes, scores, losses = rpn_forward(features, params, image_shapes)
    jax.block_until_ready(boxes)
    jax.block_until_ready(scores)

    assert boxes.shape == (N, POST_NMS_TOP_N["testing"], 4)
    assert scores.shape == (N, POST_NMS_TOP_N["testing"])
    assert bool(jnp.all(jnp.isfinite(boxes))) and bool(jnp.all(jnp.isfinite(scores)))
    assert losses == {}
    print("KERNEL_OK")
</pallas_src>

<mosaic_0001>
module attributes {stable_mosaic.version = 11 : i64} {
  func.func @rpn_fused_kernel(%arg0: memref<576x48xf32, #tpu.memory_space<vmem>>, %arg1: memref<3x48x16xf32, #tpu.memory_space<vmem>>, %arg2: memref<16x6xf32, #tpu.memory_space<vmem>>, %arg3: memref<1x24xf32, #tpu.memory_space<vmem>>, %arg4: memref<544x128xf32, #tpu.memory_space<vmem>>) attributes {dimension_semantics = [], scalar_prefetch = 0 : i64, scratch_operands = 0 : i64, tpu.core_type = #tpu.core_type<tc>} {
    %c0 = arith.constant 0 : index
    %c0_0 = arith.constant 0 : index
    %0 = vector.load %arg0[%c0, %c0_0] : memref<576x48xf32, #tpu.memory_space<vmem>>, vector<544x48xf32>
    %c0_1 = arith.constant 0 : index
    %c0_2 = arith.constant 0 : index
    %c0_3 = arith.constant 0 : index
    %1 = vector.load %arg1[%c0_1, %c0_2, %c0_3] : memref<3x48x16xf32, #tpu.memory_space<vmem>>, vector<1x48x16xf32>
    %2 = vector.shape_cast %1 : vector<1x48x16xf32> to vector<48x16xf32>
    %cst = arith.constant dense<0.000000e+00> : vector<544x16xf32>
    %3 = tpu.matmul %0, %2, %cst {dimension_numbers = #tpu.dot_dimension_numbers<[1], [0], [0], [1], [0, 0, 1, 1], [], []>} : vector<544x48xf32>, vector<48x16xf32>, vector<544x16xf32> -> vector<544x16xf32>
    %c16 = arith.constant 16 : index
    %c0_4 = arith.constant 0 : index
    %4 = vector.load %arg0[%c16, %c0_4] : memref<576x48xf32, #tpu.memory_space<vmem>>, vector<544x48xf32>
    %c1 = arith.constant 1 : index
    %c0_5 = arith.constant 0 : index
    %c0_6 = arith.constant 0 : index
    %5 = vector.load %arg1[%c1, %c0_5, %c0_6] : memref<3x48x16xf32, #tpu.memory_space<vmem>>, vector<1x48x16xf32>
    %6 = vector.shape_cast %5 : vector<1x48x16xf32> to vector<48x16xf32>
    %cst_7 = arith.constant dense<0.000000e+00> : vector<544x16xf32>
    %7 = tpu.matmul %4, %6, %cst_7 {dimension_numbers = #tpu.dot_dimension_numbers<[1], [0], [0], [1], [0, 0, 1, 1], [], []>} : vector<544x48xf32>, vector<48x16xf32>, vector<544x16xf32> -> vector<544x16xf32>
    %8 = arith.addf %3, %7 : vector<544x16xf32>
    %c32 = arith.constant 32 : index
    %c0_8 = arith.constant 0 : index
    %9 = vector.load %arg0[%c32, %c0_8] : memref<576x48xf32, #tpu.memory_space<vmem>>, vector<544x48xf32>
    %c2 = arith.constant 2 : index
    %c0_9 = arith.constant 0 : index
    %c0_10 = arith.constant 0 : index
    %10 = vector.load %arg1[%c2, %c0_9, %c0_10] : memref<3x48x16xf32, #tpu.memory_space<vmem>>, vector<1x48x16xf32>
    %11 = vector.shape_cast %10 : vector<1x48x16xf32> to vector<48x16xf32>
    %cst_11 = arith.constant dense<0.000000e+00> : vector<544x16xf32>
    %12 = tpu.matmul %9, %11, %cst_11 {dimension_numbers = #tpu.dot_dimension_numbers<[1], [0], [0], [1], [0, 0, 1, 1], [], []>} : vector<544x48xf32>, vector<48x16xf32>, vector<544x16xf32> -> vector<544x16xf32>
    %13 = arith.addf %8, %12 : vector<544x16xf32>
    %c0_12 = arith.constant 0 : index
    %c0_13 = arith.constant 0 : index
    %14 = vector.load %arg3[%c0_12, %c0_13] : memref<1x24xf32, #tpu.memory_space<vmem>>, vector<1x16xf32>
    %15 = vector.broadcast %14 : vector<1x16xf32> to vector<544x16xf32>
    %16 = arith.addf %13, %15 : vector<544x16xf32>
    %cst_14 = arith.constant 0.000000e+00 : f32
    %17 = vector.broadcast %cst_14 : f32 to vector<544x16xf32>
    %18 = arith.maximumf %16, %17 : vector<544x16xf32>
    %c0_15 = arith.constant 0 : index
    %c0_16 = arith.constant 0 : index
    %19 = vector.load %arg2[%c0_15, %c0_16] : memref<16x6xf32, #tpu.memory_space<vmem>>, vector<16x6xf32>
    %cst_17 = arith.constant dense<0.000000e+00> : vector<544x6xf32>
    %20 = tpu.matmul %18, %19, %cst_17 {dimension_numbers = #tpu.dot_dimension_numbers<[1], [0], [0], [1], [0, 0, 1, 1], [], []>} : vector<544x16xf32>, vector<16x6xf32>, vector<544x6xf32> -> vector<544x6xf32>
    %c0_18 = arith.constant 0 : index
    %c16_19 = arith.constant 16 : index
    %21 = vector.load %arg3[%c0_18, %c16_19] : memref<1x24xf32, #tpu.memory_space<vmem>>, vector<1x6xf32>
    %22 = vector.broadcast %21 : vector<1x6xf32> to vector<544x6xf32>
    %23 = arith.addf %20, %22 : vector<544x6xf32>
    %24 = vector.extract_strided_slice %23 {offsets = [0, 0], sizes = [544, 2], strides = [1, 1]} : vector<544x6xf32> to vector<544x2xf32>
    %25 = vector.extract_strided_slice %23 {offsets = [0, 2], sizes = [544, 2], strides = [1, 1]} : vector<544x6xf32> to vector<544x2xf32>
    %26 = vector.extract_strided_slice %23 {offsets = [0, 4], sizes = [544, 2], strides = [1, 1]} : vector<544x6xf32> to vector<544x2xf32>
    %cst_20 = arith.constant 4.13516665 : f32
    %27 = vector.broadcast %cst_20 : f32 to vector<544x2xf32>
    %28 = arith.minimumf %26, %27 : vector<544x2xf32>
    %29 = tpu.iota {dimensions = array<i32: 0>} : vector<544x1xi32>
    %c4_i32 = arith.constant 4 : i32
    %30 = vector.broadcast %c4_i32 : i32 to vector<544x1xi32>
    %31 = arith.shrsi %29, %30 : vector<544x1xi32>
    %32 = arith.sitofp %31 : vector<544x1xi32> to vector<544x1xf32>
    %cst_21 = arith.constant 5.000000e-01 : f32
    %33 = vector.broadcast %cst_21 : f32 to vector<544x1xf32>
    %34 = arith.addf %32, %33 : vector<544x1xf32>
    %cst_22 = arith.constant 0.055555556 : f32
    %35 = vector.broadcast %cst_22 : f32 to vector<544x1xf32>
    %36 = arith.mulf %34, %35 : vector<544x1xf32>
    %37 = math.floor %36 : vector<544x1xf32>
    %cst_23 = arith.constant 1.800000e+01 : f32
    %38 = vector.broadcast %cst_23 : f32 to vector<544x1xf32>
    %39 = arith.mulf %38, %37 : vector<544x1xf32>
    %40 = arith.subf %32, %39 : vector<544x1xf32>
    %cst_24 = arith.constant 8.000000e+00 : f32
    %41 = vector.broadcast %cst_24 : f32 to vector<544x1xf32>
    %42 = arith.mulf %40, %41 : vector<544x1xf32>
    %c0_25 = arith.constant 0 : index
    %c22 = arith.constant 22 : index
    %43 = vector.load %arg3[%c0_25, %c22] : memref<1x24xf32, #tpu.memory_space<vmem>>, vector<1x2xf32>
    %44 = vector.broadcast %43 : vector<1x2xf32> to vector<544x2xf32>
    %45 = arith.mulf %25, %44 : vector<544x2xf32>
    %46 = vector.broadcast %42 : vector<544x1xf32> to vector<544x2xf32>
    %47 = arith.addf %45, %46 : vector<544x2xf32>
    %48 = math.exp %28 : vector<544x2xf32>
    %49 = vector.broadcast %43 : vector<1x2xf32> to vector<544x2xf32>
    %50 = arith.mulf %48, %49 : vector<544x2xf32>
    %cst_26 = arith.constant 5.000000e-01 : f32
    %51 = vector.broadcast %cst_26 : f32 to vector<544x2xf32>
    %52 = arith.mulf %51, %50 : vector<544x2xf32>
    %53 = arith.subf %47, %52 : vector<544x2xf32>
    %cst_27 = arith.constant 5.000000e-01 : f32
    %54 = vector.broadcast %cst_27 : f32 to vector<544x2xf32>
    %55 = arith.mulf %54, %50 : vector<544x2xf32>
    %56 = arith.addf %47, %55 : vector<544x2xf32>
    %cst_28 = arith.constant 0.000000e+00 : f32
    %57 = vector.broadcast %cst_28 : f32 to vector<544x128xf32>
    %c0_29 = arith.constant 0 : index
    %c0_30 = arith.constant 0 : index
    %58 = vector.load %arg4[%c0_29, %c0_30] : memref<544x128xf32, #tpu.memory_space<vmem>>, vector<544x128xf32>
    tpu.vector_store %arg4[%c0_29, %c0_30], %57 {strides = array<i32>} : memref<544x128xf32, #tpu.memory_space<vmem>>, vector<544x128xf32>,
    %c0_31 = arith.constant 0 : index
    %c0_32 = arith.constant 0 : index
    %59 = vector.load %arg4[%c0_31, %c0_32] : memref<544x128xf32, #tpu.memory_space<vmem>>, vector<544x2xf32>
    tpu.vector_store %arg4[%c0_31, %c0_32], %24 {strides = array<i32>} : memref<544x128xf32, #tpu.memory_space<vmem>>, vector<544x2xf32>,
    %60 = arith.negf %24 : vector<544x2xf32>
    %61 = math.exp %60 : vector<544x2xf32>
    %cst_33 = arith.constant 1.000000e+00 : f32
    %62 = vector.broadcast %cst_33 : f32 to vector<544x2xf32>
    %63 = arith.addf %62, %61 : vector<544x2xf32>
    %64 = arith.divf %62, %63 : vector<544x2xf32>
    %c0_34 = arith.constant 0 : index
    %c2_35 = arith.constant 2 : index
    %65 = vector.load %arg4[%c0_34, %c2_35] : memref<544x128xf32, #tpu.memory_space<vmem>>, vector<544x2xf32>
    tpu.vector_store %arg4[%c0_34, %c2_35], %64 {strides = array<i32>} : memref<544x128xf32, #tpu.memory_space<vmem>>, vector<544x2xf32>,
    %c0_36 = arith.constant 0 : index
    %c4 = arith.constant 4 : index
    %66 = vector.load %arg4[%c0_36, %c4] : memref<544x128xf32, #tpu.memory_space<vmem>>, vector<544x2xf32>
    tpu.vector_store %arg4[%c0_36, %c4], %53 {strides = array<i32>} : memref<544x128xf32, #tpu.memory_space<vmem>>, vector<544x2xf32>,
    %c0_37 = arith.constant 0 : index
    %c6 = arith.constant 6 : index
    %67 = vector.load %arg4[%c0_37, %c6] : memref<544x128xf32, #tpu.memory_space<vmem>>, vector<544x2xf32>
    tpu.vector_store %arg4[%c0_37, %c6], %56 {strides = array<i32>} : memref<544x128xf32, #tpu.memory_space<vmem>>, vector<544x2xf32>,
    return
  }
}

</mosaic_0001>

<llo_original>
// kernel: _rpn_forward_impl.1
$region0: #{_rpn_forward_impl.1}
  #allocation0 [shape = 'u32[]', space=smem, size = 0x4, offset = 0x4, fixed_abs, tag = 'smem constant byte address 0x4 - core index']
  #allocation1 [shape = 'u32[144,128]{1,0:T(1,128)}', space=vmem, size = 0x12000, scoped, tag = 'internal scratch']
  %s0 = inlined_call_operand.vmem [shape: f32[576,48], index: 0, kind: input, shape index: {}]
  %s1 = inlined_call_operand.vmem [shape: f32[3,48,16], index: 1, kind: input, shape index: {}]
  %s2 = inlined_call_operand.vmem [shape: f32[16,6], index: 2, kind: input, shape index: {}]
  %s3 = inlined_call_operand.vmem [shape: f32[1,24], index: 3, kind: input, shape index: {}]
  %s4 = inlined_call_operand.vmem [shape: f32[544,128], index: 4, kind: output, shape index: {}]
  %s5 = sld [smem:[#allocation0]]
  $region26: #{_rpn_forward_impl.1} parent=0
    _
  %s7 = ssub.s32 1, %s5
  %s8 = scalar_select 0, %s7, %s5
  // Predicated region
  $region2: #{_rpn_forward_impl.1} parent=0 // pred_check
    _
  $region3: #{_rpn_forward_impl.1} parent=0 // pred_check_branch
    %10 = sbr.rel (0) target = $region5
  $region4: #{_rpn_forward_impl.1} parent=0 // pred_region
    _
  $region5: #{_rpn_forward_impl.1} parent=0 // pred_fallthru
    _
  // Predicated region
  $region6: #{_rpn_forward_impl.1} parent=0 // pred_check
    _
  $region7: #{_rpn_forward_impl.1} parent=0 // pred_check_branch
    %12 = sbr.rel (0) target = $region9
  $region8: #{_rpn_forward_impl.1} parent=0 // pred_region
    _
  $region9: #{_rpn_forward_impl.1} parent=0 // pred_fallthru
    _
  // Predicated region
  $region10: #{_rpn_forward_impl.1} parent=0 // pred_check
    _
  $region11: #{_rpn_forward_impl.1} parent=0 // pred_check_branch
    %14 = sbr.rel (0) target = $region13
  $region12: #{_rpn_forward_impl.1} parent=0 // pred_region
    _
  $region13: #{_rpn_forward_impl.1} parent=0 // pred_fallthru
    _
  // Predicated region
  $region14: #{_rpn_forward_impl.1} parent=0 // pred_check
    _
  $region15: #{_rpn_forward_impl.1} parent=0 // pred_check_branch
    %16 = sbr.rel (0) target = $region17
  $region16: #{_rpn_forward_impl.1} parent=0 // pred_region
    _
  $region17: #{_rpn_forward_impl.1} parent=0 // pred_fallthru
    _
  %v17 = vld [vmem:[%s0] sm:$0xff]
  %v18 = vld [vmem:[%s0 + $0x8] sm:$0xff]
  %v19 = vld [vmem:[%s0 + $0x10] sm:$0xff]
  %v20 = vld [vmem:[%s0 + $0x18] sm:$0xff]
  %v21 = vld [vmem:[%s0 + $0x20] sm:$0xff]
  %v22 = vld [vmem:[%s0 + $0x28] sm:$0xff]
  %v23 = vld [vmem:[%s0 + $0x30] sm:$0xff]
  %v24 = vld [vmem:[%s0 + $0x38] sm:$0xff]
  %v25 = vld [vmem:[%s0 + $0x40] sm:$0xff]
  %v26 = vld [vmem:[%s0 + $0x48] sm:$0xff]
  %v27 = vld [vmem:[%s0 + $0x50] sm:$0xff]
  %v28 = vld [vmem:[%s0 + $0x58] sm:$0xff]
  %v29 = vld [vmem:[%s0 + $0x60] sm:$0xff]
  %v30 = vld [vmem:[%s0 + $0x68] sm:$0xff]
  %v31 = vld [vmem:[%s0 + $0x70] sm:$0xff]
  %v32 = vld [vmem:[%s0 + $0x78] sm:$0xff]
  %v33 = vld [vmem:[%s0 + $0x80] sm:$0xff]
  %v34 = vld [vmem:[%s0 + $0x88] sm:$0xff]
  %v35 = vld [vmem:[%s0 + $0x90] sm:$0xff]
  %v36 = vld [vmem:[%s0 + $0x98] sm:$0xff]
  %v37 = vld [vmem:[%s0 + $0xa0] sm:$0xff]
  %v38 = vld [vmem:[%s0 + $0xa8] sm:$0xff]
  %v39 = vld [vmem:[%s0 + $0xb0] sm:$0xff]
  %v40 = vld [vmem:[%s0 + $0xb8] sm:$0xff]
  %v41 = vld [vmem:[%s0 + $0xc0] sm:$0xff]
  %v42 = vld [vmem:[%s0 + $0xc8] sm:$0xff]
  %v43 = vld [vmem:[%s0 + $0xd0] sm:$0xff]
  %v44 = vld [vmem:[%s0 + $0xd8] sm:$0xff]
  %v45 = vld [vmem:[%s0 + $0xe0] sm:$0xff]
  %v46 = vld [vmem:[%s0 + $0xe8] sm:$0xff]
  %v47 = vld [vmem:[%s0 + $0xf0] sm:$0xff]
  %v48 = vld [vmem:[%s0 + $0xf8] sm:$0xff]
  %v49 = vld [vmem:[%s0 + $0x100] sm:$0xff]
  %v50 = vld [vmem:[%s0 + $0x108] sm:$0xff]
  %v51 = vld [vmem:[%s0 + $0x110] sm:$0xff]
  %v52 = vld [vmem:[%s0 + $0x118] sm:$0xff]
  %v53 = vld [vmem:[%s0 + $0x120] sm:$0xff]
  %v54 = vld [vmem:[%s0 + $0x128] sm:$0xff]
  %v55 = vld [vmem:[%s0 + $0x130] sm:$0xff]
  %v56 = vld [vmem:[%s0 + $0x138] sm:$0xff]
  %v57 = vld [vmem:[%s0 + $0x140] sm:$0xff]
  %v58 = vld [vmem:[%s0 + $0x148] sm:$0xff]
  %v59 = vld [vmem:[%s0 + $0x150] sm:$0xff]
  %v60 = vld [vmem:[%s0 + $0x158] sm:$0xff]
  %v61 = vld [vmem:[%s0 + $0x160] sm:$0xff]
  %v62 = vld [vmem:[%s0 + $0x168] sm:$0xff]
  %v63 = vld [vmem:[%s0 + $0x170] sm:$0xff]
  %v64 = vld [vmem:[%s0 + $0x178] sm:$0xff]
  %v65 = vld [vmem:[%s0 + $0x180] sm:$0xff]
  %v66 = vld [vmem:[%s0 + $0x188] sm:$0xff]
  %v67 = vld [vmem:[%s0 + $0x190] sm:$0xff]
  %v68 = vld [vmem:[%s0 + $0x198] sm:$0xff]
  %v69 = vld [vmem:[%s0 + $0x1a0] sm:$0xff]
  %v70 = vld [vmem:[%s0 + $0x1a8] sm:$0xff]
  %v71 = vld [vmem:[%s0 + $0x1b0] sm:$0xff]
  %v72 = vld [vmem:[%s0 + $0x1b8] sm:$0xff]
  %v73 = vld [vmem:[%s0 + $0x1c0] sm:$0xff]
  %v74 = vld [vmem:[%s0 + $0x1c8] sm:$0xff]
  %v75 = vld [vmem:[%s0 + $0x1d0] sm:$0xff]
  %v76 = vld [vmem:[%s0 + $0x1d8] sm:$0xff]
  %v77 = vld [vmem:[%s0 + $0x1e0] sm:$0xff]
  %v78 = vld [vmem:[%s0 + $0x1e8] sm:$0xff]
  %v79 = vld [vmem:[%s0 + $0x1f0] sm:$0xff]
  %v80 = vld [vmem:[%s0 + $0x1f8] sm:$0xff]
  %v81 = vld [vmem:[%s0 + $0x200] sm:$0xff]
  %v82 = vld [vmem:[%s0 + $0x208] sm:$0xff]
  %v83 = vld [vmem:[%s0 + $0x210] sm:$0xff]
  %v84 = vld [vmem:[%s0 + $0x218] sm:$0xff]
  %v85 = vld [vmem:[%s1] sm:$0xff]
  %v86 = vld [vmem:[%s1 + $0x8] sm:$0xff]
  %v87 = vld [vmem:[%s1 + $0x10] sm:$0xff]
  %v88 = vld [vmem:[%s1 + $0x18] sm:$0xff]
  %v89 = vld [vmem:[%s1 + $0x20] sm:$0xff]
  %v90 = vld [vmem:[%s1 + $0x28] sm:$0xff]
  %v91 = vld [vmem:[%s0 + $0x220] sm:$0xff]
  %v92 = vld [vmem:[%s0 + $0x228] sm:$0xff]
  %s93 = scalar_lea.vmem %s1, 48
  %v94 = vld [vmem:[%s93] sm:$0xff]
  %v95 = vld [vmem:[%s93 + $0x8] sm:$0xff]
  %v96 = vld [vmem:[%s93 + $0x10] sm:$0xff]
  %v97 = vld [vmem:[%s93 + $0x18] sm:$0xff]
  %v98 = vld [vmem:[%s93 + $0x20] sm:$0xff]
  %v99 = vld [vmem:[%s93 + $0x28] sm:$0xff]
  %vm100 = vcmask 392192
  %v102 = vsel %vm100, %v19, 0
  %v105 = vsel %vm100, %v20, 0
  %v108 = vsel %vm100, %v21, 0
  %v111 = vsel %vm100, %v22, 0
  %v114 = vsel %vm100, %v23, 0
  %v117 = vsel %vm100, %v24, 0
  %v120 = vsel %vm100, %v25, 0
  %v123 = vsel %vm100, %v26, 0
  %v126 = vsel %vm100, %v27, 0
  %v129 = vsel %vm100, %v28, 0
  %v132 = vsel %vm100, %v29, 0
  %v135 = vsel %vm100, %v30, 0
  %v138 = vsel %vm100, %v31, 0
  %v141 = vsel %vm100, %v32, 0
  %v144 = vsel %vm100, %v33, 0
  %v147 = vsel %vm100, %v34, 0
  %v150 = vsel %vm100, %v35, 0
  %v153 = vsel %vm100, %v36, 0
  %v156 = vsel %vm100, %v37, 0
  %v159 = vsel %vm100, %v38, 0
  %v162 = vsel %vm100, %v39, 0
  %v165 = vsel %vm100, %v40, 0
  %v168 = vsel %vm100, %v41, 0
  %v171 = vsel %vm100, %v42, 0
  %v174 = vsel %vm100, %v43, 0
  %v177 = vsel %vm100, %v44, 0
  %v180 = vsel %vm100, %v45, 0
  %v183 = vsel %vm100, %v46, 0
  %v186 = vsel %vm100, %v47, 0
  %v189 = vsel %vm100, %v48, 0
  %v192 = vsel %vm100, %v49, 0
  %v195 = vsel %vm100, %v50, 0
  %v198 = vsel %vm100, %v51, 0
  %v201 = vsel %vm100, %v52, 0
  %v204 = vsel %vm100, %v53, 0
  %v207 = vsel %vm100, %v54, 0
  %v210 = vsel %vm100, %v55, 0
  %v213 = vsel %vm100, %v56, 0
  %v216 = vsel %vm100, %v57, 0
  %v219 = vsel %vm100, %v58, 0
  %v222 = vsel %vm100, %v59, 0
  %v225 = vsel %vm100, %v60, 0
  %v228 = vsel %vm100, %v61, 0
  %v231 = vsel %vm100, %v62, 0
  %v234 = vsel %vm100, %v63, 0
  %v237 = vsel %vm100, %v64, 0
  %v240 = vsel %vm100, %v65, 0
  %v243 = vsel %vm100, %v66, 0
  %v246 = vsel %vm100, %v67, 0
  %v249 = vsel %vm100, %v68, 0
  %v252 = vsel %vm100, %v69, 0
  %v255 = vsel %vm100, %v70, 0
  %v258 = vsel %vm100, %v71, 0
  %v261 = vsel %vm100, %v72, 0
  %v264 = vsel %vm100, %v73, 0
  %v267 = vsel %vm100, %v74, 0
  %v270 = vsel %vm100, %v75, 0
  %v273 = vsel %vm100, %v76, 0
  %v276 = vsel %vm100, %v77, 0
  %v279 = vsel %vm100, %v78, 0
  %v282 = vsel %vm100, %v79, 0
  %v285 = vsel %vm100, %v80, 0
  %v288 = vsel %vm100, %v81, 0
  %v291 = vsel %vm100, %v82, 0
  %v294 = vsel %vm100, %v83, 0
  %v297 = vsel %vm100, %v84, 0
  %v300 = vsel %vm100, %v91, 0
  %v303 = vsel %vm100, %v92, 0
  %305 = vmatprep.subr.mxu0 0.0
  %306 = vmatpush1.msra.mxu0 0.0
  %307 = vmatprep.subr.mxu0 0.0
  %308 = vmatpush1.msra.mxu0 0.0
  %309 = vmatprep.subr.mxu0 0.0
  %310 = vmatpush1.msra.mxu0 0.0
  %311 = vmatprep.subr.mxu0 0.0
  %312 = vmatpush1.msra.mxu0 0.0
  %313 = vmatprep.subr.mxu0 0.0
  %314 = vmatpush1.msra.mxu0 0.0
  %315 = vmatprep.subr.mxu0 0.0
  %316 = vmatpush1.msra.mxu0 0.0
  %317 = vmatprep.subr.mxu0 0.0
  %318 = vmatpush1.msra.mxu0 0.0
  %319 = vmatprep.subr.mxu0 0.0
  %320 = vmatpush1.msra.mxu0 0.0
  %321 = vmatprep.subr.mxu0 0.0
  %322 = vmatpush1.msra.mxu0 0.0
  %323 = vmatprep.subr.mxu0 0.0
  %324 = vmatpush1.msra.mxu0 0.0
  %325 = vmatprep.subr.mxu0 0.0
  %326 = vmatpush1.msra.mxu0 %v99
  %327 = vmatprep.subr.mxu0 0.0
  %328 = vmatpush1.msra.mxu0 %v98
  %329 = vmatprep.subr.mxu0 0.0
  %330 = vmatpush1.msra.mxu0 %v97
  %331 = vmatprep.subr.mxu0 0.0
  %332 = vmatpush1.msra.mxu0 %v96
  %333 = vmatprep.subr.mxu0 0.0
  %334 = vmatpush1.msra.mxu0 %v95
  %335 = vmatprep.subr.mxu0 0.0
  %336 = vmatpush1.msra.mxu0 %v94
  %337 = vmatprep.subr.mxu0 0.0
  %338 = vmatpush2.msra.mxu0 0.0
  %339 = vmatprep.subr.mxu0 0.0
  %340 = vmatpush2.msra.mxu0 0.0
  %341 = vmatprep.subr.mxu0 0.0
  %342 = vmatpush2.msra.mxu0 0.0
  %343 = vmatprep.subr.mxu0 0.0
  %344 = vmatpush2.msra.mxu0 0.0
  %345 = vmatprep.subr.mxu0 0.0
  %346 = vmatpush2.msra.mxu0 0.0
  %347 = vmatprep.subr.mxu0 0.0
  %348 = vmatpush2.msra.mxu0 0.0
  %349 = vmatprep.subr.mxu0 0.0
  %350 = vmatpush2.msra.mxu0 0.0
  %351 = vmatprep.subr.mxu0 0.0
  %352 = vmatpush2.msra.mxu0 0.0
  %353 = vmatprep.subr.mxu0 0.0
  %354 = vmatpush2.msra.mxu0 0.0
  %355 = vmatprep.subr.mxu0 0.0
  %356 = vmatpush2.msra.mxu0 0.0
  %357 = vmatprep.subr.mxu0 0.0
  %358 = vmatpush2.msra.mxu0 0.0
  %359 = vmatprep.subr.mxu0 0.0
  %360 = vmatpush2.msra.mxu0 0.0
  %361 = vmatprep.subr.mxu0 0.0
  %362 = vmatpush2.msra.mxu0 0.0
  %363 = vmatprep.subr.mxu0 0.0
  %364 = vmatpush2.msra.mxu0 0.0
  %365 = vmatprep.subr.mxu0 0.0
  %366 = vmatpush2.msra.mxu0 0.0
  %367 = vmatprep.subr.mxu0 0.0
  %368 = vmatpush2.msra.mxu0 0.0
  %369 = vmatprep.mubr.f32.mxu0 0.0
  %370 = vmatmul.mubr.f32.gmra.mxu0 %v102
  %v371 = vpop.f32.mrf.mxu0
  %v372 = vadd.f32 0.0, %v371
  %v373 = vpop.f32.mrf.mxu0
  %374 = vmatprep.mubr.f32.mxu0 0.0
  %375 = vmatmul.mubr.f32.gmra.mxu0 %v105
  %v376 = vpop.f32.mrf.mxu0
  %v377 = vadd.f32 0.0, %v376
  %v378 = vpop.f32.mrf.mxu0
  %379 = vmatprep.mubr.f32.mxu0 0.0
  %380 = vmatmul.mubr.f32.gmra.mxu0 %v108
  %v381 = vpop.f32.mrf.mxu0
  %v382 = vadd.f32 0.0, %v381
  %v383 = vpop.f32.mrf.mxu0
  %384 = vmatprep.mubr.f32.mxu0 0.0
  %385 = vmatmul.mubr.f32.gmra.mxu0 %v111
  %v386 = vpop.f32.mrf.mxu0
  %v387 = vadd.f32 0.0, %v386
  %v388 = vpop.f32.mrf.mxu0
  %389 = vmatprep.mubr.f32.mxu0 0.0
  %390 = vmatmul.mubr.f32.gmra.mxu0 %v114
  %v391 = vpop.f32.mrf.mxu0
  %v392 = vadd.f32 0.0, %v391
  %v393 = vpop.f32.mrf.mxu0
  %394 = vmatprep.mubr.f32.mxu0 0.0
  %395 = vmatmul.mubr.f32.gmra.mxu0 %v117
  %v396 = vpop.f32.mrf.mxu0
  %v397 = vadd.f32 0.0, %v396
  %v398 = vpop.f32.mrf.mxu0
  %399 = vmatprep.mubr.f32.mxu0 0.0
  %400 = vmatmul.mubr.f32.gmra.mxu0 %v120
  %v401 = vpop.f32.mrf.mxu0
  %v402 = vadd.f32 0.0, %v401
  %v403 = vpop.f32.mrf.mxu0
  %404 = vmatprep.mubr.f32.mxu0 0.0
  %405 = vmatmul.mubr.f32.gmra.mxu0 %v123
  %v406 = vpop.f32.mrf.mxu0
  %v407 = vadd.f32 0.0, %v406
  %v408 = vpop.f32.mrf.mxu0
  %409 = vmatprep.mubr.f32.mxu0 0.0
  %410 = vmatmul.mubr.f32.gmra.mxu0 %v126
  %v411 = vpop.f32.mrf.mxu0
  %v412 = vadd.f32 0.0, %v411
  %v413 = vpop.f32.mrf.mxu0
  %414 = vmatprep.mubr.f32.mxu0 0.0
  %415 = vmatmul.mubr.f32.gmra.mxu0 %v129
  %v416 = vpop.f32.mrf.mxu0
  %v417 = vadd.f32 0.0, %v416
  %v418 = vpop.f32.mrf.mxu0
  %419 = vmatprep.mubr.f32.mxu0 0.0
  %420 = vmatmul.mubr.f32.gmra.mxu0 %v132
  %v421 = vpop.f32.mrf.mxu0
  %v422 = vadd.f32 0.0, %v421
  %v423 = vpop.f32.mrf.mxu0
  %424 = vmatprep.mubr.f32.mxu0 0.0
  %425 = vmatmul.mubr.f32.gmra.mxu0 %v135
  %v426 = vpop.f32.mrf.mxu0
  %v427 = vadd.f32 0.0, %v426
  %v428 = vpop.f32.mrf.mxu0
  %429 = vmatprep.mubr.f32.mxu0 0.0
  %430 = vmatmul.mubr.f32.gmra.mxu0 %v138
  %v431 = vpop.f32.mrf.mxu0
  %v432 = vadd.f32 0.0, %v431
  %v433 = vpop.f32.mrf.mxu0
  %434 = vmatprep.mubr.f32.mxu0 0.0
  %435 = vmatmul.mubr.f32.gmra.mxu0 %v141
  %v436 = vpop.f32.mrf.mxu0
  %v437 = vadd.f32 0.0, %v436
  %v438 = vpop.f32.mrf.mxu0
  %439 = vmatprep.mubr.f32.mxu0 0.0
  %440 = vmatmul.mubr.f32.gmra.mxu0 %v144
  %v441 = vpop.f32.mrf.mxu0
  %v442 = vadd.f32 0.0, %v441
  %v443 = vpop.f32.mrf.mxu0
  %444 = vmatprep.mubr.f32.mxu0 0.0
  %445 = vmatmul.mubr.f32.gmra.mxu0 %v147
  %v446 = vpop.f32.mrf.mxu0
  %v447 = vadd.f32 0.0, %v446
  %v448 = vpop.f32.mrf.mxu0
  %449 = vmatprep.mubr.f32.mxu0 0.0
  %450 = vmatmul.mubr.f32.gmra.mxu0 %v150
  %v451 = vpop.f32.mrf.mxu0
  %v452 = vadd.f32 0.0, %v451
  %v453 = vpop.f32.mrf.mxu0
  %454 = vmatprep.mubr.f32.mxu0 0.0
  %455 = vmatmul.mubr.f32.gmra.mxu0 %v153
  %v456 = vpop.f32.mrf.mxu0
  %v457 = vadd.f32 0.0, %v456
  %v458 = vpop.f32.mrf.mxu0
  %459 = vmatprep.mubr.f32.mxu0 0.0
  %460 = vmatmul.mubr.f32.gmra.mxu0 %v156
  %v461 = vpop.f32.mrf.mxu0
  %v462 = vadd.f32 0.0, %v461
  %v463 = vpop.f32.mrf.mxu0
  %464 = vmatprep.mubr.f32.mxu0 0.0
  %465 = vmatmul.mubr.f32.gmra.mxu0 %v159
  %v466 = vpop.f32.mrf.mxu0
  %v467 = vadd.f32 0.0, %v466
  %v468 = vpop.f32.mrf.mxu0
  %469 = vmatprep.mubr.f32.mxu0 0.0
  %470 = vmatmul.mubr.f32.gmra.mxu0 %v162
  %v471 = vpop.f32.mrf.mxu0
  %v472 = vadd.f32 0.0, %v471
  %v473 = vpop.f32.mrf.mxu0
  %474 = vmatprep.mubr.f32.mxu0 0.0
  %475 = vmatmul.mubr.f32.gmra.mxu0 %v165
  %v476 = vpop.f32.mrf.mxu0
  %v477 = vadd.f32 0.0, %v476
  %v478 = vpop.f32.mrf.mxu0
  %479 = vmatprep.mubr.f32.mxu0 0.0
  %480 = vmatmul.mubr.f32.gmra.mxu0 %v168
  %v481 = vpop.f32.mrf.mxu0
  %v482 = vadd.f32 0.0, %v481
  %v483 = vpop.f32.mrf.mxu0
  %484 = vmatprep.mubr.f32.mxu0 0.0
  %485 = vmatmul.mubr.f32.gmra.mxu0 %v171
  %v486 = vpop.f32.mrf.mxu0
  %v487 = vadd.f32 0.0, %v486
  %v488 = vpop.f32.mrf.mxu0
  %489 = vmatprep.mubr.f32.mxu0 0.0
  %490 = vmatmul.mubr.f32.gmra.mxu0 %v174
  %v491 = vpop.f32.mrf.mxu0
  %v492 = vadd.f32 0.0, %v491
  %v493 = vpop.f32.mrf.mxu0
  %494 = vmatprep.mubr.f32.mxu0 0.0
  %495 = vmatmul.mubr.f32.gmra.mxu0 %v177
  %v496 = vpop.f32.mrf.mxu0
  %v497 = vadd.f32 0.0, %v496
  %v498 = vpop.f32.mrf.mxu0
  %499 = vmatprep.mubr.f32.mxu0 0.0
  %500 = vmatmul.mubr.f32.gmra.mxu0 %v180
  %v501 = vpop.f32.mrf.mxu0
  %v502 = vadd.f32 0.0, %v501
  %v503 = vpop.f32.mrf.mxu0
  %504 = vmatprep.mubr.f32.mxu0 0.0
  %505 = vmatmul.mubr.f32.gmra.mxu0 %v183
  %v506 = vpop.f32.mrf.mxu0
  %v507 = vadd.f32 0.0, %v506
  %v508 = vpop.f32.mrf.mxu0
  %509 = vmatprep.mubr.f32.mxu0 0.0
  %510 = vmatmul.mubr.f32.gmra.mxu0 %v186
  %v511 = vpop.f32.mrf.mxu0
  %v512 = vadd.f32 0.0, %v511
  %v513 = vpop.f32.mrf.mxu0
  %514 = vmatprep.mubr.f32.mxu0 0.0
  %515 = vmatmul.mubr.f32.gmra.mxu0 %v189
  %v516 = vpop.f32.mrf.mxu0
  %v517 = vadd.f32 0.0, %v516
  %v518 = vpop.f32.mrf.mxu0
  %519 = vmatprep.mubr.f32.mxu0 0.0
  %520 = vmatmul.mubr.f32.gmra.mxu0 %v192
  %v521 = vpop.f32.mrf.mxu0
  %v522 = vadd.f32 0.0, %v521
  %v523 = vpop.f32.mrf.mxu0
  %524 = vmatprep.mubr.f32.mxu0 0.0
  %525 = vmatmul.mubr.f32.gmra.mxu0 %v195
  %v526 = vpop.f32.mrf.mxu0
  %v527 = vadd.f32 0.0, %v526
  %v528 = vpop.f32.mrf.mxu0
  %529 = vmatprep.mubr.f32.mxu0 0.0
  %530 = vmatmul.mubr.f32.gmra.mxu0 %v198
  %v531 = vpop.f32.mrf.mxu0
  %v532 = vadd.f32 0.0, %v531
  %v533 = vpop.f32.mrf.mxu0
  %534 = vmatprep.mubr.f32.mxu0 0.0
  %535 = vmatmul.mubr.f32.gmra.mxu0 %v201
  %v536 = vpop.f32.mrf.mxu0
  %v537 = vadd.f32 0.0, %v536
  %v538 = vpop.f32.mrf.mxu0
  %539 = vmatprep.mubr.f32.mxu0 0.0
  %540 = vmatmul.mubr.f32.gmra.mxu0 %v204
  %v541 = vpop.f32.mrf.mxu0
  %v542 = vadd.f32 0.0, %v541
  %v543 = vpop.f32.mrf.mxu0
  %544 = vmatprep.mubr.f32.mxu0 0.0
  %545 = vmatmul.mubr.f32.gmra.mxu0 %v207
  %v546 = vpop.f32.mrf.mxu0
  %v547 = vadd.f32 0.0, %v546
  %v548 = vpop.f32.mrf.mxu0
  %549 = vmatprep.mubr.f32.mxu0 0.0
  %550 = vmatmul.mubr.f32.gmra.mxu0 %v210
  %v551 = vpop.f32.mrf.mxu0
  %v552 = vadd.f32 0.0, %v551
  %v553 = vpop.f32.mrf.mxu0
  %554 = vmatprep.mubr.f32.mxu0 0.0
  %555 = vmatmul.mubr.f32.gmra.mxu0 %v213
  %v556 = vpop.f32.mrf.mxu0
  %v557 = vadd.f32 0.0, %v556
  %v558 = vpop.f32.mrf.mxu0
  %559 = vmatprep.mubr.f32.mxu0 0.0
  %560 = vmatmul.mubr.f32.gmra.mxu0 %v216
  %v561 = vpop.f32.mrf.mxu0
  %v562 = vadd.f32 0.0, %v561
  %v563 = vpop.f32.mrf.mxu0
  %564 = vmatprep.mubr.f32.mxu0 0.0
  %565 = vmatmul.mubr.f32.gmra.mxu0 %v219
  %v566 = vpop.f32.mrf.mxu0
  %v567 = vadd.f32 0.0, %v566
  %v568 = vpop.f32.mrf.mxu0
  %569 = vmatprep.mubr.f32.mxu0 0.0
  %570 = vmatmul.mubr.f32.gmra.mxu0 %v222
  %v571 = vpop.f32.mrf.mxu0
  %v572 = vadd.f32 0.0, %v571
  %v573 = vpop.f32.mrf.mxu0
  %574 = vmatprep.mubr.f32.mxu0 0.0
  %575 = vmatmul.mubr.f32.gmra.mxu0 %v225
  %v576 = vpop.f32.mrf.mxu0
  %v577 = vadd.f32 0.0, %v576
  %v578 = vpop.f32.mrf.mxu0
  %579 = vmatprep.mubr.f32.mxu0 0.0
  %580 = vmatmul.mubr.f32.gmra.mxu0 %v228
  %v581 = vpop.f32.mrf.mxu0
  %v582 = vadd.f32 0.0, %v581
  %v583 = vpop.f32.mrf.mxu0
  %584 = vmatprep.mubr.f32.mxu0 0.0
  %585 = vmatmul.mubr.f32.gmra.mxu0 %v231
  %v586 = vpop.f32.mrf.mxu0
  %v587 = vadd.f32 0.0, %v586
  %v588 = vpop.f32.mrf.mxu0
  %589 = vmatprep.mubr.f32.mxu0 0.0
  %590 = vmatmul.mubr.f32.gmra.mxu0 %v234
  %v591 = vpop.f32.mrf.mxu0
  %v592 = vadd.f32 0.0, %v591
  %v593 = vpop.f32.mrf.mxu0
  %594 = vmatprep.mubr.f32.mxu0 0.0
  %595 = vmatmul.mubr.f32.gmra.mxu0 %v237
  %v596 = vpop.f32.mrf.mxu0
  %v597 = vadd.f32 0.0, %v596
  %v598 = vpop.f32.mrf.mxu0
  %599 = vmatprep.mubr.f32.mxu0 0.0
  %600 = vmatmul.mubr.f32.gmra.mxu0 %v240
  %v601 = vpop.f32.mrf.mxu0
  %v602 = vadd.f32 0.0, %v601
  %v603 = vpop.f32.mrf.mxu0
  %604 = vmatprep.mubr.f32.mxu0 0.0
  %605 = vmatmul.mubr.f32.gmra.mxu0 %v243
  %v606 = vpop.f32.mrf.mxu0
  %v607 = vadd.f32 0.0, %v606
  %v608 = vpop.f32.mrf.mxu0
  %609 = vmatprep.mubr.f32.mxu0 0.0
  %610 = vmatmul.mubr.f32.gmra.mxu0 %v246
  %v611 = vpop.f32.mrf.mxu0
  %v612 = vadd.f32 0.0, %v611
  %v613 = vpop.f32.mrf.mxu0
  %614 = vmatprep.mubr.f32.mxu0 0.0
  %615 = vmatmul.mubr.f32.gmra.mxu0 %v249
  %v616 = vpop.f32.mrf.mxu0
  %v617 = vadd.f32 0.0, %v616
  %v618 = vpop.f32.mrf.mxu0
  %619 = vmatprep.mubr.f32.mxu0 0.0
  %620 = vmatmul.mubr.f32.gmra.mxu0 %v252
  %v621 = vpop.f32.mrf.mxu0
  %v622 = vadd.f32 0.0, %v621
  %v623 = vpop.f32.mrf.mxu0
  %624 = vmatprep.mubr.f32.mxu0 0.0
  %625 = vmatmul.mubr.f32.gmra.mxu0 %v255
  %v626 = vpop.f32.mrf.mxu0
  %v627 = vadd.f32 0.0, %v626
  %v628 = vpop.f32.mrf.mxu0
  %629 = vmatprep.mubr.f32.mxu0 0.0
  %630 = vmatmul.mubr.f32.gmra.mxu0 %v258
  %v631 = vpop.f32.mrf.mxu0
  %v632 = vadd.f32 0.0, %v631
  %v633 = vpop.f32.mrf.mxu0
  %634 = vmatprep.mubr.f32.mxu0 0.0
  %635 = vmatmul.mubr.f32.gmra.mxu0 %v261
  %v636 = vpop.f32.mrf.mxu0
  %v637 = vadd.f32 0.0, %v636
  %v638 = vpop.f32.mrf.mxu0
  %639 = vmatprep.mubr.f32.mxu0 0.0
  %640 = vmatmul.mubr.f32.gmra.mxu0 %v264
  %v641 = vpop.f32.mrf.mxu0
  %v642 = vadd.f32 0.0, %v641
  %v643 = vpop.f32.mrf.mxu0
  %644 = vmatprep.mubr.f32.mxu0 0.0
  %645 = vmatmul.mubr.f32.gmra.mxu0 %v267
  %v646 = vpop.f32.mrf.mxu0
  %v647 = vadd.f32 0.0, %v646
  %v648 = vpop.f32.mrf.mxu0
  %649 = vmatprep.mubr.f32.mxu0 0.0
  %650 = vmatmul.mubr.f32.gmra.mxu0 %v270
  %v651 = vpop.f32.mrf.mxu0
  %v652 = vadd.f32 0.0, %v651
  %v653 = vpop.f32.mrf.mxu0
  %654 = vmatprep.mubr.f32.mxu0 0.0
  %655 = vmatmul.mubr.f32.gmra.mxu0 %v273
  %v656 = vpop.f32.mrf.mxu0
  %v657 = vadd.f32 0.0, %v656
  %v658 = vpop.f32.mrf.mxu0
  %659 = vmatprep.mubr.f32.mxu0 0.0
  %660 = vmatmul.mubr.f32.gmra.mxu0 %v276
  %v661 = vpop.f32.mrf.mxu0
  %v662 = vadd.f32 0.0, %v661
  %v663 = vpop.f32.mrf.mxu0
  %664 = vmatprep.mubr.f32.mxu0 0.0
  %665 = vmatmul.mubr.f32.gmra.mxu0 %v279
  %v666 = vpop.f32.mrf.mxu0
  %v667 = vadd.f32 0.0, %v666
  %v668 = vpop.f32.mrf.mxu0
  %669 = vmatprep.mubr.f32.mxu0 0.0
  %670 = vmatmul.mubr.f32.gmra.mxu0 %v282
  %v671 = vpop.f32.mrf.mxu0
  %v672 = vadd.f32 0.0, %v671
  %v673 = vpop.f32.mrf.mxu0
  %674 = vmatprep.mubr.f32.mxu0 0.0
  %675 = vmatmul.mubr.f32.gmra.mxu0 %v285
  %v676 = vpop.f32.mrf.mxu0
  %v677 = vadd.f32 0.0, %v676
  %v678 = vpop.f32.mrf.mxu0
  %679 = vmatprep.mubr.f32.mxu0 0.0
  %680 = vmatmul.mubr.f32.gmra.mxu0 %v288
  %v681 = vpop.f32.mrf.mxu0
  %v682 = vadd.f32 0.0, %v681
  %v683 = vpop.f32.mrf.mxu0
  %684 = vmatprep.mubr.f32.mxu0 0.0
  %685 = vmatmul.mubr.f32.gmra.mxu0 %v291
  %v686 = vpop.f32.mrf.mxu0
  %v687 = vadd.f32 0.0, %v686
  %v688 = vpop.f32.mrf.mxu0
  %689 = vmatprep.mubr.f32.mxu0 0.0
  %690 = vmatmul.mubr.f32.gmra.mxu0 %v294
  %v691 = vpop.f32.mrf.mxu0
  %v692 = vadd.f32 0.0, %v691
  %v693 = vpop.f32.mrf.mxu0
  %694 = vmatprep.mubr.f32.mxu0 0.0
  %695 = vmatmul.mubr.f32.gmra.mxu0 %v297
  %v696 = vpop.f32.mrf.mxu0
  %v697 = vadd.f32 0.0, %v696
  %v698 = vpop.f32.mrf.mxu0
  %699 = vmatprep.mubr.f32.mxu0 0.0
  %700 = vmatmul.mubr.f32.gmra.mxu0 %v300
  %v701 = vpop.f32.mrf.mxu0
  %v702 = vadd.f32 0.0, %v701
  %v703 = vpop.f32.mrf.mxu0
  %704 = vmatprep.mubr.f32.mxu0 0.0
  %705 = vmatmul.mubr.f32.gmra.mxu0 %v303
  %v706 = vpop.f32.mrf.mxu0
  %v707 = vadd.f32 0.0, %v706
  %v708 = vpop.f32.mrf.mxu0
  %709 = vdwg.mxu0
  %v711 = vsel %vm100, %v17, 0
  %v714 = vsel %vm100, %v18, 0
  %716 = vmatprep.subr.mxu0 0.0
  %717 = vmatpush1.msra.mxu0 0.0
  %718 = vmatprep.subr.mxu0 0.0
  %719 = vmatpush1.msra.mxu0 0.0
  %720 = vmatprep.subr.mxu0 0.0
  %721 = vmatpush1.msra.mxu0 0.0
  %722 = vmatprep.subr.mxu0 0.0
  %723 = vmatpush1.msra.mxu0 0.0
  %724 = vmatprep.subr.mxu0 0.0
  %725 = vmatpush1.msra.mxu0 0.0
  %726 = vmatprep.subr.mxu0 0.0
  %727 = vmatpush1.msra.mxu0 0.0
  %728 = vmatprep.subr.mxu0 0.0
  %729 = vmatpush1.msra.mxu0 0.0
  %730 = vmatprep.subr.mxu0 0.0
  %731 = vmatpush1.msra.mxu0 0.0
  %732 = vmatprep.subr.mxu0 0.0
  %733 = vmatpush1.msra.mxu0 0.0
  %734 = vmatprep.subr.mxu0 0.0
  %735 = vmatpush1.msra.mxu0 0.0
  %736 = vmatprep.subr.mxu0 0.0
  %737 = vmatpush1.msra.mxu0 %v90
  %738 = vmatprep.subr.mxu0 0.0
  %739 = vmatpush1.msra.mxu0 %v89
  %740 = vmatprep.subr.mxu0 0.0
  %741 = vmatpush1.msra.mxu0 %v88
  %742 = vmatprep.subr.mxu0 0.0
  %743 = vmatpush1.msra.mxu0 %v87
  %744 = vmatprep.subr.mxu0 0.0
  %745 = vmatpush1.msra.mxu0 %v86
  %746 = vmatprep.subr.mxu0 0.0
  %747 = vmatpush1.msra.mxu0 %v85
  %748 = vmatprep.subr.mxu0 0.0
  %749 = vmatpush2.msra.mxu0 0.0
  %750 = vmatprep.subr.mxu0 0.0
  %751 = vmatpush2.msra.mxu0 0.0
  %752 = vmatprep.subr.mxu0 0.0
  %753 = vmatpush2.msra.mxu0 0.0
  %754 = vmatprep.subr.mxu0 0.0
  %755 = vmatpush2.msra.mxu0 0.0
  %756 = vmatprep.subr.mxu0 0.0
  %757 = vmatpush2.msra.mxu0 0.0
  %758 = vmatprep.subr.mxu0 0.0
  %759 = vmatpush2.msra.mxu0 0.0
  %760 = vmatprep.subr.mxu0 0.0
  %761 = vmatpush2.msra.mxu0 0.0
  %762 = vmatprep.subr.mxu0 0.0
  %763 = vmatpush2.msra.mxu0 0.0
  %764 = vmatprep.subr.mxu0 0.0
  %765 = vmatpush2.msra.mxu0 0.0
  %766 = vmatprep.subr.mxu0 0.0
  %767 = vmatpush2.msra.mxu0 0.0
  %768 = vmatprep.subr.mxu0 0.0
  %769 = vmatpush2.msra.mxu0 0.0
  %770 = vmatprep.subr.mxu0 0.0
  %771 = vmatpush2.msra.mxu0 0.0
  %772 = vmatprep.subr.mxu0 0.0
  %773 = vmatpush2.msra.mxu0 0.0
  %774 = vmatprep.subr.mxu0 0.0
  %775 = vmatpush2.msra.mxu0 0.0
  %776 = vmatprep.subr.mxu0 0.0
  %777 = vmatpush2.msra.mxu0 0.0
  %778 = vmatprep.subr.mxu0 0.0
  %779 = vmatpush2.msra.mxu0 0.0
  %780 = vmatprep.mubr.f32.mxu0 0.0
  %781 = vmatmul.mubr.f32.gmra.mxu0 %v711
  %v782 = vpop.f32.mrf.mxu0
  %v783 = vadd.f32 %v372, %v782
  %v784 = vpop.f32.mrf.mxu0
  %785 = vmatprep.mubr.f32.mxu0 0.0
  %786 = vmatmul.mubr.f32.gmra.mxu0 %v714
  %v787 = vpop.f32.mrf.mxu0
  %v788 = vadd.f32 %v377, %v787
  %v789 = vpop.f32.mrf.mxu0
  %790 = vmatprep.mubr.f32.mxu0 0.0
  %791 = vmatmul.mubr.f32.gmra.mxu0 %v102
  %v792 = vpop.f32.mrf.mxu0
  %v793 = vadd.f32 %v382, %v792
  %v794 = vpop.f32.mrf.mxu0
  %795 = vmatprep.mubr.f32.mxu0 0.0
  %796 = vmatmul.mubr.f32.gmra.mxu0 %v105
  %v797 = vpop.f32.mrf.mxu0
  %v798 = vadd.f32 %v387, %v797
  %v799 = vpop.f32.mrf.mxu0
  %800 = vmatprep.mubr.f32.mxu0 0.0
  %801 = vmatmul.mubr.f32.gmra.mxu0 %v108
  %v802 = vpop.f32.mrf.mxu0
  %v803 = vadd.f32 %v392, %v802
  %v804 = vpop.f32.mrf.mxu0
  %805 = vmatprep.mubr.f32.mxu0 0.0
  %806 = vmatmul.mubr.f32.gmra.mxu0 %v111
  %v807 = vpop.f32.mrf.mxu0
  %v808 = vadd.f32 %v397, %v807
  %v809 = vpop.f32.mrf.mxu0
  %810 = vmatprep.mubr.f32.mxu0 0.0
  %811 = vmatmul.mubr.f32.gmra.mxu0 %v114
  %v812 = vpop.f32.mrf.mxu0
  %v813 = vadd.f32 %v402, %v812
  %v814 = vpop.f32.mrf.mxu0
  %815 = vmatprep.mubr.f32.mxu0 0.0
  %816 = vmatmul.mubr.f32.gmra.mxu0 %v117
  %v817 = vpop.f32.mrf.mxu0
  %v818 = vadd.f32 %v407, %v817
  %v819 = vpop.f32.mrf.mxu0
  %820 = vmatprep.mubr.f32.mxu0 0.0
  %821 = vmatmul.mubr.f32.gmra.mxu0 %v120
  %v822 = vpop.f32.mrf.mxu0
  %v823 = vadd.f32 %v412, %v822
  %v824 = vpop.f32.mrf.mxu0
  %825 = vmatprep.mubr.f32.mxu0 0.0
  %826 = vmatmul.mubr.f32.gmra.mxu0 %v123
  %v827 = vpop.f32.mrf.mxu0
  %v828 = vadd.f32 %v417, %v827
  %v829 = vpop.f32.mrf.mxu0
  %830 = vmatprep.mubr.f32.mxu0 0.0
  %831 = vmatmul.mubr.f32.gmra.mxu0 %v126
  %v832 = vpop.f32.mrf.mxu0
  %v833 = vadd.f32 %v422, %v832
  %v834 = vpop.f32.mrf.mxu0
  %835 = vmatprep.mubr.f32.mxu0 0.0
  %836 = vmatmul.mubr.f32.gmra.mxu0 %v129
  %v837 = vpop.f32.mrf.mxu0
  %v838 = vadd.f32 %v427, %v837
  %v839 = vpop.f32.mrf.mxu0
  %840 = vmatprep.mubr.f32.mxu0 0.0
  %841 = vmatmul.mubr.f32.gmra.mxu0 %v132
  %v842 = vpop.f32.mrf.mxu0
  %v843 = vadd.f32 %v432, %v842
  %v844 = vpop.f32.mrf.mxu0
  %845 = vmatprep.mubr.f32.mxu0 0.0
  %846 = vmatmul.mubr.f32.gmra.mxu0 %v135
  %v847 = vpop.f32.mrf.mxu0
  %v848 = vadd.f32 %v437, %v847
  %v849 = vpop.f32.mrf.mxu0
  %850 = vmatprep.mubr.f32.mxu0 0.0
  %851 = vmatmul.mubr.f32.gmra.mxu0 %v138
  %v852 = vpop.f32.mrf.mxu0
  %v853 = vadd.f32 %v442, %v852
  %v854 = vpop.f32.mrf.mxu0
  %855 = vmatprep.mubr.f32.mxu0 0.0
  %856 = vmatmul.mubr.f32.gmra.mxu0 %v141
  %v857 = vpop.f32.mrf.mxu0
  %v858 = vadd.f32 %v447, %v857
  %v859 = vpop.f32.mrf.mxu0
  %860 = vmatprep.mubr.f32.mxu0 0.0
  %861 = vmatmul.mubr.f32.gmra.mxu0 %v144
  %v862 = vpop.f32.mrf.mxu0
  %v863 = vadd.f32 %v452, %v862
  %v864 = vpop.f32.mrf.mxu0
  %865 = vmatprep.mubr.f32.mxu0 0.0
  %866 = vmatmul.mubr.f32.gmra.mxu0 %v147
  %v867 = vpop.f32.mrf.mxu0
  %v868 = vadd.f32 %v457, %v867
  %v869 = vpop.f32.mrf.mxu0
  %870 = vmatprep.mubr.f32.mxu0 0.0
  %871 = vmatmul.mubr.f32.gmra.mxu0 %v150
  %v872 = vpop.f32.mrf.mxu0
  %v873 = vadd.f32 %v462, %v872
  %v874 = vpop.f32.mrf.mxu0
  %875 = vmatprep.mubr.f32.mxu0 0.0
  %876 = vmatmul.mubr.f32.gmra.mxu0 %v153
  %v877 = vpop.f32.mrf.mxu0
  %v878 = vadd.f32 %v467, %v877
  %v879 = vpop.f32.mrf.mxu0
  %880 = vmatprep.mubr.f32.mxu0 0.0
  %881 = vmatmul.mubr.f32.gmra.mxu0 %v156
  %v882 = vpop.f32.mrf.mxu0
  %v883 = vadd.f32 %v472, %v882
  %v884 = vpop.f32.mrf.mxu0
  %885 = vmatprep.mubr.f32.mxu0 0.0
  %886 = vmatmul.mubr.f32.gmra.mxu0 %v159
  %v887 = vpop.f32.mrf.mxu0
  %v888 = vadd.f32 %v477, %v887
  %v889 = vpop.f32.mrf.mxu0
  %890 = vmatprep.mubr.f32.mxu0 0.0
  %891 = vmatmul.mubr.f32.gmra.mxu0 %v162
  %v892 = vpop.f32.mrf.mxu0
  %v893 = vadd.f32 %v482, %v892
  %v894 = vpop.f32.mrf.mxu0
  %895 = vmatprep.mubr.f32.mxu0 0.0
  %896 = vmatmul.mubr.f32.gmra.mxu0 %v165
  %v897 = vpop.f32.mrf.mxu0
  %v898 = vadd.f32 %v487, %v897
  %v899 = vpop.f32.mrf.mxu0
  %900 = vmatprep.mubr.f32.mxu0 0.0
  %901 = vmatmul.mubr.f32.gmra.mxu0 %v168
  %v902 = vpop.f32.mrf.mxu0
  %v903 = vadd.f32 %v492, %v902
  %v904 = vpop.f32.mrf.mxu0
  %905 = vmatprep.mubr.f32.mxu0 0.0
  %906 = vmatmul.mubr.f32.gmra.mxu0 %v171
  %v907 = vpop.f32.mrf.mxu0
  %v908 = vadd.f32 %v497, %v907
  %v909 = vpop.f32.mrf.mxu0
  %910 = vmatprep.mubr.f32.mxu0 0.0
  %911 = vmatmul.mubr.f32.gmra.mxu0 %v174
  %v912 = vpop.f32.mrf.mxu0
  %v913 = vadd.f32 %v502, %v912
  %v914 = vpop.f32.mrf.mxu0
  %915 = vmatprep.mubr.f32.mxu0 0.0
  %916 = vmatmul.mubr.f32.gmra.mxu0 %v177
  %v917 = vpop.f32.mrf.mxu0
  %v918 = vadd.f32 %v507, %v917
  %v919 = vpop.f32.mrf.mxu0
  %920 = vmatprep.mubr.f32.mxu0 0.0
  %921 = vmatmul.mubr.f32.gmra.mxu0 %v180
  %v922 = vpop.f32.mrf.mxu0
  %v923 = vadd.f32 %v512, %v922
  %v924 = vpop.f32.mrf.mxu0
  %925 = vmatprep.mubr.f32.mxu0 0.0
  %926 = vmatmul.mubr.f32.gmra.mxu0 %v183
  %v927 = vpop.f32.mrf.mxu0
  %v928 = vadd.f32 %v517, %v927
  %v929 = vpop.f32.mrf.mxu0
  %930 = vmatprep.mubr.f32.mxu0 0.0
  %931 = vmatmul.mubr.f32.gmra.mxu0 %v186
  %v932 = vpop.f32.mrf.mxu0
  %v933 = vadd.f32 %v522, %v932
  %v934 = vpop.f32.mrf.mxu0
  %935 = vmatprep.mubr.f32.mxu0 0.0
  %936 = vmatmul.mubr.f32.gmra.mxu0 %v189
  %v937 = vpop.f32.mrf.mxu0
  %v938 = vadd.f32 %v527, %v937
  %v939 = vpop.f32.mrf.mxu0
  %940 = vmatprep.mubr.f32.mxu0 0.0
  %941 = vmatmul.mubr.f32.gmra.mxu0 %v192
  %v942 = vpop.f32.mrf.mxu0
  %v943 = vadd.f32 %v532, %v942
  %v944 = vpop.f32.mrf.mxu0
  %945 = vmatprep.mubr.f32.mxu0 0.0
  %946 = vmatmul.mubr.f32.gmra.mxu0 %v195
  %v947 = vpop.f32.mrf.mxu0
  %v948 = vadd.f32 %v537, %v947
  %v949 = vpop.f32.mrf.mxu0
  %950 = vmatprep.mubr.f32.mxu0 0.0
  %951 = vmatmul.mubr.f32.gmra.mxu0 %v198
  %v952 = vpop.f32.mrf.mxu0
  %v953 = vadd.f32 %v542, %v952
  %v954 = vpop.f32.mrf.mxu0
  %955 = vmatprep.mubr.f32.mxu0 0.0
  %956 = vmatmul.mubr.f32.gmra.mxu0 %v201
  %v957 = vpop.f32.mrf.mxu0
  %v958 = vadd.f32 %v547, %v957
  %v959 = vpop.f32.mrf.mxu0
  %960 = vmatprep.mubr.f32.mxu0 0.0
  %961 = vmatmul.mubr.f32.gmra.mxu0 %v204
  %v962 = vpop.f32.mrf.mxu0
  %v963 = vadd.f32 %v552, %v962
  %v964 = vpop.f32.mrf.mxu0
  %965 = vmatprep.mubr.f32.mxu0 0.0
  %966 = vmatmul.mubr.f32.gmra.mxu0 %v207
  %v967 = vpop.f32.mrf.mxu0
  %v968 = vadd.f32 %v557, %v967
  %v969 = vpop.f32.mrf.mxu0
  %970 = vmatprep.mubr.f32.mxu0 0.0
  %971 = vmatmul.mubr.f32.gmra.mxu0 %v210
  %v972 = vpop.f32.mrf.mxu0
  %v973 = vadd.f32 %v562, %v972
  %v974 = vpop.f32.mrf.mxu0
  %975 = vmatprep.mubr.f32.mxu0 0.0
  %976 = vmatmul.mubr.f32.gmra.mxu0 %v213
  %v977 = vpop.f32.mrf.mxu0
  %v978 = vadd.f32 %v567, %v977
  %v979 = vpop.f32.mrf.mxu0
  %980 = vmatprep.mubr.f32.mxu0 0.0
  %981 = vmatmul.mubr.f32.gmra.mxu0 %v216
  %v982 = vpop.f32.mrf.mxu0
  %v983 = vadd.f32 %v572, %v982
  %v984 = vpop.f32.mrf.mxu0
  %985 = vmatprep.mubr.f32.mxu0 0.0
  %986 = vmatmul.mubr.f32.gmra.mxu0 %v219
  %v987 = vpop.f32.mrf.mxu0
  %v988 = vadd.f32 %v577, %v987
  %v989 = vpop.f32.mrf.mxu0
  %990 = vmatprep.mubr.f32.mxu0 0.0
  %991 = vmatmul.mubr.f32.gmra.mxu0 %v222
  %v992 = vpop.f32.mrf.mxu0
  %v993 = vadd.f32 %v582, %v992
  %v994 = vpop.f32.mrf.mxu0
  %995 = vmatprep.mubr.f32.mxu0 0.0
  %996 = vmatmul.mubr.f32.gmra.mxu0 %v225
  %v997 = vpop.f32.mrf.mxu0
  %v998 = vadd.f32 %v587, %v997
  %v999 = vpop.f32.mrf.mxu0
  %1000 = vmatprep.mubr.f32.mxu0 0.0
  %1001 = vmatmul.mubr.f32.gmra.mxu0 %v228
  %v1002 = vpop.f32.mrf.mxu0
  %v1003 = vadd.f32 %v592, %v1002
  %v1004 = vpop.f32.mrf.mxu0
  %1005 = vmatprep.mubr.f32.mxu0 0.0
  %1006 = vmatmul.mubr.f32.gmra.mxu0 %v231
  %v1007 = vpop.f32.mrf.mxu0
  %v1008 = vadd.f32 %v597, %v1007
  %v1009 = vpop.f32.mrf.mxu0
  %1010 = vmatprep.mubr.f32.mxu0 0.0
  %1011 = vmatmul.mubr.f32.gmra.mxu0 %v234
  %v1012 = vpop.f32.mrf.mxu0
  %v1013 = vadd.f32 %v602, %v1012
  %v1014 = vpop.f32.mrf.mxu0
  %1015 = vmatprep.mubr.f32.mxu0 0.0
  %1016 = vmatmul.mubr.f32.gmra.mxu0 %v237
  %v1017 = vpop.f32.mrf.mxu0
  %v1018 = vadd.f32 %v607, %v1017
  %v1019 = vpop.f32.mrf.mxu0
  %1020 = vmatprep.mubr.f32.mxu0 0.0
  %1021 = vmatmul.mubr.f32.gmra.mxu0 %v240
  %v1022 = vpop.f32.mrf.mxu0
  %v1023 = vadd.f32 %v612, %v1022
  %v1024 = vpop.f32.mrf.mxu0
  %1025 = vmatprep.mubr.f32.mxu0 0.0
  %1026 = vmatmul.mubr.f32.gmra.mxu0 %v243
  %v1027 = vpop.f32.mrf.mxu0
  %v1028 = vadd.f32 %v617, %v1027
  %v1029 = vpop.f32.mrf.mxu0
  %1030 = vmatprep.mubr.f32.mxu0 0.0
  %1031 = vmatmul.mubr.f32.gmra.mxu0 %v246
  %v1032 = vpop.f32.mrf.mxu0
  %v1033 = vadd.f32 %v622, %v1032
  %v1034 = vpop.f32.mrf.mxu0
  %1035 = vmatprep.mubr.f32.mxu0 0.0
  %1036 = vmatmul.mubr.f32.gmra.mxu0 %v249
  %v1037 = vpop.f32.mrf.mxu0
  %v1038 = vadd.f32 %v627, %v1037
  %v1039 = vpop.f32.mrf.mxu0
  %1040 = vmatprep.mubr.f32.mxu0 0.0
  %1041 = vmatmul.mubr.f32.gmra.mxu0 %v252
  %v1042 = vpop.f32.mrf.mxu0
  %v1043 = vadd.f32 %v632, %v1042
  %v1044 = vpop.f32.mrf.mxu0
  %1045 = vmatprep.mubr.f32.mxu0 0.0
  %1046 = vmatmul.mubr.f32.gmra.mxu0 %v255
  %v1047 = vpop.f32.mrf.mxu0
  %v1048 = vadd.f32 %v637, %v1047
  %v1049 = vpop.f32.mrf.mxu0
  %1050 = vmatprep.mubr.f32.mxu0 0.0
  %1051 = vmatmul.mubr.f32.gmra.mxu0 %v258
  %v1052 = vpop.f32.mrf.mxu0
  %v1053 = vadd.f32 %v642, %v1052
  %v1054 = vpop.f32.mrf.mxu0
  %1055 = vmatprep.mubr.f32.mxu0 0.0
  %1056 = vmatmul.mubr.f32.gmra.mxu0 %v261
  %v1057 = vpop.f32.mrf.mxu0
  %v1058 = vadd.f32 %v647, %v1057
  %v1059 = vpop.f32.mrf.mxu0
  %1060 = vmatprep.mubr.f32.mxu0 0.0
  %1061 = vmatmul.mubr.f32.gmra.mxu0 %v264
  %v1062 = vpop.f32.mrf.mxu0
  %v1063 = vadd.f32 %v652, %v1062
  %v1064 = vpop.f32.mrf.mxu0
  %1065 = vmatprep.mubr.f32.mxu0 0.0
  %1066 = vmatmul.mubr.f32.gmra.mxu0 %v267
  %v1067 = vpop.f32.mrf.mxu0
  %v1068 = vadd.f32 %v657, %v1067
  %v1069 = vpop.f32.mrf.mxu0
  %1070 = vmatprep.mubr.f32.mxu0 0.0
  %1071 = vmatmul.mubr.f32.gmra.mxu0 %v270
  %v1072 = vpop.f32.mrf.mxu0
  %v1073 = vadd.f32 %v662, %v1072
  %v1074 = vpop.f32.mrf.mxu0
  %1075 = vmatprep.mubr.f32.mxu0 0.0
  %1076 = vmatmul.mubr.f32.gmra.mxu0 %v273
  %v1077 = vpop.f32.mrf.mxu0
  %v1078 = vadd.f32 %v667, %v1077
  %v1079 = vpop.f32.mrf.mxu0
  %1080 = vmatprep.mubr.f32.mxu0 0.0
  %1081 = vmatmul.mubr.f32.gmra.mxu0 %v276
  %v1082 = vpop.f32.mrf.mxu0
  %v1083 = vadd.f32 %v672, %v1082
  %v1084 = vpop.f32.mrf.mxu0
  %1085 = vmatprep.mubr.f32.mxu0 0.0
  %1086 = vmatmul.mubr.f32.gmra.mxu0 %v279
  %v1087 = vpop.f32.mrf.mxu0
  %v1088 = vadd.f32 %v677, %v1087
  %v1089 = vpop.f32.mrf.mxu0
  %1090 = vmatprep.mubr.f32.mxu0 0.0
  %1091 = vmatmul.mubr.f32.gmra.mxu0 %v282
  %v1092 = vpop.f32.mrf.mxu0
  %v1093 = vadd.f32 %v682, %v1092
  %v1094 = vpop.f32.mrf.mxu0
  %1095 = vmatprep.mubr.f32.mxu0 0.0
  %1096 = vmatmul.mubr.f32.gmra.mxu0 %v285
  %v1097 = vpop.f32.mrf.mxu0
  %v1098 = vadd.f32 %v687, %v1097
  %v1099 = vpop.f32.mrf.mxu0
  %1100 = vmatprep.mubr.f32.mxu0 0.0
  %1101 = vmatmul.mubr.f32.gmra.mxu0 %v288
  %v1102 = vpop.f32.mrf.mxu0
  %v1103 = vadd.f32 %v692, %v1102
  %v1104 = vpop.f32.mrf.mxu0
  %1105 = vmatprep.mubr.f32.mxu0 0.0
  %1106 = vmatmul.mubr.f32.gmra.mxu0 %v291
  %v1107 = vpop.f32.mrf.mxu0
  %v1108 = vadd.f32 %v697, %v1107
  %v1109 = vpop.f32.mrf.mxu0
  %1110 = vmatprep.mubr.f32.mxu0 0.0
  %1111 = vmatmul.mubr.f32.gmra.mxu0 %v294
  %v1112 = vpop.f32.mrf.mxu0
  %v1113 = vadd.f32 %v702, %v1112
  %v1114 = vpop.f32.mrf.mxu0
  %1115 = vmatprep.mubr.f32.mxu0 0.0
  %1116 = vmatmul.mubr.f32.gmra.mxu0 %v297
  %v1117 = vpop.f32.mrf.mxu0
  %v1118 = vadd.f32 %v707, %v1117
  %v1119 = vpop.f32.mrf.mxu0
  %1120 = vdwg.mxu0
  %v1121 = vld [vmem:[%s0 + $0x20] sm:$0xff]
  %v1122 = vld [vmem:[%s0 + $0x28] sm:$0xff]
  %v1123 = vld [vmem:[%s0 + $0x30] sm:$0xff]
  %v1124 = vld [vmem:[%s0 + $0x38] sm:$0xff]
  %v1125 = vld [vmem:[%s0 + $0x40] sm:$0xff]
  %v1126 = vld [vmem:[%s0 + $0x48] sm:$0xff]
  %v1127 = vld [vmem:[%s0 + $0x50] sm:$0xff]
  %v1128 = vld [vmem:[%s0 + $0x58] sm:$0xff]
  %v1129 = vld [vmem:[%s0 + $0x60] sm:$0xff]
  %v1130 = vld [vmem:[%s0 + $0x68] sm:$0xff]
  %v1131 = vld [vmem:[%s0 + $0x70] sm:$0xff]
  %v1132 = vld [vmem:[%s0 + $0x78] sm:$0xff]
  %v1133 = vld [vmem:[%s0 + $0x80] sm:$0xff]
  %v1134 = vld [vmem:[%s0 + $0x88] sm:$0xff]
  %v1135 = vld [vmem:[%s0 + $0x90] sm:$0xff]
  %v1136 = vld [vmem:[%s0 + $0x98] sm:$0xff]
  %v1137 = vld [vmem:[%s0 + $0xa0] sm:$0xff]
  %v1138 = vld [vmem:[%s0 + $0xa8] sm:$0xff]
  %v1139 = vld [vmem:[%s0 + $0xb0] sm:$0xff]
  %v1140 = vld [vmem:[%s0 + $0xb8] sm:$0xff]
  %v1141 = vld [vmem:[%s0 + $0xc0] sm:$0xff]
  %v1142 = vld [vmem:[%s0 + $0xc8] sm:$0xff]
  %v1143 = vld [vmem:[%s0 + $0xd0] sm:$0xff]
  %v1144 = vld [vmem:[%s0 + $0xd8] sm:$0xff]
  %v1145 = vld [vmem:[%s0 + $0xe0] sm:$0xff]
  %v1146 = vld [vmem:[%s0 + $0xe8] sm:$0xff]
  %v1147 = vld [vmem:[%s0 + $0xf0] sm:$0xff]
  %v1148 = vld [vmem:[%s0 + $0xf8] sm:$0xff]
  %v1149 = vld [vmem:[%s0 + $0x100] sm:$0xff]
  %v1150 = vld [vmem:[%s0 + $0x108] sm:$0xff]
  %v1151 = vld [vmem:[%s0 + $0x110] sm:$0xff]
  %v1152 = vld [vmem:[%s0 + $0x118] sm:$0xff]
  %v1153 = vld [vmem:[%s0 + $0x120] sm:$0xff]
  %v1154 = vld [vmem:[%s0 + $0x128] sm:$0xff]
  %v1155 = vld [vmem:[%s0 + $0x130] sm:$0xff]
  %v1156 = vld [vmem:[%s0 + $0x138] sm:$0xff]
  %v1157 = vld [vmem:[%s0 + $0x140] sm:$0xff]
  %v1158 = vld [vmem:[%s0 + $0x148] sm:$0xff]
  %v1159 = vld [vmem:[%s0 + $0x150] sm:$0xff]
  %v1160 = vld [vmem:[%s0 + $0x158] sm:$0xff]
  %v1161 = vld [vmem:[%s0 + $0x160] sm:$0xff]
  %v1162 = vld [vmem:[%s0 + $0x168] sm:$0xff]
  %v1163 = vld [vmem:[%s0 + $0x170] sm:$0xff]
  %v1164 = vld [vmem:[%s0 + $0x178] sm:$0xff]
  %v1165 = vld [vmem:[%s0 + $0x180] sm:$0xff]
  %v1166 = vld [vmem:[%s0 + $0x188] sm:$0xff]
  %v1167 = vld [vmem:[%s0 + $0x190] sm:$0xff]
  %v1168 = vld [vmem:[%s0 + $0x198] sm:$0xff]
  %v1169 = vld [vmem:[%s0 + $0x1a0] sm:$0xff]
  %v1170 = vld [vmem:[%s0 + $0x1a8] sm:$0xff]
  %v1171 = vld [vmem:[%s0 + $0x1b0] sm:$0xff]
  %v1172 = vld [vmem:[%s0 + $0x1b8] sm:$0xff]
  %v1173 = vld [vmem:[%s0 + $0x1c0] sm:$0xff]
  %v1174 = vld [vmem:[%s0 + $0x1c8] sm:$0xff]
  %v1175 = vld [vmem:[%s0 + $0x1d0] sm:$0xff]
  %v1176 = vld [vmem:[%s0 + $0x1d8] sm:$0xff]
  %v1177 = vld [vmem:[%s0 + $0x1e0] sm:$0xff]
  %v1178 = vld [vmem:[%s0 + $0x1e8] sm:$0xff]
  %v1179 = vld [vmem:[%s0 + $0x1f0] sm:$0xff]
  %v1180 = vld [vmem:[%s0 + $0x1f8] sm:$0xff]
  %v1181 = vld [vmem:[%s0 + $0x200] sm:$0xff]
  %v1182 = vld [vmem:[%s0 + $0x208] sm:$0xff]
  %v1183 = vld [vmem:[%s0 + $0x210] sm:$0xff]
  %v1184 = vld [vmem:[%s0 + $0x218] sm:$0xff]
  %v1185 = vld [vmem:[%s0 + $0x220] sm:$0xff]
  %v1186 = vld [vmem:[%s0 + $0x228] sm:$0xff]
  %v1187 = vld [vmem:[%s0 + $0x230] sm:$0xff]
  %v1188 = vld [vmem:[%s0 + $0x238] sm:$0xff]
  %s1189 = scalar_lea.vmem %s1, 96
  %v1190 = vld [vmem:[%s1189] sm:$0xff]
  %v1191 = vld [vmem:[%s1189 + $0x8] sm:$0xff]
  %v1192 = vld [vmem:[%s1189 + $0x10] sm:$0xff]
  %v1193 = vld [vmem:[%s1189 + $0x18] sm:$0xff]
  %v1194 = vld [vmem:[%s1189 + $0x20] sm:$0xff]
  %v1195 = vld [vmem:[%s1189 + $0x28] sm:$0xff]
  %v1197 = vsel %vm100, %v1121, 0
  %v1200 = vsel %vm100, %v1122, 0
  %v1203 = vsel %vm100, %v1123, 0
  %v1206 = vsel %vm100, %v1124, 0
  %v1209 = vsel %vm100, %v1125, 0
  %v1212 = vsel %vm100, %v1126, 0
  %v1215 = vsel %vm100, %v1127, 0
  %v1218 = vsel %vm100, %v1128, 0
  %v1221 = vsel %vm100, %v1129, 0
  %v1224 = vsel %vm100, %v1130, 0
  %v1227 = vsel %vm100, %v1131, 0
  %v1230 = vsel %vm100, %v1132, 0
  %v1233 = vsel %vm100, %v1133, 0
  %v1236 = vsel %vm100, %v1134, 0
  %v1239 = vsel %vm100, %v1135, 0
  %v1242 = vsel %vm100, %v1136, 0
  %v1245 = vsel %vm100, %v1137, 0
  %v1248 = vsel %vm100, %v1138, 0
  %v1251 = vsel %vm100, %v1139, 0
  %v1254 = vsel %vm100, %v1140, 0
  %v1257 = vsel %vm100, %v1141, 0
  %v1260 = vsel %vm100, %v1142, 0
  %v1263 = vsel %vm100, %v1143, 0
  %v1266 = vsel %vm100, %v1144, 0
  %v1269 = vsel %vm100, %v1145, 0
  %v1272 = vsel %vm100, %v1146, 0
  %v1275 = vsel %vm100, %v1147, 0
  %v1278 = vsel %vm100, %v1148, 0
  %v1281 = vsel %vm100, %v1149, 0
  %v1284 = vsel %vm100, %v1150, 0
  %v1287 = vsel %vm100, %v1151, 0
  %v1290 = vsel %vm100, %v1152, 0
  %v1293 = vsel %vm100, %v1153, 0
  %v1296 = vsel %vm100, %v1154, 0
  %v1299 = vsel %vm100, %v1155, 0
  %v1302 = vsel %vm100, %v1156, 0
  %v1305 = vsel %vm100, %v1157, 0
  %v1308 = vsel %vm100, %v1158, 0
  %v1311 = vsel %vm100, %v1159, 0
  %v1314 = vsel %vm100, %v1160, 0
  %v1317 = vsel %vm100, %v1161, 0
  %v1320 = vsel %vm100, %v1162, 0
  %v1323 = vsel %vm100, %v1163, 0
  %v1326 = vsel %vm100, %v1164, 0
  %v1329 = vsel %vm100, %v1165, 0
  %v1332 = vsel %vm100, %v1166, 0
  %v1335 = vsel %vm100, %v1167, 0
  %v1338 = vsel %vm100, %v1168, 0
  %v1341 = vsel %vm100, %v1169, 0
  %v1344 = vsel %vm100, %v1170, 0
  %v1347 = vsel %vm100, %v1171, 0
  %v1350 = vsel %vm100, %v1172, 0
  %v1353 = vsel %vm100, %v1173, 0
  %v1356 = vsel %vm100, %v1174, 0
  %v1359 = vsel %vm100, %v1175, 0
  %v1362 = vsel %vm100, %v1176, 0
  %v1365 = vsel %vm100, %v1177, 0
  %v1368 = vsel %vm100, %v1178, 0
  %v1371 = vsel %vm100, %v1179, 0
  %v1374 = vsel %vm100, %v1180, 0
  %v1377 = vsel %vm100, %v1181, 0
  %v1380 = vsel %vm100, %v1182, 0
  %v1383 = vsel %vm100, %v1183, 0
  %v1386 = vsel %vm100, %v1184, 0
  %v1389 = vsel %vm100, %v1185, 0
  %v1392 = vsel %vm100, %v1186, 0
  %v1395 = vsel %vm100, %v1187, 0
  %v1398 = vsel %vm100, %v1188, 0
  %1400 = vmatprep.subr.mxu0 0.0
  %1401 = vmatpush1.msra.mxu0 0.0
  %1402 = vmatprep.subr.mxu0 0.0
  %1403 = vmatpush1.msra.mxu0 0.0
  %1404 = vmatprep.subr.mxu0 0.0
  %1405 = vmatpush1.msra.mxu0 0.0
  %1406 = vmatprep.subr.mxu0 0.0
  %1407 = vmatpush1.msra.mxu0 0.0
  %1408 = vmatprep.subr.mxu0 0.0
  %1409 = vmatpush1.msra.mxu0 0.0
  %1410 = vmatprep.subr.mxu0 0.0
  %1411 = vmatpush1.msra.mxu0 0.0
  %1412 = vmatprep.subr.mxu0 0.0
  %1413 = vmatpush1.msra.mxu0 0.0
  %1414 = vmatprep.subr.mxu0 0.0
  %1415 = vmatpush1.msra.mxu0 0.0
  %1416 = vmatprep.subr.mxu0 0.0
  %1417 = vmatpush1.msra.mxu0 0.0
  %1418 = vmatprep.subr.mxu0 0.0
  %1419 = vmatpush1.msra.mxu0 0.0
  %1420 = vmatprep.subr.mxu0 0.0
  %1421 = vmatpush1.msra.mxu0 %v1195
  %1422 = vmatprep.subr.mxu0 0.0
  %1423 = vmatpush1.msra.mxu0 %v1194
  %1424 = vmatprep.subr.mxu0 0.0
  %1425 = vmatpush1.msra.mxu0 %v1193
  %1426 = vmatprep.subr.mxu0 0.0
  %1427 = vmatpush1.msra.mxu0 %v1192
  %1428 = vmatprep.subr.mxu0 0.0
  %1429 = vmatpush1.msra.mxu0 %v1191
  %1430 = vmatprep.subr.mxu0 0.0
  %1431 = vmatpush1.msra.mxu0 %v1190
  %1432 = vmatprep.subr.mxu0 0.0
  %1433 = vmatpush2.msra.mxu0 0.0
  %1434 = vmatprep.subr.mxu0 0.0
  %1435 = vmatpush2.msra.mxu0 0.0
  %1436 = vmatprep.subr.mxu0 0.0
  %1437 = vmatpush2.msra.mxu0 0.0
  %1438 = vmatprep.subr.mxu0 0.0
  %1439 = vmatpush2.msra.mxu0 0.0
  %1440 = vmatprep.subr.mxu0 0.0
  %1441 = vmatpush2.msra.mxu0 0.0
  %1442 = vmatprep.subr.mxu0 0.0
  %1443 = vmatpush2.msra.mxu0 0.0
  %1444 = vmatprep.subr.mxu0 0.0
  %1445 = vmatpush2.msra.mxu0 0.0
  %1446 = vmatprep.subr.mxu0 0.0
  %1447 = vmatpush2.msra.mxu0 0.0
  %1448 = vmatprep.subr.mxu0 0.0
  %1449 = vmatpush2.msra.mxu0 0.0
  %1450 = vmatprep.subr.mxu0 0.0
  %1451 = vmatpush2.msra.mxu0 0.0
  %1452 = vmatprep.subr.mxu0 0.0
  %1453 = vmatpush2.msra.mxu0 0.0
  %1454 = vmatprep.subr.mxu0 0.0
  %1455 = vmatpush2.msra.mxu0 0.0
  %1456 = vmatprep.subr.mxu0 0.0
  %1457 = vmatpush2.msra.mxu0 0.0
  %1458 = vmatprep.subr.mxu0 0.0
  %1459 = vmatpush2.msra.mxu0 0.0
  %1460 = vmatprep.subr.mxu0 0.0
  %1461 = vmatpush2.msra.mxu0 0.0
  %1462 = vmatprep.subr.mxu0 0.0
  %1463 = vmatpush2.msra.mxu0 0.0
  %1464 = vmatprep.mubr.f32.mxu0 0.0
  %1465 = vmatmul.mubr.f32.gmra.mxu0 %v1197
  %v1466 = vpop.f32.mrf.mxu0
  %v1467 = vadd.f32 0.0, %v1466
  %v1468 = vpop.f32.mrf.mxu0
  %1469 = vmatprep.mubr.f32.mxu0 0.0
  %1470 = vmatmul.mubr.f32.gmra.mxu0 %v1200
  %v1471 = vpop.f32.mrf.mxu0
  %v1472 = vadd.f32 0.0, %v1471
  %v1473 = vpop.f32.mrf.mxu0
  %1474 = vmatprep.mubr.f32.mxu0 0.0
  %1475 = vmatmul.mubr.f32.gmra.mxu0 %v1203
  %v1476 = vpop.f32.mrf.mxu0
  %v1477 = vadd.f32 0.0, %v1476
  %v1478 = vpop.f32.mrf.mxu0
  %1479 = vmatprep.mubr.f32.mxu0 0.0
  %1480 = vmatmul.mubr.f32.gmra.mxu0 %v1206
  %v1481 = vpop.f32.mrf.mxu0
  %v1482 = vadd.f32 0.0, %v1481
  %v1483 = vpop.f32.mrf.mxu0
  %1484 = vmatprep.mubr.f32.mxu0 0.0
  %1485 = vmatmul.mubr.f32.gmra.mxu0 %v1209
  %v1486 = vpop.f32.mrf.mxu0
  %v1487 = vadd.f32 0.0, %v1486
  %v1488 = vpop.f32.mrf.mxu0
  %1489 = vmatprep.mubr.f32.mxu0 0.0
  %1490 = vmatmul.mubr.f32.gmra.mxu0 %v1212
  %v1491 = vpop.f32.mrf.mxu0
  %v1492 = vadd.f32 0.0, %v1491
  %v1493 = vpop.f32.mrf.mxu0
  %1494 = vmatprep.mubr.f32.mxu0 0.0
  %1495 = vmatmul.mubr.f32.gmra.mxu0 %v1215
  %v1496 = vpop.f32.mrf.mxu0
  %v1497 = vadd.f32 0.0, %v1496
  %v1498 = vpop.f32.mrf.mxu0
  %1499 = vmatprep.mubr.f32.mxu0 0.0
  %1500 = vmatmul.mubr.f32.gmra.mxu0 %v1218
  %v1501 = vpop.f32.mrf.mxu0
  %v1502 = vadd.f32 0.0, %v1501
  %v1503 = vpop.f32.mrf.mxu0
  %1504 = vmatprep.mubr.f32.mxu0 0.0
  %1505 = vmatmul.mubr.f32.gmra.mxu0 %v1221
  %v1506 = vpop.f32.mrf.mxu0
  %v1507 = vadd.f32 0.0, %v1506
  %v1508 = vpop.f32.mrf.mxu0
  %1509 = vmatprep.mubr.f32.mxu0 0.0
  %1510 = vmatmul.mubr.f32.gmra.mxu0 %v1224
  %v1511 = vpop.f32.mrf.mxu0
  %v1512 = vadd.f32 0.0, %v1511
  %v1513 = vpop.f32.mrf.mxu0
  %1514 = vmatprep.mubr.f32.mxu0 0.0
  %1515 = vmatmul.mubr.f32.gmra.mxu0 %v1227
  %v1516 = vpop.f32.mrf.mxu0
  %v1517 = vadd.f32 0.0, %v1516
  %v1518 = vpop.f32.mrf.mxu0
  %1519 = vmatprep.mubr.f32.mxu0 0.0
  %1520 = vmatmul.mubr.f32.gmra.mxu0 %v1230
  %v1521 = vpop.f32.mrf.mxu0
  %v1522 = vadd.f32 0.0, %v1521
  %v1523 = vpop.f32.mrf.mxu0
  %1524 = vmatprep.mubr.f32.mxu0 0.0
  %1525 = vmatmul.mubr.f32.gmra.mxu0 %v1233
  %v1526 = vpop.f32.mrf.mxu0
  %v1527 = vadd.f32 0.0, %v1526
  %v1528 = vpop.f32.mrf.mxu0
  %1529 = vmatprep.mubr.f32.mxu0 0.0
  %1530 = vmatmul.mubr.f32.gmra.mxu0 %v1236
  %v1531 = vpop.f32.mrf.mxu0
  %v1532 = vadd.f32 0.0, %v1531
  %v1533 = vpop.f32.mrf.mxu0
  %1534 = vmatprep.mubr.f32.mxu0 0.0
  %1535 = vmatmul.mubr.f32.gmra.mxu0 %v1239
  %v1536 = vpop.f32.mrf.mxu0
  %v1537 = vadd.f32 0.0, %v1536
  %v1538 = vpop.f32.mrf.mxu0
  %1539 = vmatprep.mubr.f32.mxu0 0.0
  %1540 = vmatmul.mubr.f32.gmra.mxu0 %v1242
  %v1541 = vpop.f32.mrf.mxu0
  %v1542 = vadd.f32 0.0, %v1541
  %v1543 = vpop.f32.mrf.mxu0
  %1544 = vmatprep.mubr.f32.mxu0 0.0
  %1545 = vmatmul.mubr.f32.gmra.mxu0 %v1245
  %v1546 = vpop.f32.mrf.mxu0
  %v1547 = vadd.f32 0.0, %v1546
  %v1548 = vpop.f32.mrf.mxu0
  %1549 = vmatprep.mubr.f32.mxu0 0.0
  %1550 = vmatmul.mubr.f32.gmra.mxu0 %v1248
  %v1551 = vpop.f32.mrf.mxu0
  %v1552 = vadd.f32 0.0, %v1551
  %v1553 = vpop.f32.mrf.mxu0
  %1554 = vmatprep.mubr.f32.mxu0 0.0
  %1555 = vmatmul.mubr.f32.gmra.mxu0 %v1251
  %v1556 = vpop.f32.mrf.mxu0
  %v1557 = vadd.f32 0.0, %v1556
  %v1558 = vpop.f32.mrf.mxu0
  %1559 = vmatprep.mubr.f32.mxu0 0.0
  %1560 = vmatmul.mubr.f32.gmra.mxu0 %v1254
  %v1561 = vpop.f32.mrf.mxu0
  %v1562 = vadd.f32 0.0, %v1561
  %v1563 = vpop.f32.mrf.mxu0
  %1564 = vmatprep.mubr.f32.mxu0 0.0
  %1565 = vmatmul.mubr.f32.gmra.mxu0 %v1257
  %v1566 = vpop.f32.mrf.mxu0
  %v1567 = vadd.f32 0.0, %v1566
  %v1568 = vpop.f32.mrf.mxu0
  %1569 = vmatprep.mubr.f32.mxu0 0.0
  %1570 = vmatmul.mubr.f32.gmra.mxu0 %v1260
  %v1571 = vpop.f32.mrf.mxu0
  %v1572 = vadd.f32 0.0, %v1571
  %v1573 = vpop.f32.mrf.mxu0
  %1574 = vmatprep.mubr.f32.mxu0 0.0
  %1575 = vmatmul.mubr.f32.gmra.mxu0 %v1263
  %v1576 = vpop.f32.mrf.mxu0
  %v1577 = vadd.f32 0.0, %v1576
  %v1578 = vpop.f32.mrf.mxu0
  %1579 = vmatprep.mubr.f32.mxu0 0.0
  %1580 = vmatmul.mubr.f32.gmra.mxu0 %v1266
  %v1581 = vpop.f32.mrf.mxu0
  %v1582 = vadd.f32 0.0, %v1581
  %v1583 = vpop.f32.mrf.mxu0
  %1584 = vmatprep.mubr.f32.mxu0 0.0
  %1585 = vmatmul.mubr.f32.gmra.mxu0 %v1269
  %v1586 = vpop.f32.mrf.mxu0
  %v1587 = vadd.f32 0.0, %v1586
  %v1588 = vpop.f32.mrf.mxu0
  %1589 = vmatprep.mubr.f32.mxu0 0.0
  %1590 = vmatmul.mubr.f32.gmra.mxu0 %v1272
  %v1591 = vpop.f32.mrf.mxu0
  %v1592 = vadd.f32 0.0, %v1591
  %v1593 = vpop.f32.mrf.mxu0
  %1594 = vmatprep.mubr.f32.mxu0 0.0
  %1595 = vmatmul.mubr.f32.gmra.mxu0 %v1275
  %v1596 = vpop.f32.mrf.mxu0
  %v1597 = vadd.f32 0.0, %v1596
  %v1598 = vpop.f32.mrf.mxu0
  %1599 = vmatprep.mubr.f32.mxu0 0.0
  %1600 = vmatmul.mubr.f32.gmra.mxu0 %v1278
  %v1601 = vpop.f32.mrf.mxu0
  %v1602 = vadd.f32 0.0, %v1601
  %v1603 = vpop.f32.mrf.mxu0
  %1604 = vmatprep.mubr.f32.mxu0 0.0
  %1605 = vmatmul.mubr.f32.gmra.mxu0 %v1281
  %v1606 = vpop.f32.mrf.mxu0
  %v1607 = vadd.f32 0.0, %v1606
  %v1608 = vpop.f32.mrf.mxu0
  %1609 = vmatprep.mubr.f32.mxu0 0.0
  %1610 = vmatmul.mubr.f32.gmra.mxu0 %v1284
  %v1611 = vpop.f32.mrf.mxu0
  %v1612 = vadd.f32 0.0, %v1611
  %v1613 = vpop.f32.mrf.mxu0
  %1614 = vmatprep.mubr.f32.mxu0 0.0
  %1615 = vmatmul.mubr.f32.gmra.mxu0 %v1287
  %v1616 = vpop.f32.mrf.mxu0
  %v1617 = vadd.f32 0.0, %v1616
  %v1618 = vpop.f32.mrf.mxu0
  %1619 = vmatprep.mubr.f32.mxu0 0.0
  %1620 = vmatmul.mubr.f32.gmra.mxu0 %v1290
  %v1621 = vpop.f32.mrf.mxu0
  %v1622 = vadd.f32 0.0, %v1621
  %v1623 = vpop.f32.mrf.mxu0
  %1624 = vmatprep.mubr.f32.mxu0 0.0
  %1625 = vmatmul.mubr.f32.gmra.mxu0 %v1293
  %v1626 = vpop.f32.mrf.mxu0
  %v1627 = vadd.f32 0.0, %v1626
  %v1628 = vpop.f32.mrf.mxu0
  %1629 = vmatprep.mubr.f32.mxu0 0.0
  %1630 = vmatmul.mubr.f32.gmra.mxu0 %v1296
  %v1631 = vpop.f32.mrf.mxu0
  %v1632 = vadd.f32 0.0, %v1631
  %v1633 = vpop.f32.mrf.mxu0
  %1634 = vmatprep.mubr.f32.mxu0 0.0
  %1635 = vmatmul.mubr.f32.gmra.mxu0 %v1299
  %v1636 = vpop.f32.mrf.mxu0
  %v1637 = vadd.f32 0.0, %v1636
  %v1638 = vpop.f32.mrf.mxu0
  %1639 = vmatprep.mubr.f32.mxu0 0.0
  %1640 = vmatmul.mubr.f32.gmra.mxu0 %v1302
  %v1641 = vpop.f32.mrf.mxu0
  %v1642 = vadd.f32 0.0, %v1641
  %v1643 = vpop.f32.mrf.mxu0
  %1644 = vmatprep.mubr.f32.mxu0 0.0
  %1645 = vmatmul.mubr.f32.gmra.mxu0 %v1305
  %v1646 = vpop.f32.mrf.mxu0
  %v1647 = vadd.f32 0.0, %v1646
  %v1648 = vpop.f32.mrf.mxu0
  %1649 = vmatprep.mubr.f32.mxu0 0.0
  %1650 = vmatmul.mubr.f32.gmra.mxu0 %v1308
  %v1651 = vpop.f32.mrf.mxu0
  %v1652 = vadd.f32 0.0, %v1651
  %v1653 = vpop.f32.mrf.mxu0
  %1654 = vmatprep.mubr.f32.mxu0 0.0
  %1655 = vmatmul.mubr.f32.gmra.mxu0 %v1311
  %v1656 = vpop.f32.mrf.mxu0
  %v1657 = vadd.f32 0.0, %v1656
  %v1658 = vpop.f32.mrf.mxu0
  %1659 = vmatprep.mubr.f32.mxu0 0.0
  %1660 = vmatmul.mubr.f32.gmra.mxu0 %v1314
  %v1661 = vpop.f32.mrf.mxu0
  %v1662 = vadd.f32 0.0, %v1661
  %v1663 = vpop.f32.mrf.mxu0
  %1664 = vmatprep.mubr.f32.mxu0 0.0
  %1665 = vmatmul.mubr.f32.gmra.mxu0 %v1317
  %v1666 = vpop.f32.mrf.mxu0
  %v1667 = vadd.f32 0.0, %v1666
  %v1668 = vpop.f32.mrf.mxu0
  %1669 = vmatprep.mubr.f32.mxu0 0.0
  %1670 = vmatmul.mubr.f32.gmra.mxu0 %v1320
  %v1671 = vpop.f32.mrf.mxu0
  %v1672 = vadd.f32 0.0, %v1671
  %v1673 = vpop.f32.mrf.mxu0
  %1674 = vmatprep.mubr.f32.mxu0 0.0
  %1675 = vmatmul.mubr.f32.gmra.mxu0 %v1323
  %v1676 = vpop.f32.mrf.mxu0
  %v1677 = vadd.f32 0.0, %v1676
  %v1678 = vpop.f32.mrf.mxu0
  %1679 = vmatprep.mubr.f32.mxu0 0.0
  %1680 = vmatmul.mubr.f32.gmra.mxu0 %v1326
  %v1681 = vpop.f32.mrf.mxu0
  %v1682 = vadd.f32 0.0, %v1681
  %v1683 = vpop.f32.mrf.mxu0
  %1684 = vmatprep.mubr.f32.mxu0 0.0
  %1685 = vmatmul.mubr.f32.gmra.mxu0 %v1329
  %v1686 = vpop.f32.mrf.mxu0
  %v1687 = vadd.f32 0.0, %v1686
  %v1688 = vpop.f32.mrf.mxu0
  %1689 = vmatprep.mubr.f32.mxu0 0.0
  %1690 = vmatmul.mubr.f32.gmra.mxu0 %v1332
  %v1691 = vpop.f32.mrf.mxu0
  %v1692 = vadd.f32 0.0, %v1691
  %v1693 = vpop.f32.mrf.mxu0
  %1694 = vmatprep.mubr.f32.mxu0 0.0
  %1695 = vmatmul.mubr.f32.gmra.mxu0 %v1335
  %v1696 = vpop.f32.mrf.mxu0
  %v1697 = vadd.f32 0.0, %v1696
  %v1698 = vpop.f32.mrf.mxu0
  %1699 = vmatprep.mubr.f32.mxu0 0.0
  %1700 = vmatmul.mubr.f32.gmra.mxu0 %v1338
  %v1701 = vpop.f32.mrf.mxu0
  %v1702 = vadd.f32 0.0, %v1701
  %v1703 = vpop.f32.mrf.mxu0
  %1704 = vmatprep.mubr.f32.mxu0 0.0
  %1705 = vmatmul.mubr.f32.gmra.mxu0 %v1341
  %v1706 = vpop.f32.mrf.mxu0
  %v1707 = vadd.f32 0.0, %v1706
  %v1708 = vpop.f32.mrf.mxu0
  %1709 = vmatprep.mubr.f32.mxu0 0.0
  %1710 = vmatmul.mubr.f32.gmra.mxu0 %v1344
  %v1711 = vpop.f32.mrf.mxu0
  %v1712 = vadd.f32 0.0, %v1711
  %v1713 = vpop.f32.mrf.mxu0
  %1714 = vmatprep.mubr.f32.mxu0 0.0
  %1715 = vmatmul.mubr.f32.gmra.mxu0 %v1347
  %v1716 = vpop.f32.mrf.mxu0
  %v1717 = vadd.f32 0.0, %v1716
  %v1718 = vpop.f32.mrf.mxu0
  %1719 = vmatprep.mubr.f32.mxu0 0.0
  %1720 = vmatmul.mubr.f32.gmra.mxu0 %v1350
  %v1721 = vpop.f32.mrf.mxu0
  %v1722 = vadd.f32 0.0, %v1721
  %v1723 = vpop.f32.mrf.mxu0
  %1724 = vmatprep.mubr.f32.mxu0 0.0
  %1725 = vmatmul.mubr.f32.gmra.mxu0 %v1353
  %v1726 = vpop.f32.mrf.mxu0
  %v1727 = vadd.f32 0.0, %v1726
  %v1728 = vpop.f32.mrf.mxu0
  %1729 = vmatprep.mubr.f32.mxu0 0.0
  %1730 = vmatmul.mubr.f32.gmra.mxu0 %v1356
  %v1731 = vpop.f32.mrf.mxu0
  %v1732 = vadd.f32 0.0, %v1731
  %v1733 = vpop.f32.mrf.mxu0
  %1734 = vmatprep.mubr.f32.mxu0 0.0
  %1735 = vmatmul.mubr.f32.gmra.mxu0 %v1359
  %v1736 = vpop.f32.mrf.mxu0
  %v1737 = vadd.f32 0.0, %v1736
  %v1738 = vpop.f32.mrf.mxu0
  %1739 = vmatprep.mubr.f32.mxu0 0.0
  %1740 = vmatmul.mubr.f32.gmra.mxu0 %v1362
  %v1741 = vpop.f32.mrf.mxu0
  %v1742 = vadd.f32 0.0, %v1741
  %v1743 = vpop.f32.mrf.mxu0
  %1744 = vmatprep.mubr.f32.mxu0 0.0
  %1745 = vmatmul.mubr.f32.gmra.mxu0 %v1365
  %v1746 = vpop.f32.mrf.mxu0
  %v1747 = vadd.f32 0.0, %v1746
  %v1748 = vpop.f32.mrf.mxu0
  %1749 = vmatprep.mubr.f32.mxu0 0.0
  %1750 = vmatmul.mubr.f32.gmra.mxu0 %v1368
  %v1751 = vpop.f32.mrf.mxu0
  %v1752 = vadd.f32 0.0, %v1751
  %v1753 = vpop.f32.mrf.mxu0
  %1754 = vmatprep.mubr.f32.mxu0 0.0
  %1755 = vmatmul.mubr.f32.gmra.mxu0 %v1371
  %v1756 = vpop.f32.mrf.mxu0
  %v1757 = vadd.f32 0.0, %v1756
  %v1758 = vpop.f32.mrf.mxu0
  %1759 = vmatprep.mubr.f32.mxu0 0.0
  %1760 = vmatmul.mubr.f32.gmra.mxu0 %v1374
  %v1761 = vpop.f32.mrf.mxu0
  %v1762 = vadd.f32 0.0, %v1761
  %v1763 = vpop.f32.mrf.mxu0
  %1764 = vmatprep.mubr.f32.mxu0 0.0
  %1765 = vmatmul.mubr.f32.gmra.mxu0 %v1377
  %v1766 = vpop.f32.mrf.mxu0
  %v1767 = vadd.f32 0.0, %v1766
  %v1768 = vpop.f32.mrf.mxu0
  %1769 = vmatprep.mubr.f32.mxu0 0.0
  %1770 = vmatmul.mubr.f32.gmra.mxu0 %v1380
  %v1771 = vpop.f32.mrf.mxu0
  %v1772 = vadd.f32 0.0, %v1771
  %v1773 = vpop.f32.mrf.mxu0
  %1774 = vmatprep.mubr.f32.mxu0 0.0
  %1775 = vmatmul.mubr.f32.gmra.mxu0 %v1383
  %v1776 = vpop.f32.mrf.mxu0
  %v1777 = vadd.f32 0.0, %v1776
  %v1778 = vpop.f32.mrf.mxu0
  %1779 = vmatprep.mubr.f32.mxu0 0.0
  %1780 = vmatmul.mubr.f32.gmra.mxu0 %v1386
  %v1781 = vpop.f32.mrf.mxu0
  %v1782 = vadd.f32 0.0, %v1781
  %v1783 = vpop.f32.mrf.mxu0
  %1784 = vmatprep.mubr.f32.mxu0 0.0
  %1785 = vmatmul.mubr.f32.gmra.mxu0 %v1389
  %v1786 = vpop.f32.mrf.mxu0
  %v1787 = vadd.f32 0.0, %v1786
  %v1788 = vpop.f32.mrf.mxu0
  %1789 = vmatprep.mubr.f32.mxu0 0.0
  %1790 = vmatmul.mubr.f32.gmra.mxu0 %v1392
  %v1791 = vpop.f32.mrf.mxu0
  %v1792 = vadd.f32 0.0, %v1791
  %v1793 = vpop.f32.mrf.mxu0
  %1794 = vmatprep.mubr.f32.mxu0 0.0
  %1795 = vmatmul.mubr.f32.gmra.mxu0 %v1395
  %v1796 = vpop.f32.mrf.mxu0
  %v1797 = vadd.f32 0.0, %v1796
  %v1798 = vpop.f32.mrf.mxu0
  %1799 = vmatprep.mubr.f32.mxu0 0.0
  %1800 = vmatmul.mubr.f32.gmra.mxu0 %v1398
  %v1801 = vpop.f32.mrf.mxu0
  %v1802 = vadd.f32 0.0, %v1801
  %v1803 = vpop.f32.mrf.mxu0
  %1804 = vdwg.mxu0
  %v1805 = vadd.f32 %v783, %v1467
  %v1806 = vadd.f32 %v788, %v1472
  %v1807 = vadd.f32 %v793, %v1477
  %v1808 = vadd.f32 %v798, %v1482
  %v1809 = vadd.f32 %v803, %v1487
  %v1810 = vadd.f32 %v808, %v1492
  %v1811 = vadd.f32 %v813, %v1497
  %v1812 = vadd.f32 %v818, %v1502
  %v1813 = vadd.f32 %v823, %v1507
  %v1814 = vadd.f32 %v828, %v1512
  %v1815 = vadd.f32 %v833, %v1517
  %v1816 = vadd.f32 %v838, %v1522
  %v1817 = vadd.f32 %v843, %v1527
  %v1818 = vadd.f32 %v848, %v1532
  %v1819 = vadd.f32 %v853, %v1537
  %v1820 = vadd.f32 %v858, %v1542
  %v1821 = vadd.f32 %v863, %v1547
  %v1822 = vadd.f32 %v868, %v1552
  %v1823 = vadd.f32 %v873, %v1557
  %v1824 = vadd.f32 %v878, %v1562
  %v1825 = vadd.f32 %v883, %v1567
  %v1826 = vadd.f32 %v888, %v1572
  %v1827 = vadd.f32 %v893, %v1577
  %v1828 = vadd.f32 %v898, %v1582
  %v1829 = vadd.f32 %v903, %v1587
  %v1830 = vadd.f32 %v908, %v1592
  %v1831 = vadd.f32 %v913, %v1597
  %v1832 = vadd.f32 %v918, %v1602
  %v1833 = vadd.f32 %v923, %v1607
  %v1834 = vadd.f32 %v928, %v1612
  %v1835 = vadd.f32 %v933, %v1617
  %v1836 = vadd.f32 %v938, %v1622
  %v1837 = vadd.f32 %v943, %v1627
  %v1838 = vadd.f32 %v948, %v1632
  %v1839 = vadd.f32 %v953, %v1637
  %v1840 = vadd.f32 %v958, %v1642
  %v1841 = vadd.f32 %v963, %v1647
  %v1842 = vadd.f32 %v968, %v1652
  %v1843 = vadd.f32 %v973, %v1657
  %v1844 = vadd.f32 %v978, %v1662
  %v1845 = vadd.f32 %v983, %v1667
  %v1846 = vadd.f32 %v988, %v1672
  %v1847 = vadd.f32 %v993, %v1677
  %v1848 = vadd.f32 %v998, %v1682
  %v1849 = vadd.f32 %v1003, %v1687
  %v1850 = vadd.f32 %v1008, %v1692
  %v1851 = vadd.f32 %v1013, %v1697
  %v1852 = vadd.f32 %v1018, %v1702
  %v1853 = vadd.f32 %v1023, %v1707
  %v1854 = vadd.f32 %v1028, %v1712
  %v1855 = vadd.f32 %v1033, %v1717
  %v1856 = vadd.f32 %v1038, %v1722
  %v1857 = vadd.f32 %v1043, %v1727
  %v1858 = vadd.f32 %v1048, %v1732
  %v1859 = vadd.f32 %v1053, %v1737
  %v1860 = vadd.f32 %v1058, %v1742
  %v1861 = vadd.f32 %v1063, %v1747
  %v1862 = vadd.f32 %v1068, %v1752
  %v1863 = vadd.f32 %v1073, %v1757
  %v1864 = vadd.f32 %v1078, %v1762
  %v1865 = vadd.f32 %v1083, %v1767
  %v1866 = vadd.f32 %v1088, %v1772
  %v1867 = vadd.f32 %v1093, %v1777
  %v1868 = vadd.f32 %v1098, %v1782
  %v1869 = vadd.f32 %v1103, %v1787
  %v1870 = vadd.f32 %v1108, %v1792
  %v1871 = vadd.f32 %v1113, %v1797
  %v1872 = vadd.f32 %v1118, %v1802
  %v1873 = vld [vmem:[%s3] sm:$0x1]
  %v1875 = vlaneseq
  %v1876 = vshrl.u32 %v1875, 7
  %v1877 = vsub.s32 0, %v1876
  %v1878 = vrot.slane %v1873, %v1877
  %v1880 = vadd.f32 %v1805, %v1878
  %v1881 = vadd.f32 %v1806, %v1878
  %v1882 = vadd.f32 %v1807, %v1878
  %v1883 = vadd.f32 %v1808, %v1878
  %v1884 = vadd.f32 %v1809, %v1878
  %v1885 = vadd.f32 %v1810, %v1878
  %v1886 = vadd.f32 %v1811, %v1878
  %v1887 = vadd.f32 %v1812, %v1878
  %v1888 = vadd.f32 %v1813, %v1878
  %v1889 = vadd.f32 %v1814, %v1878
  %v1890 = vadd.f32 %v1815, %v1878
  %v1891 = vadd.f32 %v1816, %v1878
  %v1892 = vadd.f32 %v1817, %v1878
  %v1893 = vadd.f32 %v1818, %v1878
  %v1894 = vadd.f32 %v1819, %v1878
  %v1895 = vadd.f32 %v1820, %v1878
  %v1896 = vadd.f32 %v1821, %v1878
  %v1897 = vadd.f32 %v1822, %v1878
  %v1898 = vadd.f32 %v1823, %v1878
  %v1899 = vadd.f32 %v1824, %v1878
  %v1900 = vadd.f32 %v1825, %v1878
  %v1901 = vadd.f32 %v1826, %v1878
  %v1902 = vadd.f32 %v1827, %v1878
  %v1903 = vadd.f32 %v1828, %v1878
  %v1904 = vadd.f32 %v1829, %v1878
  %v1905 = vadd.f32 %v1830, %v1878
  %v1906 = vadd.f32 %v1831, %v1878
  %v1907 = vadd.f32 %v1832, %v1878
  %v1908 = vadd.f32 %v1833, %v1878
  %v1909 = vadd.f32 %v1834, %v1878
  %v1910 = vadd.f32 %v1835, %v1878
  %v1911 = vadd.f32 %v1836, %v1878
  %v1912 = vadd.f32 %v1837, %v1878
  %v1913 = vadd.f32 %v1838, %v1878
  %v1914 = vadd.f32 %v1839, %v1878
  %v1915 = vadd.f32 %v1840, %v1878
  %v1916 = vadd.f32 %v1841, %v1878
  %v1917 = vadd.f32 %v1842, %v1878
  %v1918 = vadd.f32 %v1843, %v1878
  %v1919 = vadd.f32 %v1844, %v1878
  %v1920 = vadd.f32 %v1845, %v1878
  %v1921 = vadd.f32 %v1846, %v1878
  %v1922 = vadd.f32 %v1847, %v1878
  %v1923 = vadd.f32 %v1848, %v1878
  %v1924 = vadd.f32 %v1849, %v1878
  %v1925 = vadd.f32 %v1850, %v1878
  %v1926 = vadd.f32 %v1851, %v1878
  %v1927 = vadd.f32 %v1852, %v1878
  %v1928 = vadd.f32 %v1853, %v1878
  %v1929 = vadd.f32 %v1854, %v1878
  %v1930 = vadd.f32 %v1855, %v1878
  %v1931 = vadd.f32 %v1856, %v1878
  %v1932 = vadd.f32 %v1857, %v1878
  %v1933 = vadd.f32 %v1858, %v1878
  %v1934 = vadd.f32 %v1859, %v1878
  %v1935 = vadd.f32 %v1860, %v1878
  %v1936 = vadd.f32 %v1861, %v1878
  %v1937 = vadd.f32 %v1862, %v1878
  %v1938 = vadd.f32 %v1863, %v1878
  %v1939 = vadd.f32 %v1864, %v1878
  %v1940 = vadd.f32 %v1865, %v1878
  %v1941 = vadd.f32 %v1866, %v1878
  %v1942 = vadd.f32 %v1867, %v1878
  %v1943 = vadd.f32 %v1868, %v1878
  %v1944 = vadd.f32 %v1869, %v1878
  %v1945 = vadd.f32 %v1870, %v1878
  %v1946 = vadd.f32 %v1871, %v1878
  %v1947 = vadd.f32 %v1872, %v1878
  %v1948 = vmax.f32 %v1880, 0.0
  %v1949 = vmax.f32 %v1881, 0.0
  %v1950 = vmax.f32 %v1882, 0.0
  %v1951 = vmax.f32 %v1883, 0.0
  %v1952 = vmax.f32 %v1884, 0.0
  %v1953 = vmax.f32 %v1885, 0.0
  %v1954 = vmax.f32 %v1886, 0.0
  %v1955 = vmax.f32 %v1887, 0.0
  %v1956 = vmax.f32 %v1888, 0.0
  %v1957 = vmax.f32 %v1889, 0.0
  %v1958 = vmax.f32 %v1890, 0.0
  %v1959 = vmax.f32 %v1891, 0.0
  %v1960 = vmax.f32 %v1892, 0.0
  %v1961 = vmax.f32 %v1893, 0.0
  %v1962 = vmax.f32 %v1894, 0.0
  %v1963 = vmax.f32 %v1895, 0.0
  %v1964 = vmax.f32 %v1896, 0.0
  %v1965 = vmax.f32 %v1897, 0.0
  %v1966 = vmax.f32 %v1898, 0.0
  %v1967 = vmax.f32 %v1899, 0.0
  %v1968 = vmax.f32 %v1900, 0.0
  %v1969 = vmax.f32 %v1901, 0.0
  %v1970 = vmax.f32 %v1902, 0.0
  %v1971 = vmax.f32 %v1903, 0.0
  %v1972 = vmax.f32 %v1904, 0.0
  %v1973 = vmax.f32 %v1905, 0.0
  %v1974 = vmax.f32 %v1906, 0.0
  %v1975 = vmax.f32 %v1907, 0.0
  %v1976 = vmax.f32 %v1908, 0.0
  %v1977 = vmax.f32 %v1909, 0.0
  %v1978 = vmax.f32 %v1910, 0.0
  %v1979 = vmax.f32 %v1911, 0.0
  %v1980 = vmax.f32 %v1912, 0.0
  %v1981 = vmax.f32 %v1913, 0.0
  %v1982 = vmax.f32 %v1914, 0.0
  %v1983 = vmax.f32 %v1915, 0.0
  %v1984 = vmax.f32 %v1916, 0.0
  %v1985 = vmax.f32 %v1917, 0.0
  %v1986 = vmax.f32 %v1918, 0.0
  %v1987 = vmax.f32 %v1919, 0.0
  %v1988 = vmax.f32 %v1920, 0.0
  %v1989 = vmax.f32 %v1921, 0.0
  %v1990 = vmax.f32 %v1922, 0.0
  %v1991 = vmax.f32 %v1923, 0.0
  %v1992 = vmax.f32 %v1924, 0.0
  %v1993 = vmax.f32 %v1925, 0.0
  %v1994 = vmax.f32 %v1926, 0.0
  %v1995 = vmax.f32 %v1927, 0.0
  %v1996 = vmax.f32 %v1928, 0.0
  %v1997 = vmax.f32 %v1929, 0.0
  %v1998 = vmax.f32 %v1930, 0.0
  %v1999 = vmax.f32 %v1931, 0.0
  %v2000 = vmax.f32 %v1932, 0.0
  %v2001 = vmax.f32 %v1933, 0.0
  %v2002 = vmax.f32 %v1934, 0.0
  %v2003 = vmax.f32 %v1935, 0.0
  %v2004 = vmax.f32 %v1936, 0.0
  %v2005 = vmax.f32 %v1937, 0.0
  %v2006 = vmax.f32 %v1938, 0.0
  %v2007 = vmax.f32 %v1939, 0.0
  %v2008 = vmax.f32 %v1940, 0.0
  %v2009 = vmax.f32 %v1941, 0.0
  %v2010 = vmax.f32 %v1942, 0.0
  %v2011 = vmax.f32 %v1943, 0.0
  %v2012 = vmax.f32 %v1944, 0.0
  %v2013 = vmax.f32 %v1945, 0.0
  %v2014 = vmax.f32 %v1946, 0.0
  %v2015 = vmax.f32 %v1947, 0.0
  %v2016 = vld [vmem:[%s2] sm:$0xff]
  %v2017 = vld [vmem:[%s2 + $0x8] sm:$0xff]
  %2018 = vrot.lane.b32.xlu0 %v1878, 112
  %v2019 = vpop.permute.xlu0 %2018
  %vm2021 = vcmask 130048
  %v2023 = vsel %vm2021, %v1948, 0
  %v2026 = vsel %vm2021, %v1949, 0
  %v2029 = vsel %vm2021, %v1950, 0
  %v2032 = vsel %vm2021, %v1951, 0
  %v2035 = vsel %vm2021, %v1952, 0
  %v2038 = vsel %vm2021, %v1953, 0
  %v2041 = vsel %vm2021, %v1954, 0
  %v2044 = vsel %vm2021, %v1955, 0
  %v2047 = vsel %vm2021, %v1956, 0
  %v2050 = vsel %vm2021, %v1957, 0
  %v2053 = vsel %vm2021, %v1958, 0
  %v2056 = vsel %vm2021, %v1959, 0
  %v2059 = vsel %vm2021, %v1960, 0
  %v2062 = vsel %vm2021, %v1961, 0
  %v2065 = vsel %vm2021, %v1962, 0
  %v2068 = vsel %vm2021, %v1963, 0
  %v2071 = vsel %vm2021, %v1964, 0
  %v2074 = vsel %vm2021, %v1965, 0
  %v2077 = vsel %vm2021, %v1966, 0
  %v2080 = vsel %vm2021, %v1967, 0
  %v2083 = vsel %vm2021, %v1968, 0
  %v2086 = vsel %vm2021, %v1969, 0
  %v2089 = vsel %vm2021, %v1970, 0
  %v2092 = vsel %vm2021, %v1971, 0
  %v2095 = vsel %vm2021, %v1972, 0
  %v2098 = vsel %vm2021, %v1973, 0
  %v2101 = vsel %vm2021, %v1974, 0
  %v2104 = vsel %vm2021, %v1975, 0
  %v2107 = vsel %vm2021, %v1976, 0
  %v2110 = vsel %vm2021, %v1977, 0
  %v2113 = vsel %vm2021, %v1978, 0
  %v2116 = vsel %vm2021, %v1979, 0
  %v2119 = vsel %vm2021, %v1980, 0
  %v2122 = vsel %vm2021, %v1981, 0
  %v2125 = vsel %vm2021, %v1982, 0
  %v2128 = vsel %vm2021, %v1983, 0
  %v2131 = vsel %vm2021, %v1984, 0
  %v2134 = vsel %vm2021, %v1985, 0
  %v2137 = vsel %vm2021, %v1986, 0
  %v2140 = vsel %vm2021, %v1987, 0
  %v2143 = vsel %vm2021, %v1988, 0
  %v2146 = vsel %vm2021, %v1989, 0
  %v2149 = vsel %vm2021, %v1990, 0
  %v2152 = vsel %vm2021, %v1991, 0
  %v2155 = vsel %vm2021, %v1992, 0
  %v2158 = vsel %vm2021, %v1993, 0
  %v2161 = vsel %vm2021, %v1994, 0
  %v2164 = vsel %vm2021, %v1995, 0
  %v2167 = vsel %vm2021, %v1996, 0
  %v2170 = vsel %vm2021, %v1997, 0
  %v2173 = vsel %vm2021, %v1998, 0
  %v2176 = vsel %vm2021, %v1999, 0
  %v2179 = vsel %vm2021, %v2000, 0
  %v2182 = vsel %vm2021, %v2001, 0
  %v2185 = vsel %vm2021, %v2002, 0
  %v2188 = vsel %vm2021, %v2003, 0
  %v2191 = vsel %vm2021, %v2004, 0
  %v2194 = vsel %vm2021, %v2005, 0
  %v2197 = vsel %vm2021, %v2006, 0
  %v2200 = vsel %vm2021, %v2007, 0
  %v2203 = vsel %vm2021, %v2008, 0
  %v2206 = vsel %vm2021, %v2009, 0
  %v2209 = vsel %vm2021, %v2010, 0
  %v2212 = vsel %vm2021, %v2011, 0
  %v2215 = vsel %vm2021, %v2012, 0
  %v2218 = vsel %vm2021, %v2013, 0
  %v2221 = vsel %vm2021, %v2014, 0
  %v2224 = vsel %vm2021, %v2015, 0
  %2226 = vmatprep.subr.mxu0 0.0
  %2227 = vmatpush1.msra.mxu0 0.0
  %2228 = vmatprep.subr.mxu0 0.0
  %2229 = vmatpush1.msra.mxu0 0.0
  %2230 = vmatprep.subr.mxu0 0.0
  %2231 = vmatpush1.msra.mxu0 0.0
  %2232 = vmatprep.subr.mxu0 0.0
  %2233 = vmatpush1.msra.mxu0 0.0
  %2234 = vmatprep.subr.mxu0 0.0
  %2235 = vmatpush1.msra.mxu0 0.0
  %2236 = vmatprep.subr.mxu0 0.0
  %2237 = vmatpush1.msra.mxu0 0.0
  %2238 = vmatprep.subr.mxu0 0.0
  %2239 = vmatpush1.msra.mxu0 0.0
  %2240 = vmatprep.subr.mxu0 0.0
  %2241 = vmatpush1.msra.mxu0 0.0
  %2242 = vmatprep.subr.mxu0 0.0
  %2243 = vmatpush1.msra.mxu0 0.0
  %2244 = vmatprep.subr.mxu0 0.0
  %2245 = vmatpush1.msra.mxu0 0.0
  %2246 = vmatprep.subr.mxu0 0.0
  %2247 = vmatpush1.msra.mxu0 0.0
  %2248 = vmatprep.subr.mxu0 0.0
  %2249 = vmatpush1.msra.mxu0 0.0
  %2250 = vmatprep.subr.mxu0 0.0
  %2251 = vmatpush1.msra.mxu0 0.0
  %2252 = vmatprep.subr.mxu0 0.0
  %2253 = vmatpush1.msra.mxu0 0.0
  %2254 = vmatprep.subr.mxu0 0.0
  %2255 = vmatpush1.msra.mxu0 %v2017
  %2256 = vmatprep.subr.mxu0 0.0
  %2257 = vmatpush1.msra.mxu0 %v2016
  %2258 = vmatprep.subr.mxu0 0.0
  %2259 = vmatpush2.msra.mxu0 0.0
  %2260 = vmatprep.subr.mxu0 0.0
  %2261 = vmatpush2.msra.mxu0 0.0
  %2262 = vmatprep.subr.mxu0 0.0
  %2263 = vmatpush2.msra.mxu0 0.0
  %2264 = vmatprep.subr.mxu0 0.0
  %2265 = vmatpush2.msra.mxu0 0.0
  %2266 = vmatprep.subr.mxu0 0.0
  %2267 = vmatpush2.msra.mxu0 0.0
  %2268 = vmatprep.subr.mxu0 0.0
  %2269 = vmatpush2.msra.mxu0 0.0
  %2270 = vmatprep.subr.mxu0 0.0
  %2271 = vmatpush2.msra.mxu0 0.0
  %2272 = vmatprep.subr.mxu0 0.0
  %2273 = vmatpush2.msra.mxu0 0.0
  %2274 = vmatprep.subr.mxu0 0.0
  %2275 = vmatpush2.msra.mxu0 0.0
  %2276 = vmatprep.subr.mxu0 0.0
  %2277 = vmatpush2.msra.mxu0 0.0
  %2278 = vmatprep.subr.mxu0 0.0
  %2279 = vmatpush2.msra.mxu0 0.0
  %2280 = vmatprep.subr.mxu0 0.0
  %2281 = vmatpush2.msra.mxu0 0.0
  %2282 = vmatprep.subr.mxu0 0.0
  %2283 = vmatpush2.msra.mxu0 0.0
  %2284 = vmatprep.subr.mxu0 0.0
  %2285 = vmatpush2.msra.mxu0 0.0
  %2286 = vmatprep.subr.mxu0 0.0
  %2287 = vmatpush2.msra.mxu0 0.0
  %2288 = vmatprep.subr.mxu0 0.0
  %2289 = vmatpush2.msra.mxu0 0.0
  %2290 = vmatprep.mubr.f32.mxu0 0.0
  %2291 = vmatmul.mubr.f32.gmra.mxu0 %v2023
  %v2292 = vpop.f32.mrf.mxu0
  %v2293 = vadd.f32 %v2019, %v2292
  %v2294 = vpop.f32.mrf.mxu0
  %2295 = vmatprep.mubr.f32.mxu0 0.0
  %2296 = vmatmul.mubr.f32.gmra.mxu0 %v2026
  %v2297 = vpop.f32.mrf.mxu0
  %v2298 = vadd.f32 %v2019, %v2297
  %v2299 = vpop.f32.mrf.mxu0
  %2300 = vmatprep.mubr.f32.mxu0 0.0
  %2301 = vmatmul.mubr.f32.gmra.mxu0 %v2029
  %v2302 = vpop.f32.mrf.mxu0
  %v2303 = vadd.f32 %v2019, %v2302
  %v2304 = vpop.f32.mrf.mxu0
  %2305 = vmatprep.mubr.f32.mxu0 0.0
  %2306 = vmatmul.mubr.f32.gmra.mxu0 %v2032
  %v2307 = vpop.f32.mrf.mxu0
  %v2308 = vadd.f32 %v2019, %v2307
  %v2309 = vpop.f32.mrf.mxu0
  %2310 = vmatprep.mubr.f32.mxu0 0.0
  %2311 = vmatmul.mubr.f32.gmra.mxu0 %v2035
  %v2312 = vpop.f32.mrf.mxu0
  %v2313 = vadd.f32 %v2019, %v2312
  %v2314 = vpop.f32.mrf.mxu0
  %2315 = vmatprep.mubr.f32.mxu0 0.0
  %2316 = vmatmul.mubr.f32.gmra.mxu0 %v2038
  %v2317 = vpop.f32.mrf.mxu0
  %v2318 = vadd.f32 %v2019, %v2317
  %v2319 = vpop.f32.mrf.mxu0
  %2320 = vmatprep.mubr.f32.mxu0 0.0
  %2321 = vmatmul.mubr.f32.gmra.mxu0 %v2041
  %v2322 = vpop.f32.mrf.mxu0
  %v2323 = vadd.f32 %v2019, %v2322
  %v2324 = vpop.f32.mrf.mxu0
  %2325 = vmatprep.mubr.f32.mxu0 0.0
  %2326 = vmatmul.mubr.f32.gmra.mxu0 %v2044
  %v2327 = vpop.f32.mrf.mxu0
  %v2328 = vadd.f32 %v2019, %v2327
  %v2329 = vpop.f32.mrf.mxu0
  %2330 = vmatprep.mubr.f32.mxu0 0.0
  %2331 = vmatmul.mubr.f32.gmra.mxu0 %v2047
  %v2332 = vpop.f32.mrf.mxu0
  %v2333 = vadd.f32 %v2019, %v2332
  %v2334 = vpop.f32.mrf.mxu0
  %2335 = vmatprep.mubr.f32.mxu0 0.0
  %2336 = vmatmul.mubr.f32.gmra.mxu0 %v2050
  %v2337 = vpop.f32.mrf.mxu0
  %v2338 = vadd.f32 %v2019, %v2337
  %v2339 = vpop.f32.mrf.mxu0
  %2340 = vmatprep.mubr.f32.mxu0 0.0
  %2341 = vmatmul.mubr.f32.gmra.mxu0 %v2053
  %v2342 = vpop.f32.mrf.mxu0
  %v2343 = vadd.f32 %v2019, %v2342
  %v2344 = vpop.f32.mrf.mxu0
  %2345 = vmatprep.mubr.f32.mxu0 0.0
  %2346 = vmatmul.mubr.f32.gmra.mxu0 %v2056
  %v2347 = vpop.f32.mrf.mxu0
  %v2348 = vadd.f32 %v2019, %v2347
  %v2349 = vpop.f32.mrf.mxu0
  %2350 = vmatprep.mubr.f32.mxu0 0.0
  %2351 = vmatmul.mubr.f32.gmra.mxu0 %v2059
  %v2352 = vpop.f32.mrf.mxu0
  %v2353 = vadd.f32 %v2019, %v2352
  %v2354 = vpop.f32.mrf.mxu0
  %2355 = vmatprep.mubr.f32.mxu0 0.0
  %2356 = vmatmul.mubr.f32.gmra.mxu0 %v2062
  %v2357 = vpop.f32.mrf.mxu0
  %v2358 = vadd.f32 %v2019, %v2357
  %v2359 = vpop.f32.mrf.mxu0
  %2360 = vmatprep.mubr.f32.mxu0 0.0
  %2361 = vmatmul.mubr.f32.gmra.mxu0 %v2065
  %v2362 = vpop.f32.mrf.mxu0
  %v2363 = vadd.f32 %v2019, %v2362
  %v2364 = vpop.f32.mrf.mxu0
  %2365 = vmatprep.mubr.f32.mxu0 0.0
  %2366 = vmatmul.mubr.f32.gmra.mxu0 %v2068
  %v2367 = vpop.f32.mrf.mxu0
  %v2368 = vadd.f32 %v2019, %v2367
  %v2369 = vpop.f32.mrf.mxu0
  %2370 = vmatprep.mubr.f32.mxu0 0.0
  %2371 = vmatmul.mubr.f32.gmra.mxu0 %v2071
  %v2372 = vpop.f32.mrf.mxu0
  %v2373 = vadd.f32 %v2019, %v2372
  %v2374 = vpop.f32.mrf.mxu0
  %2375 = vmatprep.mubr.f32.mxu0 0.0
  %2376 = vmatmul.mubr.f32.gmra.mxu0 %v2074
  %v2377 = vpop.f32.mrf.mxu0
  %v2378 = vadd.f32 %v2019, %v2377
  %v2379 = vpop.f32.mrf.mxu0
  %2380 = vmatprep.mubr.f32.mxu0 0.0
  %2381 = vmatmul.mubr.f32.gmra.mxu0 %v2077
  %v2382 = vpop.f32.mrf.mxu0
  %v2383 = vadd.f32 %v2019, %v2382
  %v2384 = vpop.f32.mrf.mxu0
  %2385 = vmatprep.mubr.f32.mxu0 0.0
  %2386 = vmatmul.mubr.f32.gmra.mxu0 %v2080
  %v2387 = vpop.f32.mrf.mxu0
  %v2388 = vadd.f32 %v2019, %v2387
  %v2389 = vpop.f32.mrf.mxu0
  %2390 = vmatprep.mubr.f32.mxu0 0.0
  %2391 = vmatmul.mubr.f32.gmra.mxu0 %v2083
  %v2392 = vpop.f32.mrf.mxu0
  %v2393 = vadd.f32 %v2019, %v2392
  %v2394 = vpop.f32.mrf.mxu0
  %2395 = vmatprep.mubr.f32.mxu0 0.0
  %2396 = vmatmul.mubr.f32.gmra.mxu0 %v2086
  %v2397 = vpop.f32.mrf.mxu0
  %v2398 = vadd.f32 %v2019, %v2397
  %v2399 = vpop.f32.mrf.mxu0
  %2400 = vmatprep.mubr.f32.mxu0 0.0
  %2401 = vmatmul.mubr.f32.gmra.mxu0 %v2089
  %v2402 = vpop.f32.mrf.mxu0
  %v2403 = vadd.f32 %v2019, %v2402
  %v2404 = vpop.f32.mrf.mxu0
  %2405 = vmatprep.mubr.f32.mxu0 0.0
  %2406 = vmatmul.mubr.f32.gmra.mxu0 %v2092
  %v2407 = vpop.f32.mrf.mxu0
  %v2408 = vadd.f32 %v2019, %v2407
  %v2409 = vpop.f32.mrf.mxu0
  %2410 = vmatprep.mubr.f32.mxu0 0.0
  %2411 = vmatmul.mubr.f32.gmra.mxu0 %v2095
  %v2412 = vpop.f32.mrf.mxu0
  %v2413 = vadd.f32 %v2019, %v2412
  %v2414 = vpop.f32.mrf.mxu0
  %2415 = vmatprep.mubr.f32.mxu0 0.0
  %2416 = vmatmul.mubr.f32.gmra.mxu0 %v2098
  %v2417 = vpop.f32.mrf.mxu0
  %v2418 = vadd.f32 %v2019, %v2417
  %v2419 = vpop.f32.mrf.mxu0
  %2420 = vmatprep.mubr.f32.mxu0 0.0
  %2421 = vmatmul.mubr.f32.gmra.mxu0 %v2101
  %v2422 = vpop.f32.mrf.mxu0
  %v2423 = vadd.f32 %v2019, %v2422
  %v2424 = vpop.f32.mrf.mxu0
  %2425 = vmatprep.mubr.f32.mxu0 0.0
  %2426 = vmatmul.mubr.f32.gmra.mxu0 %v2104
  %v2427 = vpop.f32.mrf.mxu0
  %v2428 = vadd.f32 %v2019, %v2427
  %v2429 = vpop.f32.mrf.mxu0
  %2430 = vmatprep.mubr.f32.mxu0 0.0
  %2431 = vmatmul.mubr.f32.gmra.mxu0 %v2107
  %v2432 = vpop.f32.mrf.mxu0
  %v2433 = vadd.f32 %v2019, %v2432
  %v2434 = vpop.f32.mrf.mxu0
  %2435 = vmatprep.mubr.f32.mxu0 0.0
  %2436 = vmatmul.mubr.f32.gmra.mxu0 %v2110
  %v2437 = vpop.f32.mrf.mxu0
  %v2438 = vadd.f32 %v2019, %v2437
  %v2439 = vpop.f32.mrf.mxu0
  %2440 = vmatprep.mubr.f32.mxu0 0.0
  %2441 = vmatmul.mubr.f32.gmra.mxu0 %v2113
  %v2442 = vpop.f32.mrf.mxu0
  %v2443 = vadd.f32 %v2019, %v2442
  %v2444 = vpop.f32.mrf.mxu0
  %2445 = vmatprep.mubr.f32.mxu0 0.0
  %2446 = vmatmul.mubr.f32.gmra.mxu0 %v2116
  %v2447 = vpop.f32.mrf.mxu0
  %v2448 = vadd.f32 %v2019, %v2447
  %v2449 = vpop.f32.mrf.mxu0
  %2450 = vmatprep.mubr.f32.mxu0 0.0
  %2451 = vmatmul.mubr.f32.gmra.mxu0 %v2119
  %v2452 = vpop.f32.mrf.mxu0
  %v2453 = vadd.f32 %v2019, %v2452
  %v2454 = vpop.f32.mrf.mxu0
  %2455 = vmatprep.mubr.f32.mxu0 0.0
  %2456 = vmatmul.mubr.f32.gmra.mxu0 %v2122
  %v2457 = vpop.f32.mrf.mxu0
  %v2458 = vadd.f32 %v2019, %v2457
  %v2459 = vpop.f32.mrf.mxu0
  %2460 = vmatprep.mubr.f32.mxu0 0.0
  %2461 = vmatmul.mubr.f32.gmra.mxu0 %v2125
  %v2462 = vpop.f32.mrf.mxu0
  %v2463 = vadd.f32 %v2019, %v2462
  %v2464 = vpop.f32.mrf.mxu0
  %2465 = vmatprep.mubr.f32.mxu0 0.0
  %2466 = vmatmul.mubr.f32.gmra.mxu0 %v2128
  %v2467 = vpop.f32.mrf.mxu0
  %v2468 = vadd.f32 %v2019, %v2467
  %v2469 = vpop.f32.mrf.mxu0
  %2470 = vmatprep.mubr.f32.mxu0 0.0
  %2471 = vmatmul.mubr.f32.gmra.mxu0 %v2131
  %v2472 = vpop.f32.mrf.mxu0
  %v2473 = vadd.f32 %v2019, %v2472
  %v2474 = vpop.f32.mrf.mxu0
  %2475 = vmatprep.mubr.f32.mxu0 0.0
  %2476 = vmatmul.mubr.f32.gmra.mxu0 %v2134
  %v2477 = vpop.f32.mrf.mxu0
  %v2478 = vadd.f32 %v2019, %v2477
  %v2479 = vpop.f32.mrf.mxu0
  %2480 = vmatprep.mubr.f32.mxu0 0.0
  %2481 = vmatmul.mubr.f32.gmra.mxu0 %v2137
  %v2482 = vpop.f32.mrf.mxu0
  %v2483 = vadd.f32 %v2019, %v2482
  %v2484 = vpop.f32.mrf.mxu0
  %2485 = vmatprep.mubr.f32.mxu0 0.0
  %2486 = vmatmul.mubr.f32.gmra.mxu0 %v2140
  %v2487 = vpop.f32.mrf.mxu0
  %v2488 = vadd.f32 %v2019, %v2487
  %v2489 = vpop.f32.mrf.mxu0
  %2490 = vmatprep.mubr.f32.mxu0 0.0
  %2491 = vmatmul.mubr.f32.gmra.mxu0 %v2143
  %v2492 = vpop.f32.mrf.mxu0
  %v2493 = vadd.f32 %v2019, %v2492
  %v2494 = vpop.f32.mrf.mxu0
  %2495 = vmatprep.mubr.f32.mxu0 0.0
  %2496 = vmatmul.mubr.f32.gmra.mxu0 %v2146
  %v2497 = vpop.f32.mrf.mxu0
  %v2498 = vadd.f32 %v2019, %v2497
  %v2499 = vpop.f32.mrf.mxu0
  %2500 = vmatprep.mubr.f32.mxu0 0.0
  %2501 = vmatmul.mubr.f32.gmra.mxu0 %v2149
  %v2502 = vpop.f32.mrf.mxu0
  %v2503 = vadd.f32 %v2019, %v2502
  %v2504 = vpop.f32.mrf.mxu0
  %2505 = vmatprep.mubr.f32.mxu0 0.0
  %2506 = vmatmul.mubr.f32.gmra.mxu0 %v2152
  %v2507 = vpop.f32.mrf.mxu0
  %v2508 = vadd.f32 %v2019, %v2507
  %v2509 = vpop.f32.mrf.mxu0
  %2510 = vmatprep.mubr.f32.mxu0 0.0
  %2511 = vmatmul.mubr.f32.gmra.mxu0 %v2155
  %v2512 = vpop.f32.mrf.mxu0
  %v2513 = vadd.f32 %v2019, %v2512
  %v2514 = vpop.f32.mrf.mxu0
  %2515 = vmatprep.mubr.f32.mxu0 0.0
  %2516 = vmatmul.mubr.f32.gmra.mxu0 %v2158
  %v2517 = vpop.f32.mrf.mxu0
  %v2518 = vadd.f32 %v2019, %v2517
  %v2519 = vpop.f32.mrf.mxu0
  %2520 = vmatprep.mubr.f32.mxu0 0.0
  %2521 = vmatmul.mubr.f32.gmra.mxu0 %v2161
  %v2522 = vpop.f32.mrf.mxu0
  %v2523 = vadd.f32 %v2019, %v2522
  %v2524 = vpop.f32.mrf.mxu0
  %2525 = vmatprep.mubr.f32.mxu0 0.0
  %2526 = vmatmul.mubr.f32.gmra.mxu0 %v2164
  %v2527 = vpop.f32.mrf.mxu0
  %v2528 = vadd.f32 %v2019, %v2527
  %v2529 = vpop.f32.mrf.mxu0
  %2530 = vmatprep.mubr.f32.mxu0 0.0
  %2531 = vmatmul.mubr.f32.gmra.mxu0 %v2167
  %v2532 = vpop.f32.mrf.mxu0
  %v2533 = vadd.f32 %v2019, %v2532
  %v2534 = vpop.f32.mrf.mxu0
  %2535 = vmatprep.mubr.f32.mxu0 0.0
  %2536 = vmatmul.mubr.f32.gmra.mxu0 %v2170
  %v2537 = vpop.f32.mrf.mxu0
  %v2538 = vadd.f32 %v2019, %v2537
  %v2539 = vpop.f32.mrf.mxu0
  %2540 = vmatprep.mubr.f32.mxu0 0.0
  %2541 = vmatmul.mubr.f32.gmra.mxu0 %v2173
  %v2542 = vpop.f32.mrf.mxu0
  %v2543 = vadd.f32 %v2019, %v2542
  %v2544 = vpop.f32.mrf.mxu0
  %2545 = vmatprep.mubr.f32.mxu0 0.0
  %2546 = vmatmul.mubr.f32.gmra.mxu0 %v2176
  %v2547 = vpop.f32.mrf.mxu0
  %v2548 = vadd.f32 %v2019, %v2547
  %v2549 = vpop.f32.mrf.mxu0
  %2550 = vmatprep.mubr.f32.mxu0 0.0
  %2551 = vmatmul.mubr.f32.gmra.mxu0 %v2179
  %v2552 = vpop.f32.mrf.mxu0
  %v2553 = vadd.f32 %v2019, %v2552
  %v2554 = vpop.f32.mrf.mxu0
  %2555 = vmatprep.mubr.f32.mxu0 0.0
  %2556 = vmatmul.mubr.f32.gmra.mxu0 %v2182
  %v2557 = vpop.f32.mrf.mxu0
  %v2558 = vadd.f32 %v2019, %v2557
  %v2559 = vpop.f32.mrf.mxu0
  %2560 = vmatprep.mubr.f32.mxu0 0.0
  %2561 = vmatmul.mubr.f32.gmra.mxu0 %v2185
  %v2562 = vpop.f32.mrf.mxu0
  %v2563 = vadd.f32 %v2019, %v2562
  %v2564 = vpop.f32.mrf.mxu0
  %2565 = vmatprep.mubr.f32.mxu0 0.0
  %2566 = vmatmul.mubr.f32.gmra.mxu0 %v2188
  %v2567 = vpop.f32.mrf.mxu0
  %v2568 = vadd.f32 %v2019, %v2567
  %v2569 = vpop.f32.mrf.mxu0
  %2570 = vmatprep.mubr.f32.mxu0 0.0
  %2571 = vmatmul.mubr.f32.gmra.mxu0 %v2191
  %v2572 = vpop.f32.mrf.mxu0
  %v2573 = vadd.f32 %v2019, %v2572
  %v2574 = vpop.f32.mrf.mxu0
  %2575 = vmatprep.mubr.f32.mxu0 0.0
  %2576 = vmatmul.mubr.f32.gmra.mxu0 %v2194
  %v2577 = vpop.f32.mrf.mxu0
  %v2578 = vadd.f32 %v2019, %v2577
  %v2579 = vpop.f32.mrf.mxu0
  %2580 = vmatprep.mubr.f32.mxu0 0.0
  %2581 = vmatmul.mubr.f32.gmra.mxu0 %v2197
  %v2582 = vpop.f32.mrf.mxu0
  %v2583 = vadd.f32 %v2019, %v2582
  %v2584 = vpop.f32.mrf.mxu0
  %2585 = vmatprep.mubr.f32.mxu0 0.0
  %2586 = vmatmul.mubr.f32.gmra.mxu0 %v2200
  %v2587 = vpop.f32.mrf.mxu0
  %v2588 = vadd.f32 %v2019, %v2587
  %v2589 = vpop.f32.mrf.mxu0
  %2590 = vmatprep.mubr.f32.mxu0 0.0
  %2591 = vmatmul.mubr.f32.gmra.mxu0 %v2203
  %v2592 = vpop.f32.mrf.mxu0
  %v2593 = vadd.f32 %v2019, %v2592
  %v2594 = vpop.f32.mrf.mxu0
  %2595 = vmatprep.mubr.f32.mxu0 0.0
  %2596 = vmatmul.mubr.f32.gmra.mxu0 %v2206
  %v2597 = vpop.f32.mrf.mxu0
  %v2598 = vadd.f32 %v2019, %v2597
  %v2599 = vpop.f32.mrf.mxu0
  %2600 = vmatprep.mubr.f32.mxu0 0.0
  %2601 = vmatmul.mubr.f32.gmra.mxu0 %v2209
  %v2602 = vpop.f32.mrf.mxu0
  %v2603 = vadd.f32 %v2019, %v2602
  %v2604 = vpop.f32.mrf.mxu0
  %2605 = vmatprep.mubr.f32.mxu0 0.0
  %2606 = vmatmul.mubr.f32.gmra.mxu0 %v2212
  %v2607 = vpop.f32.mrf.mxu0
  %v2608 = vadd.f32 %v2019, %v2607
  %v2609 = vpop.f32.mrf.mxu0
  %2610 = vmatprep.mubr.f32.mxu0 0.0
  %2611 = vmatmul.mubr.f32.gmra.mxu0 %v2215
  %v2612 = vpop.f32.mrf.mxu0
  %v2613 = vadd.f32 %v2019, %v2612
  %v2614 = vpop.f32.mrf.mxu0
  %2615 = vmatprep.mubr.f32.mxu0 0.0
  %2616 = vmatmul.mubr.f32.gmra.mxu0 %v2218
  %v2617 = vpop.f32.mrf.mxu0
  %v2618 = vadd.f32 %v2019, %v2617
  %v2619 = vpop.f32.mrf.mxu0
  %2620 = vmatprep.mubr.f32.mxu0 0.0
  %2621 = vmatmul.mubr.f32.gmra.mxu0 %v2221
  %v2622 = vpop.f32.mrf.mxu0
  %v2623 = vadd.f32 %v2019, %v2622
  %v2624 = vpop.f32.mrf.mxu0
  %2625 = vmatprep.mubr.f32.mxu0 0.0
  %2626 = vmatmul.mubr.f32.gmra.mxu0 %v2224
  %v2627 = vpop.f32.mrf.mxu0
  %v2628 = vadd.f32 %v2019, %v2627
  %v2629 = vpop.f32.mrf.mxu0
  %2630 = vdwg.mxu0
  %v2631 = vmin.f32 %v2293, 4.1351666
  %v2632 = vmin.f32 %v2298, 4.1351666
  %v2633 = vmin.f32 %v2303, 4.1351666
  %v2634 = vmin.f32 %v2308, 4.1351666
  %v2635 = vmin.f32 %v2313, 4.1351666
  %v2636 = vmin.f32 %v2318, 4.1351666
  %v2637 = vmin.f32 %v2323, 4.1351666
  %v2638 = vmin.f32 %v2328, 4.1351666
  %v2639 = vmin.f32 %v2333, 4.1351666
  %v2640 = vmin.f32 %v2338, 4.1351666
  %v2641 = vmin.f32 %v2343, 4.1351666
  %v2642 = vmin.f32 %v2348, 4.1351666
  %v2643 = vmin.f32 %v2353, 4.1351666
  %v2644 = vmin.f32 %v2358, 4.1351666
  %v2645 = vmin.f32 %v2363, 4.1351666
  %v2646 = vmin.f32 %v2368, 4.1351666
  %v2647 = vmin.f32 %v2373, 4.1351666
  %v2648 = vmin.f32 %v2378, 4.1351666
  %v2649 = vmin.f32 %v2383, 4.1351666
  %v2650 = vmin.f32 %v2388, 4.1351666
  %v2651 = vmin.f32 %v2393, 4.1351666
  %v2652 = vmin.f32 %v2398, 4.1351666
  %v2653 = vmin.f32 %v2403, 4.1351666
  %v2654 = vmin.f32 %v2408, 4.1351666
  %v2655 = vmin.f32 %v2413, 4.1351666
  %v2656 = vmin.f32 %v2418, 4.1351666
  %v2657 = vmin.f32 %v2423, 4.1351666
  %v2658 = vmin.f32 %v2428, 4.1351666
  %v2659 = vmin.f32 %v2433, 4.1351666
  %v2660 = vmin.f32 %v2438, 4.1351666
  %v2661 = vmin.f32 %v2443, 4.1351666
  %v2662 = vmin.f32 %v2448, 4.1351666
  %v2663 = vmin.f32 %v2453, 4.1351666
  %v2664 = vmin.f32 %v2458, 4.1351666
  %v2665 = vmin.f32 %v2463, 4.1351666
  %v2666 = vmin.f32 %v2468, 4.1351666
  %v2667 = vmin.f32 %v2473, 4.1351666
  %v2668 = vmin.f32 %v2478, 4.1351666
  %v2669 = vmin.f32 %v2483, 4.1351666
  %v2670 = vmin.f32 %v2488, 4.1351666
  %v2671 = vmin.f32 %v2493, 4.1351666
  %v2672 = vmin.f32 %v2498, 4.1351666
  %v2673 = vmin.f32 %v2503, 4.1351666
  %v2674 = vmin.f32 %v2508, 4.1351666
  %v2675 = vmin.f32 %v2513, 4.1351666
  %v2676 = vmin.f32 %v2518, 4.1351666
  %v2677 = vmin.f32 %v2523, 4.1351666
  %v2678 = vmin.f32 %v2528, 4.1351666
  %v2679 = vmin.f32 %v2533, 4.1351666
  %v2680 = vmin.f32 %v2538, 4.1351666
  %v2681 = vmin.f32 %v2543, 4.1351666
  %v2682 = vmin.f32 %v2548, 4.1351666
  %v2683 = vmin.f32 %v2553, 4.1351666
  %v2684 = vmin.f32 %v2558, 4.1351666
  %v2685 = vmin.f32 %v2563, 4.1351666
  %v2686 = vmin.f32 %v2568, 4.1351666
  %v2687 = vmin.f32 %v2573, 4.1351666
  %v2688 = vmin.f32 %v2578, 4.1351666
  %v2689 = vmin.f32 %v2583, 4.1351666
  %v2690 = vmin.f32 %v2588, 4.1351666
  %v2691 = vmin.f32 %v2593, 4.1351666
  %v2692 = vmin.f32 %v2598, 4.1351666
  %v2693 = vmin.f32 %v2603, 4.1351666
  %v2694 = vmin.f32 %v2608, 4.1351666
  %v2695 = vmin.f32 %v2613, 4.1351666
  %v2696 = vmin.f32 %v2618, 4.1351666
  %v2697 = vmin.f32 %v2623, 4.1351666
  %v2698 = vmin.f32 %v2628, 4.1351666
  %v2699 = vlaneseq
  %v2700 = vshrl.u32 %v2699, 7
  %v2701 = vadd.s32 %v2700, 8
  %v2702 = vadd.s32 %v2700, 16
  %v2703 = vadd.s32 %v2700, 24
  %v2704 = vadd.s32 %v2700, 32
  %v2705 = vadd.s32 %v2700, 40
  %v2706 = vadd.s32 %v2700, 48
  %v2707 = vadd.s32 %v2700, 56
  %v2708 = vadd.s32 %v2700, 64
  %v2709 = vadd.s32 %v2700, 72
  %v2710 = vadd.s32 %v2700, 80
  %v2711 = vadd.s32 %v2700, 88
  %v2712 = vadd.s32 %v2700, 96
  %v2713 = vadd.s32 %v2700, 104
  %v2714 = vadd.s32 %v2700, 112
  %v2715 = vadd.s32 %v2700, 120
  %v2716 = vadd.s32 %v2700, 128
  %v2717 = vadd.s32 %v2700, 136
  %v2718 = vadd.s32 %v2700, 144
  %v2719 = vadd.s32 %v2700, 152
  %v2720 = vadd.s32 %v2700, 160
  %v2721 = vadd.s32 %v2700, 168
  %v2722 = vadd.s32 %v2700, 176
  %v2723 = vadd.s32 %v2700, 184
  %v2724 = vadd.s32 %v2700, 192
  %v2725 = vadd.s32 %v2700, 200
  %v2726 = vadd.s32 %v2700, 208
  %v2727 = vadd.s32 %v2700, 216
  %v2728 = vadd.s32 %v2700, 224
  %v2729 = vadd.s32 %v2700, 232
  %v2730 = vadd.s32 %v2700, 240
  %v2731 = vadd.s32 %v2700, 248
  %v2732 = vadd.s32 %v2700, 256
  %v2733 = vadd.s32 %v2700, 264
  %v2734 = vadd.s32 %v2700, 272
  %v2735 = vadd.s32 %v2700, 280
  %v2736 = vadd.s32 %v2700, 288
  %v2737 = vadd.s32 %v2700, 296
  %v2738 = vadd.s32 %v2700, 304
  %v2739 = vadd.s32 %v2700, 312
  %v2740 = vadd.s32 %v2700, 320
  %v2741 = vadd.s32 %v2700, 328
  %v2742 = vadd.s32 %v2700, 336
  %v2743 = vadd.s32 %v2700, 344
  %v2744 = vadd.s32 %v2700, 352
  %v2745 = vadd.s32 %v2700, 360
  %v2746 = vadd.s32 %v2700, 368
  %v2747 = vadd.s32 %v2700, 376
  %v2748 = vadd.s32 %v2700, 384
  %v2749 = vadd.s32 %v2700, 392
  %v2750 = vadd.s32 %v2700, 400
  %v2751 = vadd.s32 %v2700, 408
  %v2752 = vadd.s32 %v2700, 416
  %v2753 = vadd.s32 %v2700, 424
  %v2754 = vadd.s32 %v2700, 432
  %v2755 = vadd.s32 %v2700, 440
  %v2756 = vadd.s32 %v2700, 448
  %v2757 = vadd.s32 %v2700, 456
  %v2758 = vadd.s32 %v2700, 464
  %v2759 = vadd.s32 %v2700, 472
  %v2760 = vadd.s32 %v2700, 480
  %v2761 = vadd.s32 %v2700, 488
  %v2762 = vadd.s32 %v2700, 496
  %v2763 = vadd.s32 %v2700, 504
  %v2764 = vadd.s32 %v2700, 512
  %v2765 = vadd.s32 %v2700, 520
  %v2766 = vadd.s32 %v2700, 528
  %v2767 = vadd.s32 %v2700, 536
  %v2768 = vshra.s32 %v2700, 4
  %v2769 = vshra.s32 %v2701, 4
  %v2770 = vshra.s32 %v2702, 4
  %v2771 = vshra.s32 %v2703, 4
  %v2772 = vshra.s32 %v2704, 4
  %v2773 = vshra.s32 %v2705, 4
  %v2774 = vshra.s32 %v2706, 4
  %v2775 = vshra.s32 %v2707, 4
  %v2776 = vshra.s32 %v2708, 4
  %v2777 = vshra.s32 %v2709, 4
  %v2778 = vshra.s32 %v2710, 4
  %v2779 = vshra.s32 %v2711, 4
  %v2780 = vshra.s32 %v2712, 4
  %v2781 = vshra.s32 %v2713, 4
  %v2782 = vshra.s32 %v2714, 4
  %v2783 = vshra.s32 %v2715, 4
  %v2784 = vshra.s32 %v2716, 4
  %v2785 = vshra.s32 %v2717, 4
  %v2786 = vshra.s32 %v2718, 4
  %v2787 = vshra.s32 %v2719, 4
  %v2788 = vshra.s32 %v2720, 4
  %v2789 = vshra.s32 %v2721, 4
  %v2790 = vshra.s32 %v2722, 4
  %v2791 = vshra.s32 %v2723, 4
  %v2792 = vshra.s32 %v2724, 4
  %v2793 = vshra.s32 %v2725, 4
  %v2794 = vshra.s32 %v2726, 4
  %v2795 = vshra.s32 %v2727, 4
  %v2796 = vshra.s32 %v2728, 4
  %v2797 = vshra.s32 %v2729, 4
  %v2798 = vshra.s32 %v2730, 4
  %v2799 = vshra.s32 %v2731, 4
  %v2800 = vshra.s32 %v2732, 4
  %v2801 = vshra.s32 %v2733, 4
  %v2802 = vshra.s32 %v2734, 4
  %v2803 = vshra.s32 %v2735, 4
  %v2804 = vshra.s32 %v2736, 4
  %v2805 = vshra.s32 %v2737, 4
  %v2806 = vshra.s32 %v2738, 4
  %v2807 = vshra.s32 %v2739, 4
  %v2808 = vshra.s32 %v2740, 4
  %v2809 = vshra.s32 %v2741, 4
  %v2810 = vshra.s32 %v2742, 4
  %v2811 = vshra.s32 %v2743, 4
  %v2812 = vshra.s32 %v2744, 4
  %v2813 = vshra.s32 %v2745, 4
  %v2814 = vshra.s32 %v2746, 4
  %v2815 = vshra.s32 %v2747, 4
  %v2816 = vshra.s32 %v2748, 4
  %v2817 = vshra.s32 %v2749, 4
  %v2818 = vshra.s32 %v2750, 4
  %v2819 = vshra.s32 %v2751, 4
  %v2820 = vshra.s32 %v2752, 4
  %v2821 = vshra.s32 %v2753, 4
  %v2822 = vshra.s32 %v2754, 4
  %v2823 = vshra.s32 %v2755, 4
  %v2824 = vshra.s32 %v2756, 4
  %v2825 = vshra.s32 %v2757, 4
  %v2826 = vshra.s32 %v2758, 4
  %v2827 = vshra.s32 %v2759, 4
  %v2828 = vshra.s32 %v2760, 4
  %v2829 = vshra.s32 %v2761, 4
  %v2830 = vshra.s32 %v2762, 4
  %v2831 = vshra.s32 %v2763, 4
  %v2832 = vshra.s32 %v2764, 4
  %v2833 = vshra.s32 %v2765, 4
  %v2834 = vshra.s32 %v2766, 4
  %v2835 = vshra.s32 %v2767, 4
  %v2836 = vcvt.s32.f32 %v2768
  %v2837 = vcvt.s32.f32 %v2769
  %v2838 = vcvt.s32.f32 %v2770
  %v2839 = vcvt.s32.f32 %v2771
  %v2840 = vcvt.s32.f32 %v2772
  %v2841 = vcvt.s32.f32 %v2773
  %v2842 = vcvt.s32.f32 %v2774
  %v2843 = vcvt.s32.f32 %v2775
  %v2844 = vcvt.s32.f32 %v2776
  %v2845 = vcvt.s32.f32 %v2777
  %v2846 = vcvt.s32.f32 %v2778
  %v2847 = vcvt.s32.f32 %v2779
  %v2848 = vcvt.s32.f32 %v2780
  %v2849 = vcvt.s32.f32 %v2781
  %v2850 = vcvt.s32.f32 %v2782
  %v2851 = vcvt.s32.f32 %v2783
  %v2852 = vcvt.s32.f32 %v2784
  %v2853 = vcvt.s32.f32 %v2785
  %v2854 = vcvt.s32.f32 %v2786
  %v2855 = vcvt.s32.f32 %v2787
  %v2856 = vcvt.s32.f32 %v2788
  %v2857 = vcvt.s32.f32 %v2789
  %v2858 = vcvt.s32.f32 %v2790
  %v2859 = vcvt.s32.f32 %v2791
  %v2860 = vcvt.s32.f32 %v2792
  %v2861 = vcvt.s32.f32 %v2793
  %v2862 = vcvt.s32.f32 %v2794
  %v2863 = vcvt.s32.f32 %v2795
  %v2864 = vcvt.s32.f32 %v2796
  %v2865 = vcvt.s32.f32 %v2797
  %v2866 = vcvt.s32.f32 %v2798
  %v2867 = vcvt.s32.f32 %v2799
  %v2868 = vcvt.s32.f32 %v2800
  %v2869 = vcvt.s32.f32 %v2801
  %v2870 = vcvt.s32.f32 %v2802
  %v2871 = vcvt.s32.f32 %v2803
  %v2872 = vcvt.s32.f32 %v2804
  %v2873 = vcvt.s32.f32 %v2805
  %v2874 = vcvt.s32.f32 %v2806
  %v2875 = vcvt.s32.f32 %v2807
  %v2876 = vcvt.s32.f32 %v2808
  %v2877 = vcvt.s32.f32 %v2809
  %v2878 = vcvt.s32.f32 %v2810
  %v2879 = vcvt.s32.f32 %v2811
  %v2880 = vcvt.s32.f32 %v2812
  %v2881 = vcvt.s32.f32 %v2813
  %v2882 = vcvt.s32.f32 %v2814
  %v2883 = vcvt.s32.f32 %v2815
  %v2884 = vcvt.s32.f32 %v2816
  %v2885 = vcvt.s32.f32 %v2817
  %v2886 = vcvt.s32.f32 %v2818
  %v2887 = vcvt.s32.f32 %v2819
  %v2888 = vcvt.s32.f32 %v2820
  %v2889 = vcvt.s32.f32 %v2821
  %v2890 = vcvt.s32.f32 %v2822
  %v2891 = vcvt.s32.f32 %v2823
  %v2892 = vcvt.s32.f32 %v2824
  %v2893 = vcvt.s32.f32 %v2825
  %v2894 = vcvt.s32.f32 %v2826
  %v2895 = vcvt.s32.f32 %v2827
  %v2896 = vcvt.s32.f32 %v2828
  %v2897 = vcvt.s32.f32 %v2829
  %v2898 = vcvt.s32.f32 %v2830
  %v2899 = vcvt.s32.f32 %v2831
  %v2900 = vcvt.s32.f32 %v2832
  %v2901 = vcvt.s32.f32 %v2833
  %v2902 = vcvt.s32.f32 %v2834
  %v2903 = vcvt.s32.f32 %v2835
  %v2904 = vadd.f32 %v2836, 0.5
  %v2905 = vadd.f32 %v2837, 0.5
  %v2906 = vadd.f32 %v2838, 0.5
  %v2907 = vadd.f32 %v2839, 0.5
  %v2908 = vadd.f32 %v2840, 0.5
  %v2909 = vadd.f32 %v2841, 0.5
  %v2910 = vadd.f32 %v2842, 0.5
  %v2911 = vadd.f32 %v2843, 0.5
  %v2912 = vadd.f32 %v2844, 0.5
  %v2913 = vadd.f32 %v2845, 0.5
  %v2914 = vadd.f32 %v2846, 0.5
  %v2915 = vadd.f32 %v2847, 0.5
  %v2916 = vadd.f32 %v2848, 0.5
  %v2917 = vadd.f32 %v2849, 0.5
  %v2918 = vadd.f32 %v2850, 0.5
  %v2919 = vadd.f32 %v2851, 0.5
  %v2920 = vadd.f32 %v2852, 0.5
  %v2921 = vadd.f32 %v2853, 0.5
  %v2922 = vadd.f32 %v2854, 0.5
  %v2923 = vadd.f32 %v2855, 0.5
  %v2924 = vadd.f32 %v2856, 0.5
  %v2925 = vadd.f32 %v2857, 0.5
  %v2926 = vadd.f32 %v2858, 0.5
  %v2927 = vadd.f32 %v2859, 0.5
  %v2928 = vadd.f32 %v2860, 0.5
  %v2929 = vadd.f32 %v2861, 0.5
  %v2930 = vadd.f32 %v2862, 0.5
  %v2931 = vadd.f32 %v2863, 0.5
  %v2932 = vadd.f32 %v2864, 0.5
  %v2933 = vadd.f32 %v2865, 0.5
  %v2934 = vadd.f32 %v2866, 0.5
  %v2935 = vadd.f32 %v2867, 0.5
  %v2936 = vadd.f32 %v2868, 0.5
  %v2937 = vadd.f32 %v2869, 0.5
  %v2938 = vadd.f32 %v2870, 0.5
  %v2939 = vadd.f32 %v2871, 0.5
  %v2940 = vadd.f32 %v2872, 0.5
  %v2941 = vadd.f32 %v2873, 0.5
  %v2942 = vadd.f32 %v2874, 0.5
  %v2943 = vadd.f32 %v2875, 0.5
  %v2944 = vadd.f32 %v2876, 0.5
  %v2945 = vadd.f32 %v2877, 0.5
  %v2946 = vadd.f32 %v2878, 0.5
  %v2947 = vadd.f32 %v2879, 0.5
  %v2948 = vadd.f32 %v2880, 0.5
  %v2949 = vadd.f32 %v2881, 0.5
  %v2950 = vadd.f32 %v2882, 0.5
  %v2951 = vadd.f32 %v2883, 0.5
  %v2952 = vadd.f32 %v2884, 0.5
  %v2953 = vadd.f32 %v2885, 0.5
  %v2954 = vadd.f32 %v2886, 0.5
  %v2955 = vadd.f32 %v2887, 0.5
  %v2956 = vadd.f32 %v2888, 0.5
  %v2957 = vadd.f32 %v2889, 0.5
  %v2958 = vadd.f32 %v2890, 0.5
  %v2959 = vadd.f32 %v2891, 0.5
  %v2960 = vadd.f32 %v2892, 0.5
  %v2961 = vadd.f32 %v2893, 0.5
  %v2962 = vadd.f32 %v2894, 0.5
  %v2963 = vadd.f32 %v2895, 0.5
  %v2964 = vadd.f32 %v2896, 0.5
  %v2965 = vadd.f32 %v2897, 0.5
  %v2966 = vadd.f32 %v2898, 0.5
  %v2967 = vadd.f32 %v2899, 0.5
  %v2968 = vadd.f32 %v2900, 0.5
  %v2969 = vadd.f32 %v2901, 0.5
  %v2970 = vadd.f32 %v2902, 0.5
  %v2971 = vadd.f32 %v2903, 0.5
  %v2972 = vmul.f32 %v2904, 0.055555556
  %v2973 = vmul.f32 %v2905, 0.055555556
  %v2974 = vmul.f32 %v2906, 0.055555556
  %v2975 = vmul.f32 %v2907, 0.055555556
  %v2976 = vmul.f32 %v2908, 0.055555556
  %v2977 = vmul.f32 %v2909, 0.055555556
  %v2978 = vmul.f32 %v2910, 0.055555556
  %v2979 = vmul.f32 %v2911, 0.055555556
  %v2980 = vmul.f32 %v2912, 0.055555556
  %v2981 = vmul.f32 %v2913, 0.055555556
  %v2982 = vmul.f32 %v2914, 0.055555556
  %v2983 = vmul.f32 %v2915, 0.055555556
  %v2984 = vmul.f32 %v2916, 0.055555556
  %v2985 = vmul.f32 %v2917, 0.055555556
  %v2986 = vmul.f32 %v2918, 0.055555556
  %v2987 = vmul.f32 %v2919, 0.055555556
  %v2988 = vmul.f32 %v2920, 0.055555556
  %v2989 = vmul.f32 %v2921, 0.055555556
  %v2990 = vmul.f32 %v2922, 0.055555556
  %v2991 = vmul.f32 %v2923, 0.055555556
  %v2992 = vmul.f32 %v2924, 0.055555556
  %v2993 = vmul.f32 %v2925, 0.055555556
  %v2994 = vmul.f32 %v2926, 0.055555556
  %v2995 = vmul.f32 %v2927, 0.055555556
  %v2996 = vmul.f32 %v2928, 0.055555556
  %v2997 = vmul.f32 %v2929, 0.055555556
  %v2998 = vmul.f32 %v2930, 0.055555556
  %v2999 = vmul.f32 %v2931, 0.055555556
  %v3000 = vmul.f32 %v2932, 0.055555556
  %v3001 = vmul.f32 %v2933, 0.055555556
  %v3002 = vmul.f32 %v2934, 0.055555556
  %v3003 = vmul.f32 %v2935, 0.055555556
  %v3004 = vmul.f32 %v2936, 0.055555556
  %v3005 = vmul.f32 %v2937, 0.055555556
  %v3006 = vmul.f32 %v2938, 0.055555556
  %v3007 = vmul.f32 %v2939, 0.055555556
  %v3008 = vmul.f32 %v2940, 0.055555556
  %v3009 = vmul.f32 %v2941, 0.055555556
  %v3010 = vmul.f32 %v2942, 0.055555556
  %v3011 = vmul.f32 %v2943, 0.055555556
  %v3012 = vmul.f32 %v2944, 0.055555556
  %v3013 = vmul.f32 %v2945, 0.055555556
  %v3014 = vmul.f32 %v2946, 0.055555556
  %v3015 = vmul.f32 %v2947, 0.055555556
  %v3016 = vmul.f32 %v2948, 0.055555556
  %v3017 = vmul.f32 %v2949, 0.055555556
  %v3018 = vmul.f32 %v2950, 0.055555556
  %v3019 = vmul.f32 %v2951, 0.055555556
  %v3020 = vmul.f32 %v2952, 0.055555556
  %v3021 = vmul.f32 %v2953, 0.055555556
  %v3022 = vmul.f32 %v2954, 0.055555556
  %v3023 = vmul.f32 %v2955, 0.055555556
  %v3024 = vmul.f32 %v2956, 0.055555556
  %v3025 = vmul.f32 %v2957, 0.055555556
  %v3026 = vmul.f32 %v2958, 0.055555556
  %v3027 = vmul.f32 %v2959, 0.055555556
  %v3028 = vmul.f32 %v2960, 0.055555556
  %v3029 = vmul.f32 %v2961, 0.055555556
  %v3030 = vmul.f32 %v2962, 0.055555556
  %v3031 = vmul.f32 %v2963, 0.055555556
  %v3032 = vmul.f32 %v2964, 0.055555556
  %v3033 = vmul.f32 %v2965, 0.055555556
  %v3034 = vmul.f32 %v2966, 0.055555556
  %v3035 = vmul.f32 %v2967, 0.055555556
  %v3036 = vmul.f32 %v2968, 0.055555556
  %v3037 = vmul.f32 %v2969, 0.055555556
  %v3038 = vmul.f32 %v2970, 0.055555556
  %v3039 = vmul.f32 %v2971, 0.055555556
  %v3040 = vfloor.f32 %v2972
  %v3041 = vfloor.f32 %v2973
  %v3042 = vfloor.f32 %v2974
  %v3043 = vfloor.f32 %v2975
  %v3044 = vfloor.f32 %v2976
  %v3045 = vfloor.f32 %v2977
  %v3046 = vfloor.f32 %v2978
  %v3047 = vfloor.f32 %v2979
  %v3048 = vfloor.f32 %v2980
  %v3049 = vfloor.f32 %v2981
  %v3050 = vfloor.f32 %v2982
  %v3051 = vfloor.f32 %v2983
  %v3052 = vfloor.f32 %v2984
  %v3053 = vfloor.f32 %v2985
  %v3054 = vfloor.f32 %v2986
  %v3055 = vfloor.f32 %v2987
  %v3056 = vfloor.f32 %v2988
  %v3057 = vfloor.f32 %v2989
  %v3058 = vfloor.f32 %v2990
  %v3059 = vfloor.f32 %v2991
  %v3060 = vfloor.f32 %v2992
  %v3061 = vfloor.f32 %v2993
  %v3062 = vfloor.f32 %v2994
  %v3063 = vfloor.f32 %v2995
  %v3064 = vfloor.f32 %v2996
  %v3065 = vfloor.f32 %v2997
  %v3066 = vfloor.f32 %v2998
  %v3067 = vfloor.f32 %v2999
  %v3068 = vfloor.f32 %v3000
  %v3069 = vfloor.f32 %v3001
  %v3070 = vfloor.f32 %v3002
  %v3071 = vfloor.f32 %v3003
  %v3072 = vfloor.f32 %v3004
  %v3073 = vfloor.f32 %v3005
  %v3074 = vfloor.f32 %v3006
  %v3075 = vfloor.f32 %v3007
  %v3076 = vfloor.f32 %v3008
  %v3077 = vfloor.f32 %v3009
  %v3078 = vfloor.f32 %v3010
  %v3079 = vfloor.f32 %v3011
  %v3080 = vfloor.f32 %v3012
  %v3081 = vfloor.f32 %v3013
  %v3082 = vfloor.f32 %v3014
  %v3083 = vfloor.f32 %v3015
  %v3084 = vfloor.f32 %v3016
  %v3085 = vfloor.f32 %v3017
  %v3086 = vfloor.f32 %v3018
  %v3087 = vfloor.f32 %v3019
  %v3088 = vfloor.f32 %v3020
  %v3089 = vfloor.f32 %v3021
  %v3090 = vfloor.f32 %v3022
  %v3091 = vfloor.f32 %v3023
  %v3092 = vfloor.f32 %v3024
  %v3093 = vfloor.f32 %v3025
  %v3094 = vfloor.f32 %v3026
  %v3095 = vfloor.f32 %v3027
  %v3096 = vfloor.f32 %v3028
  %v3097 = vfloor.f32 %v3029
  %v3098 = vfloor.f32 %v3030
  %v3099 = vfloor.f32 %v3031
  %v3100 = vfloor.f32 %v3032
  %v3101 = vfloor.f32 %v3033
  %v3102 = vfloor.f32 %v3034
  %v3103 = vfloor.f32 %v3035
  %v3104 = vfloor.f32 %v3036
  %v3105 = vfloor.f32 %v3037
  %v3106 = vfloor.f32 %v3038
  %v3107 = vfloor.f32 %v3039
  %v3108 = vmul.f32 %v3040, 18.0
  %v3109 = vmul.f32 %v3041, 18.0
  %v3110 = vmul.f32 %v3042, 18.0
  %v3111 = vmul.f32 %v3043, 18.0
  %v3112 = vmul.f32 %v3044, 18.0
  %v3113 = vmul.f32 %v3045, 18.0
  %v3114 = vmul.f32 %v3046, 18.0
  %v3115 = vmul.f32 %v3047, 18.0
  %v3116 = vmul.f32 %v3048, 18.0
  %v3117 = vmul.f32 %v3049, 18.0
  %v3118 = vmul.f32 %v3050, 18.0
  %v3119 = vmul.f32 %v3051, 18.0
  %v3120 = vmul.f32 %v3052, 18.0
  %v3121 = vmul.f32 %v3053, 18.0
  %v3122 = vmul.f32 %v3054, 18.0
  %v3123 = vmul.f32 %v3055, 18.0
  %v3124 = vmul.f32 %v3056, 18.0
  %v3125 = vmul.f32 %v3057, 18.0
  %v3126 = vmul.f32 %v3058, 18.0
  %v3127 = vmul.f32 %v3059, 18.0
  %v3128 = vmul.f32 %v3060, 18.0
  %v3129 = vmul.f32 %v3061, 18.0
  %v3130 = vmul.f32 %v3062, 18.0
  %v3131 = vmul.f32 %v3063, 18.0
  %v3132 = vmul.f32 %v3064, 18.0
  %v3133 = vmul.f32 %v3065, 18.0
  %v3134 = vmul.f32 %v3066, 18.0
  %v3135 = vmul.f32 %v3067, 18.0
  %v3136 = vmul.f32 %v3068, 18.0
  %v3137 = vmul.f32 %v3069, 18.0
  %v3138 = vmul.f32 %v3070, 18.0
  %v3139 = vmul.f32 %v3071, 18.0
  %v3140 = vmul.f32 %v3072, 18.0
  %v3141 = vmul.f32 %v3073, 18.0
  %v3142 = vmul.f32 %v3074, 18.0
  %v3143 = vmul.f32 %v3075, 18.0
  %v3144 = vmul.f32 %v3076, 18.0
  %v3145 = vmul.f32 %v3077, 18.0
  %v3146 = vmul.f32 %v3078, 18.0
  %v3147 = vmul.f32 %v3079, 18.0
  %v3148 = vmul.f32 %v3080, 18.0
  %v3149 = vmul.f32 %v3081, 18.0
  %v3150 = vmul.f32 %v3082, 18.0
  %v3151 = vmul.f32 %v3083, 18.0
  %v3152 = vmul.f32 %v3084, 18.0
  %v3153 = vmul.f32 %v3085, 18.0
  %v3154 = vmul.f32 %v3086, 18.0
  %v3155 = vmul.f32 %v3087, 18.0
  %v3156 = vmul.f32 %v3088, 18.0
  %v3157 = vmul.f32 %v3089, 18.0
  %v3158 = vmul.f32 %v3090, 18.0
  %v3159 = vmul.f32 %v3091, 18.0
  %v3160 = vmul.f32 %v3092, 18.0
  %v3161 = vmul.f32 %v3093, 18.0
  %v3162 = vmul.f32 %v3094, 18.0
  %v3163 = vmul.f32 %v3095, 18.0
  %v3164 = vmul.f32 %v3096, 18.0
  %v3165 = vmul.f32 %v3097, 18.0
  %v3166 = vmul.f32 %v3098, 18.0
  %v3167 = vmul.f32 %v3099, 18.0
  %v3168 = vmul.f32 %v3100, 18.0
  %v3169 = vmul.f32 %v3101, 18.0
  %v3170 = vmul.f32 %v3102, 18.0
  %v3171 = vmul.f32 %v3103, 18.0
  %v3172 = vmul.f32 %v3104, 18.0
  %v3173 = vmul.f32 %v3105, 18.0
  %v3174 = vmul.f32 %v3106, 18.0
  %v3175 = vmul.f32 %v3107, 18.0
  %v3176 = vsub.f32 %v2836, %v3108
  %v3177 = vsub.f32 %v2837, %v3109
  %v3178 = vsub.f32 %v2838, %v3110
  %v3179 = vsub.f32 %v2839, %v3111
  %v3180 = vsub.f32 %v2840, %v3112
  %v3181 = vsub.f32 %v2841, %v3113
  %v3182 = vsub.f32 %v2842, %v3114
  %v3183 = vsub.f32 %v2843, %v3115
  %v3184 = vsub.f32 %v2844, %v3116
  %v3185 = vsub.f32 %v2845, %v3117
  %v3186 = vsub.f32 %v2846, %v3118
  %v3187 = vsub.f32 %v2847, %v3119
  %v3188 = vsub.f32 %v2848, %v3120
  %v3189 = vsub.f32 %v2849, %v3121
  %v3190 = vsub.f32 %v2850, %v3122
  %v3191 = vsub.f32 %v2851, %v3123
  %v3192 = vsub.f32 %v2852, %v3124
  %v3193 = vsub.f32 %v2853, %v3125
  %v3194 = vsub.f32 %v2854, %v3126
  %v3195 = vsub.f32 %v2855, %v3127
  %v3196 = vsub.f32 %v2856, %v3128
  %v3197 = vsub.f32 %v2857, %v3129
  %v3198 = vsub.f32 %v2858, %v3130
  %v3199 = vsub.f32 %v2859, %v3131
  %v3200 = vsub.f32 %v2860, %v3132
  %v3201 = vsub.f32 %v2861, %v3133
  %v3202 = vsub.f32 %v2862, %v3134
  %v3203 = vsub.f32 %v2863, %v3135
  %v3204 = vsub.f32 %v2864, %v3136
  %v3205 = vsub.f32 %v2865, %v3137
  %v3206 = vsub.f32 %v2866, %v3138
  %v3207 = vsub.f32 %v2867, %v3139
  %v3208 = vsub.f32 %v2868, %v3140
  %v3209 = vsub.f32 %v2869, %v3141
  %v3210 = vsub.f32 %v2870, %v3142
  %v3211 = vsub.f32 %v2871, %v3143
  %v3212 = vsub.f32 %v2872, %v3144
  %v3213 = vsub.f32 %v2873, %v3145
  %v3214 = vsub.f32 %v2874, %v3146
  %v3215 = vsub.f32 %v2875, %v3147
  %v3216 = vsub.f32 %v2876, %v3148
  %v3217 = vsub.f32 %v2877, %v3149
  %v3218 = vsub.f32 %v2878, %v3150
  %v3219 = vsub.f32 %v2879, %v3151
  %v3220 = vsub.f32 %v2880, %v3152
  %v3221 = vsub.f32 %v2881, %v3153
  %v3222 = vsub.f32 %v2882, %v3154
  %v3223 = vsub.f32 %v2883, %v3155
  %v3224 = vsub.f32 %v2884, %v3156
  %v3225 = vsub.f32 %v2885, %v3157
  %v3226 = vsub.f32 %v2886, %v3158
  %v3227 = vsub.f32 %v2887, %v3159
  %v3228 = vsub.f32 %v2888, %v3160
  %v3229 = vsub.f32 %v2889, %v3161
  %v3230 = vsub.f32 %v2890, %v3162
  %v3231 = vsub.f32 %v2891, %v3163
  %v3232 = vsub.f32 %v2892, %v3164
  %v3233 = vsub.f32 %v2893, %v3165
  %v3234 = vsub.f32 %v2894, %v3166
  %v3235 = vsub.f32 %v2895, %v3167
  %v3236 = vsub.f32 %v2896, %v3168
  %v3237 = vsub.f32 %v2897, %v3169
  %v3238 = vsub.f32 %v2898, %v3170
  %v3239 = vsub.f32 %v2899, %v3171
  %v3240 = vsub.f32 %v2900, %v3172
  %v3241 = vsub.f32 %v2901, %v3173
  %v3242 = vsub.f32 %v2902, %v3174
  %v3243 = vsub.f32 %v2903, %v3175
  %v3244 = vmul.f32 %v3176, 8.0
  %v3245 = vmul.f32 %v3177, 8.0
  %v3246 = vmul.f32 %v3178, 8.0
  %v3247 = vmul.f32 %v3179, 8.0
  %v3248 = vmul.f32 %v3180, 8.0
  %v3249 = vmul.f32 %v3181, 8.0
  %v3250 = vmul.f32 %v3182, 8.0
  %v3251 = vmul.f32 %v3183, 8.0
  %v3252 = vmul.f32 %v3184, 8.0
  %v3253 = vmul.f32 %v3185, 8.0
  %v3254 = vmul.f32 %v3186, 8.0
  %v3255 = vmul.f32 %v3187, 8.0
  %v3256 = vmul.f32 %v3188, 8.0
  %v3257 = vmul.f32 %v3189, 8.0
  %v3258 = vmul.f32 %v3190, 8.0
  %v3259 = vmul.f32 %v3191, 8.0
  %v3260 = vmul.f32 %v3192, 8.0
  %v3261 = vmul.f32 %v3193, 8.0
  %v3262 = vmul.f32 %v3194, 8.0
  %v3263 = vmul.f32 %v3195, 8.0
  %v3264 = vmul.f32 %v3196, 8.0
  %v3265 = vmul.f32 %v3197, 8.0
  %v3266 = vmul.f32 %v3198, 8.0
  %v3267 = vmul.f32 %v3199, 8.0
  %v3268 = vmul.f32 %v3200, 8.0
  %v3269 = vmul.f32 %v3201, 8.0
  %v3270 = vmul.f32 %v3202, 8.0
  %v3271 = vmul.f32 %v3203, 8.0
  %v3272 = vmul.f32 %v3204, 8.0
  %v3273 = vmul.f32 %v3205, 8.0
  %v3274 = vmul.f32 %v3206, 8.0
  %v3275 = vmul.f32 %v3207, 8.0
  %v3276 = vmul.f32 %v3208, 8.0
  %v3277 = vmul.f32 %v3209, 8.0
  %v3278 = vmul.f32 %v3210, 8.0
  %v3279 = vmul.f32 %v3211, 8.0
  %v3280 = vmul.f32 %v3212, 8.0
  %v3281 = vmul.f32 %v3213, 8.0
  %v3282 = vmul.f32 %v3214, 8.0
  %v3283 = vmul.f32 %v3215, 8.0
  %v3284 = vmul.f32 %v3216, 8.0
  %v3285 = vmul.f32 %v3217, 8.0
  %v3286 = vmul.f32 %v3218, 8.0
  %v3287 = vmul.f32 %v3219, 8.0
  %v3288 = vmul.f32 %v3220, 8.0
  %v3289 = vmul.f32 %v3221, 8.0
  %v3290 = vmul.f32 %v3222, 8.0
  %v3291 = vmul.f32 %v3223, 8.0
  %v3292 = vmul.f32 %v3224, 8.0
  %v3293 = vmul.f32 %v3225, 8.0
  %v3294 = vmul.f32 %v3226, 8.0
  %v3295 = vmul.f32 %v3227, 8.0
  %v3296 = vmul.f32 %v3228, 8.0
  %v3297 = vmul.f32 %v3229, 8.0
  %v3298 = vmul.f32 %v3230, 8.0
  %v3299 = vmul.f32 %v3231, 8.0
  %v3300 = vmul.f32 %v3232, 8.0
  %v3301 = vmul.f32 %v3233, 8.0
  %v3302 = vmul.f32 %v3234, 8.0
  %v3303 = vmul.f32 %v3235, 8.0
  %v3304 = vmul.f32 %v3236, 8.0
  %v3305 = vmul.f32 %v3237, 8.0
  %v3306 = vmul.f32 %v3238, 8.0
  %v3307 = vmul.f32 %v3239, 8.0
  %v3308 = vmul.f32 %v3240, 8.0
  %v3309 = vmul.f32 %v3241, 8.0
  %v3310 = vmul.f32 %v3242, 8.0
  %v3311 = vmul.f32 %v3243, 8.0
  %3312 = vrot.lane.b32.xlu0 %v1878, 108
  %v3313 = vpop.permute.xlu0 %3312
  %v3315 = vmul.f32 %v2293, %v3313
  %v3316 = vmul.f32 %v2298, %v3313
  %v3317 = vmul.f32 %v2303, %v3313
  %v3318 = vmul.f32 %v2308, %v3313
  %v3319 = vmul.f32 %v2313, %v3313
  %v3320 = vmul.f32 %v2318, %v3313
  %v3321 = vmul.f32 %v2323, %v3313
  %v3322 = vmul.f32 %v2328, %v3313
  %v3323 = vmul.f32 %v2333, %v3313
  %v3324 = vmul.f32 %v2338, %v3313
  %v3325 = vmul.f32 %v2343, %v3313
  %v3326 = vmul.f32 %v2348, %v3313
  %v3327 = vmul.f32 %v2353, %v3313
  %v3328 = vmul.f32 %v2358, %v3313
  %v3329 = vmul.f32 %v2363, %v3313
  %v3330 = vmul.f32 %v2368, %v3313
  %v3331 = vmul.f32 %v2373, %v3313
  %v3332 = vmul.f32 %v2378, %v3313
  %v3333 = vmul.f32 %v2383, %v3313
  %v3334 = vmul.f32 %v2388, %v3313
  %v3335 = vmul.f32 %v2393, %v3313
  %v3336 = vmul.f32 %v2398, %v3313
  %v3337 = vmul.f32 %v2403, %v3313
  %v3338 = vmul.f32 %v2408, %v3313
  %v3339 = vmul.f32 %v2413, %v3313
  %v3340 = vmul.f32 %v2418, %v3313
  %v3341 = vmul.f32 %v2423, %v3313
  %v3342 = vmul.f32 %v2428, %v3313
  %v3343 = vmul.f32 %v2433, %v3313
  %v3344 = vmul.f32 %v2438, %v3313
  %v3345 = vmul.f32 %v2443, %v3313
  %v3346 = vmul.f32 %v2448, %v3313
  %v3347 = vmul.f32 %v2453, %v3313
  %v3348 = vmul.f32 %v2458, %v3313
  %v3349 = vmul.f32 %v2463, %v3313
  %v3350 = vmul.f32 %v2468, %v3313
  %v3351 = vmul.f32 %v2473, %v3313
  %v3352 = vmul.f32 %v2478, %v3313
  %v3353 = vmul.f32 %v2483, %v3313
  %v3354 = vmul.f32 %v2488, %v3313
  %v3355 = vmul.f32 %v2493, %v3313
  %v3356 = vmul.f32 %v2498, %v3313
  %v3357 = vmul.f32 %v2503, %v3313
  %v3358 = vmul.f32 %v2508, %v3313
  %v3359 = vmul.f32 %v2513, %v3313
  %v3360 = vmul.f32 %v2518, %v3313
  %v3361 = vmul.f32 %v2523, %v3313
  %v3362 = vmul.f32 %v2528, %v3313
  %v3363 = vmul.f32 %v2533, %v3313
  %v3364 = vmul.f32 %v2538, %v3313
  %v3365 = vmul.f32 %v2543, %v3313
  %v3366 = vmul.f32 %v2548, %v3313
  %v3367 = vmul.f32 %v2553, %v3313
  %v3368 = vmul.f32 %v2558, %v3313
  %v3369 = vmul.f32 %v2563, %v3313
  %v3370 = vmul.f32 %v2568, %v3313
  %v3371 = vmul.f32 %v2573, %v3313
  %v3372 = vmul.f32 %v2578, %v3313
  %v3373 = vmul.f32 %v2583, %v3313
  %v3374 = vmul.f32 %v2588, %v3313
  %v3375 = vmul.f32 %v2593, %v3313
  %v3376 = vmul.f32 %v2598, %v3313
  %v3377 = vmul.f32 %v2603, %v3313
  %v3378 = vmul.f32 %v2608, %v3313
  %v3379 = vmul.f32 %v2613, %v3313
  %v3380 = vmul.f32 %v2618, %v3313
  %v3381 = vmul.f32 %v2623, %v3313
  %v3382 = vmul.f32 %v2628, %v3313
  %v3383 = vadd.f32 %v3315, %v3244
  %v3384 = vadd.f32 %v3316, %v3245
  %v3385 = vadd.f32 %v3317, %v3246
  %v3386 = vadd.f32 %v3318, %v3247
  %v3387 = vadd.f32 %v3319, %v3248
  %v3388 = vadd.f32 %v3320, %v3249
  %v3389 = vadd.f32 %v3321, %v3250
  %v3390 = vadd.f32 %v3322, %v3251
  %v3391 = vadd.f32 %v3323, %v3252
  %v3392 = vadd.f32 %v3324, %v3253
  %v3393 = vadd.f32 %v3325, %v3254
  %v3394 = vadd.f32 %v3326, %v3255
  %v3395 = vadd.f32 %v3327, %v3256
  %v3396 = vadd.f32 %v3328, %v3257
  %v3397 = vadd.f32 %v3329, %v3258
  %v3398 = vadd.f32 %v3330, %v3259
  %v3399 = vadd.f32 %v3331, %v3260
  %v3400 = vadd.f32 %v3332, %v3261
  %v3401 = vadd.f32 %v3333, %v3262
  %v3402 = vadd.f32 %v3334, %v3263
  %v3403 = vadd.f32 %v3335, %v3264
  %v3404 = vadd.f32 %v3336, %v3265
  %v3405 = vadd.f32 %v3337, %v3266
  %v3406 = vadd.f32 %v3338, %v3267
  %v3407 = vadd.f32 %v3339, %v3268
  %v3408 = vadd.f32 %v3340, %v3269
  %v3409 = vadd.f32 %v3341, %v3270
  %v3410 = vadd.f32 %v3342, %v3271
  %v3411 = vadd.f32 %v3343, %v3272
  %v3412 = vadd.f32 %v3344, %v3273
  %v3413 = vadd.f32 %v3345, %v3274
  %v3414 = vadd.f32 %v3346, %v3275
  %v3415 = vadd.f32 %v3347, %v3276
  %v3416 = vadd.f32 %v3348, %v3277
  %v3417 = vadd.f32 %v3349, %v3278
  %v3418 = vadd.f32 %v3350, %v3279
  %v3419 = vadd.f32 %v3351, %v3280
  %v3420 = vadd.f32 %v3352, %v3281
  %v3421 = vadd.f32 %v3353, %v3282
  %v3422 = vadd.f32 %v3354, %v3283
  %v3423 = vadd.f32 %v3355, %v3284
  %v3424 = vadd.f32 %v3356, %v3285
  %v3425 = vadd.f32 %v3357, %v3286
  %v3426 = vadd.f32 %v3358, %v3287
  %v3427 = vadd.f32 %v3359, %v3288
  %v3428 = vadd.f32 %v3360, %v3289
  %v3429 = vadd.f32 %v3361, %v3290
  %v3430 = vadd.f32 %v3362, %v3291
  %v3431 = vadd.f32 %v3363, %v3292
  %v3432 = vadd.f32 %v3364, %v3293
  %v3433 = vadd.f32 %v3365, %v3294
  %v3434 = vadd.f32 %v3366, %v3295
  %v3435 = vadd.f32 %v3367, %v3296
  %v3436 = vadd.f32 %v3368, %v3297
  %v3437 = vadd.f32 %v3369, %v3298
  %v3438 = vadd.f32 %v3370, %v3299
  %v3439 = vadd.f32 %v3371, %v3300
  %v3440 = vadd.f32 %v3372, %v3301
  %v3441 = vadd.f32 %v3373, %v3302
  %v3442 = vadd.f32 %v3374, %v3303
  %v3443 = vadd.f32 %v3375, %v3304
  %v3444 = vadd.f32 %v3376, %v3305
  %v3445 = vadd.f32 %v3377, %v3306
  %v3446 = vadd.f32 %v3378, %v3307
  %v3447 = vadd.f32 %v3379, %v3308
  %v3448 = vadd.f32 %v3380, %v3309
  %v3449 = vadd.f32 %v3381, %v3310
  %v3450 = vadd.f32 %v3382, %v3311
  %v3451 = vmul.f32 %v2631, 1.442695
  %v3452 = vpow.pop %v3451
  %v3453 = vmul.f32 %v2632, 1.442695
  %v3454 = vpow.pop %v3453
  %v3455 = vmul.f32 %v2633, 1.442695
  %v3456 = vpow.pop %v3455
  %v3457 = vmul.f32 %v2634, 1.442695
  %v3458 = vpow.pop %v3457
  %v3459 = vmul.f32 %v2635, 1.442695
  %v3460 = vpow.pop %v3459
  %v3461 = vmul.f32 %v2636, 1.442695
  %v3462 = vpow.pop %v3461
  %v3463 = vmul.f32 %v2637, 1.442695
  %v3464 = vpow.pop %v3463
  %v3465 = vmul.f32 %v2638, 1.442695
  %v3466 = vpow.pop %v3465
  %v3467 = vmul.f32 %v2639, 1.442695
  %v3468 = vpow.pop %v3467
  %v3469 = vmul.f32 %v2640, 1.442695
  %v3470 = vpow.pop %v3469
  %v3471 = vmul.f32 %v2641, 1.442695
  %v3472 = vpow.pop %v3471
  %v3473 = vmul.f32 %v2642, 1.442695
  %v3474 = vpow.pop %v3473
  %v3475 = vmul.f32 %v2643, 1.442695
  %v3476 = vpow.pop %v3475
  %v3477 = vmul.f32 %v2644, 1.442695
  %v3478 = vpow.pop %v3477
  %v3479 = vmul.f32 %v2645, 1.442695
  %v3480 = vpow.pop %v3479
  %v3481 = vmul.f32 %v2646, 1.442695
  %v3482 = vpow.pop %v3481
  %v3483 = vmul.f32 %v2647, 1.442695
  %v3484 = vpow.pop %v3483
  %v3485 = vmul.f32 %v2648, 1.442695
  %v3486 = vpow.pop %v3485
  %v3487 = vmul.f32 %v2649, 1.442695
  %v3488 = vpow.pop %v3487
  %v3489 = vmul.f32 %v2650, 1.442695
  %v3490 = vpow.pop %v3489
  %v3491 = vmul.f32 %v2651, 1.442695
  %v3492 = vpow.pop %v3491
  %v3493 = vmul.f32 %v2652, 1.442695
  %v3494 = vpow.pop %v3493
  %v3495 = vmul.f32 %v2653, 1.442695
  %v3496 = vpow.pop %v3495
  %v3497 = vmul.f32 %v2654, 1.442695
  %v3498 = vpow.pop %v3497
  %v3499 = vmul.f32 %v2655, 1.442695
  %v3500 = vpow.pop %v3499
  %v3501 = vmul.f32 %v2656, 1.442695
  %v3502 = vpow.pop %v3501
  %v3503 = vmul.f32 %v2657, 1.442695
  %v3504 = vpow.pop %v3503
  %v3505 = vmul.f32 %v2658, 1.442695
  %v3506 = vpow.pop %v3505
  %v3507 = vmul.f32 %v2659, 1.442695
  %v3508 = vpow.pop %v3507
  %v3509 = vmul.f32 %v2660, 1.442695
  %v3510 = vpow.pop %v3509
  %v3511 = vmul.f32 %v2661, 1.442695
  %v3512 = vpow.pop %v3511
  %v3513 = vmul.f32 %v2662, 1.442695
  %v3514 = vpow.pop %v3513
  %v3515 = vmul.f32 %v2663, 1.442695
  %v3516 = vpow.pop %v3515
  %v3517 = vmul.f32 %v2664, 1.442695
  %v3518 = vpow.pop %v3517
  %v3519 = vmul.f32 %v2665, 1.442695
  %v3520 = vpow.pop %v3519
  %v3521 = vmul.f32 %v2666, 1.442695
  %v3522 = vpow.pop %v3521
  %v3523 = vmul.f32 %v2667, 1.442695
  %v3524 = vpow.pop %v3523
  %v3525 = vmul.f32 %v2668, 1.442695
  %v3526 = vpow.pop %v3525
  %v3527 = vmul.f32 %v2669, 1.442695
  %v3528 = vpow.pop %v3527
  %v3529 = vmul.f32 %v2670, 1.442695
  %v3530 = vpow.pop %v3529
  %v3531 = vmul.f32 %v2671, 1.442695
  %v3532 = vpow.pop %v3531
  %v3533 = vmul.f32 %v2672, 1.442695
  %v3534 = vpow.pop %v3533
  %v3535 = vmul.f32 %v2673, 1.442695
  %v3536 = vpow.pop %v3535
  %v3537 = vmul.f32 %v2674, 1.442695
  %v3538 = vpow.pop %v3537
  %v3539 = vmul.f32 %v2675, 1.442695
  %v3540 = vpow.pop %v3539
  %v3541 = vmul.f32 %v2676, 1.442695
  %v3542 = vpow.pop %v3541
  %v3543 = vmul.f32 %v2677, 1.442695
  %v3544 = vpow.pop %v3543
  %v3545 = vmul.f32 %v2678, 1.442695
  %v3546 = vpow.pop %v3545
  %v3547 = vmul.f32 %v2679, 1.442695
  %v3548 = vpow.pop %v3547
  %v3549 = vmul.f32 %v2680, 1.442695
  %v3550 = vpow.pop %v3549
  %v3551 = vmul.f32 %v2681, 1.442695
  %v3552 = vpow.pop %v3551
  %v3553 = vmul.f32 %v2682, 1.442695
  %v3554 = vpow.pop %v3553
  %v3555 = vmul.f32 %v2683, 1.442695
  %v3556 = vpow.pop %v3555
  %v3557 = vmul.f32 %v2684, 1.442695
  %v3558 = vpow.pop %v3557
  %v3559 = vmul.f32 %v2685, 1.442695
  %v3560 = vpow.pop %v3559
  %v3561 = vmul.f32 %v2686, 1.442695
  %v3562 = vpow.pop %v3561
  %v3563 = vmul.f32 %v2687, 1.442695
  %v3564 = vpow.pop %v3563
  %v3565 = vmul.f32 %v2688, 1.442695
  %v3566 = vpow.pop %v3565
  %v3567 = vmul.f32 %v2689, 1.442695
  %v3568 = vpow.pop %v3567
  %v3569 = vmul.f32 %v2690, 1.442695
  %v3570 = vpow.pop %v3569
  %v3571 = vmul.f32 %v2691, 1.442695
  %v3572 = vpow.pop %v3571
  %v3573 = vmul.f32 %v2692, 1.442695
  %v3574 = vpow.pop %v3573
  %v3575 = vmul.f32 %v2693, 1.442695
  %v3576 = vpow.pop %v3575
  %v3577 = vmul.f32 %v2694, 1.442695
  %v3578 = vpow.pop %v3577
  %v3579 = vmul.f32 %v2695, 1.442695
  %v3580 = vpow.pop %v3579
  %v3581 = vmul.f32 %v2696, 1.442695
  %v3582 = vpow.pop %v3581
  %v3583 = vmul.f32 %v2697, 1.442695
  %v3584 = vpow.pop %v3583
  %v3585 = vmul.f32 %v2698, 1.442695
  %v3586 = vpow.pop %v3585
  %3587 = vrot.lane.b32.xlu0 %v1878, 110
  %v3588 = vpop.permute.xlu0 %3587
  %v3590 = vmul.f32 %v3452, %v3588
  %v3591 = vmul.f32 %v3454, %v3588
  %v3592 = vmul.f32 %v3456, %v3588
  %v3593 = vmul.f32 %v3458, %v3588
  %v3594 = vmul.f32 %v3460, %v3588
  %v3595 = vmul.f32 %v3462, %v3588
  %v3596 = vmul.f32 %v3464, %v3588
  %v3597 = vmul.f32 %v3466, %v3588
  %v3598 = vmul.f32 %v3468, %v3588
  %v3599 = vmul.f32 %v3470, %v3588
  %v3600 = vmul.f32 %v3472, %v3588
  %v3601 = vmul.f32 %v3474, %v3588
  %v3602 = vmul.f32 %v3476, %v3588
  %v3603 = vmul.f32 %v3478, %v3588
  %v3604 = vmul.f32 %v3480, %v3588
  %v3605 = vmul.f32 %v3482, %v3588
  %v3606 = vmul.f32 %v3484, %v3588
  %v3607 = vmul.f32 %v3486, %v3588
  %v3608 = vmul.f32 %v3488, %v3588
  %v3609 = vmul.f32 %v3490, %v3588
  %v3610 = vmul.f32 %v3492, %v3588
  %v3611 = vmul.f32 %v3494, %v3588
  %v3612 = vmul.f32 %v3496, %v3588
  %v3613 = vmul.f32 %v3498, %v3588
  %v3614 = vmul.f32 %v3500, %v3588
  %v3615 = vmul.f32 %v3502, %v3588
  %v3616 = vmul.f32 %v3504, %v3588
  %v3617 = vmul.f32 %v3506, %v3588
  %v3618 = vmul.f32 %v3508, %v3588
  %v3619 = vmul.f32 %v3510, %v3588
  %v3620 = vmul.f32 %v3512, %v3588
  %v3621 = vmul.f32 %v3514, %v3588
  %v3622 = vmul.f32 %v3516, %v3588
  %v3623 = vmul.f32 %v3518, %v3588
  %v3624 = vmul.f32 %v3520, %v3588
  %v3625 = vmul.f32 %v3522, %v3588
  %v3626 = vmul.f32 %v3524, %v3588
  %v3627 = vmul.f32 %v3526, %v3588
  %v3628 = vmul.f32 %v3528, %v3588
  %v3629 = vmul.f32 %v3530, %v3588
  %v3630 = vmul.f32 %v3532, %v3588
  %v3631 = vmul.f32 %v3534, %v3588
  %v3632 = vmul.f32 %v3536, %v3588
  %v3633 = vmul.f32 %v3538, %v3588
  %v3634 = vmul.f32 %v3540, %v3588
  %v3635 = vmul.f32 %v3542, %v3588
  %v3636 = vmul.f32 %v3544, %v3588
  %v3637 = vmul.f32 %v3546, %v3588
  %v3638 = vmul.f32 %v3548, %v3588
  %v3639 = vmul.f32 %v3550, %v3588
  %v3640 = vmul.f32 %v3552, %v3588
  %v3641 = vmul.f32 %v3554, %v3588
  %v3642 = vmul.f32 %v3556, %v3588
  %v3643 = vmul.f32 %v3558, %v3588
  %v3644 = vmul.f32 %v3560, %v3588
  %v3645 = vmul.f32 %v3562, %v3588
  %v3646 = vmul.f32 %v3564, %v3588
  %v3647 = vmul.f32 %v3566, %v3588
  %v3648 = vmul.f32 %v3568, %v3588
  %v3649 = vmul.f32 %v3570, %v3588
  %v3650 = vmul.f32 %v3572, %v3588
  %v3651 = vmul.f32 %v3574, %v3588
  %v3652 = vmul.f32 %v3576, %v3588
  %v3653 = vmul.f32 %v3578, %v3588
  %v3654 = vmul.f32 %v3580, %v3588
  %v3655 = vmul.f32 %v3582, %v3588
  %v3656 = vmul.f32 %v3584, %v3588
  %v3657 = vmul.f32 %v3586, %v3588
  %v3658 = vmul.f32 %v3590, 0.5
  %v3659 = vmul.f32 %v3591, 0.5
  %v3660 = vmul.f32 %v3592, 0.5
  %v3661 = vmul.f32 %v3593, 0.5
  %v3662 = vmul.f32 %v3594, 0.5
  %v3663 = vmul.f32 %v3595, 0.5
  %v3664 = vmul.f32 %v3596, 0.5
  %v3665 = vmul.f32 %v3597, 0.5
  %v3666 = vmul.f32 %v3598, 0.5
  %v3667 = vmul.f32 %v3599, 0.5
  %v3668 = vmul.f32 %v3600, 0.5
  %v3669 = vmul.f32 %v3601, 0.5
  %v3670 = vmul.f32 %v3602, 0.5
  %v3671 = vmul.f32 %v3603, 0.5
  %v3672 = vmul.f32 %v3604, 0.5
  %v3673 = vmul.f32 %v3605, 0.5
  %v3674 = vmul.f32 %v3606, 0.5
  %v3675 = vmul.f32 %v3607, 0.5
  %v3676 = vmul.f32 %v3608, 0.5
  %v3677 = vmul.f32 %v3609, 0.5
  %v3678 = vmul.f32 %v3610, 0.5
  %v3679 = vmul.f32 %v3611, 0.5
  %v3680 = vmul.f32 %v3612, 0.5
  %v3681 = vmul.f32 %v3613, 0.5
  %v3682 = vmul.f32 %v3614, 0.5
  %v3683 = vmul.f32 %v3615, 0.5
  %v3684 = vmul.f32 %v3616, 0.5
  %v3685 = vmul.f32 %v3617, 0.5
  %v3686 = vmul.f32 %v3618, 0.5
  %v3687 = vmul.f32 %v3619, 0.5
  %v3688 = vmul.f32 %v3620, 0.5
  %v3689 = vmul.f32 %v3621, 0.5
  %v3690 = vmul.f32 %v3622, 0.5
  %v3691 = vmul.f32 %v3623, 0.5
  %v3692 = vmul.f32 %v3624, 0.5
  %v3693 = vmul.f32 %v3625, 0.5
  %v3694 = vmul.f32 %v3626, 0.5
  %v3695 = vmul.f32 %v3627, 0.5
  %v3696 = vmul.f32 %v3628, 0.5
  %v3697 = vmul.f32 %v3629, 0.5
  %v3698 = vmul.f32 %v3630, 0.5
  %v3699 = vmul.f32 %v3631, 0.5
  %v3700 = vmul.f32 %v3632, 0.5
  %v3701 = vmul.f32 %v3633, 0.5
  %v3702 = vmul.f32 %v3634, 0.5
  %v3703 = vmul.f32 %v3635, 0.5
  %v3704 = vmul.f32 %v3636, 0.5
  %v3705 = vmul.f32 %v3637, 0.5
  %v3706 = vmul.f32 %v3638, 0.5
  %v3707 = vmul.f32 %v3639, 0.5
  %v3708 = vmul.f32 %v3640, 0.5
  %v3709 = vmul.f32 %v3641, 0.5
  %v3710 = vmul.f32 %v3642, 0.5
  %v3711 = vmul.f32 %v3643, 0.5
  %v3712 = vmul.f32 %v3644, 0.5
  %v3713 = vmul.f32 %v3645, 0.5
  %v3714 = vmul.f32 %v3646, 0.5
  %v3715 = vmul.f32 %v3647, 0.5
  %v3716 = vmul.f32 %v3648, 0.5
  %v3717 = vmul.f32 %v3649, 0.5
  %v3718 = vmul.f32 %v3650, 0.5
  %v3719 = vmul.f32 %v3651, 0.5
  %v3720 = vmul.f32 %v3652, 0.5
  %v3721 = vmul.f32 %v3653, 0.5
  %v3722 = vmul.f32 %v3654, 0.5
  %v3723 = vmul.f32 %v3655, 0.5
  %v3724 = vmul.f32 %v3656, 0.5
  %v3725 = vmul.f32 %v3657, 0.5
  %3794 = vrot.lane.b32.xlu0 %v3658, 126
  %v3795 = vpop.permute.xlu0 %3794
  %3796 = vrot.lane.b32.xlu0 %v3659, 126
  %v3797 = vpop.permute.xlu0 %3796
  %3798 = vrot.lane.b32.xlu0 %v3660, 126
  %v3799 = vpop.permute.xlu0 %3798
  %3800 = vrot.lane.b32.xlu0 %v3661, 126
  %v3801 = vpop.permute.xlu0 %3800
  %3802 = vrot.lane.b32.xlu0 %v3662, 126
  %v3803 = vpop.permute.xlu0 %3802
  %3804 = vrot.lane.b32.xlu0 %v3663, 126
  %v3805 = vpop.permute.xlu0 %3804
  %3806 = vrot.lane.b32.xlu0 %v3664, 126
  %v3807 = vpop.permute.xlu0 %3806
  %3808 = vrot.lane.b32.xlu0 %v3665, 126
  %v3809 = vpop.permute.xlu0 %3808
  %3810 = vrot.lane.b32.xlu0 %v3666, 126
  %v3811 = vpop.permute.xlu0 %3810
  %3812 = vrot.lane.b32.xlu0 %v3667, 126
  %v3813 = vpop.permute.xlu0 %3812
  %3814 = vrot.lane.b32.xlu0 %v3668, 126
  %v3815 = vpop.permute.xlu0 %3814
  %3816 = vrot.lane.b32.xlu0 %v3669, 126
  %v3817 = vpop.permute.xlu0 %3816
  %3818 = vrot.lane.b32.xlu0 %v3670, 126
  %v3819 = vpop.permute.xlu0 %3818
  %3820 = vrot.lane.b32.xlu0 %v3671, 126
  %v3821 = vpop.permute.xlu0 %3820
  %3822 = vrot.lane.b32.xlu0 %v3672, 126
  %v3823 = vpop.permute.xlu0 %3822
  %3824 = vrot.lane.b32.xlu0 %v3673, 126
  %v3825 = vpop.permute.xlu0 %3824
  %3826 = vrot.lane.b32.xlu0 %v3674, 126
  %v3827 = vpop.permute.xlu0 %3826
  %3828 = vrot.lane.b32.xlu0 %v3675, 126
  %v3829 = vpop.permute.xlu0 %3828
  %3830 = vrot.lane.b32.xlu0 %v3676, 126
  %v3831 = vpop.permute.xlu0 %3830
  %3832 = vrot.lane.b32.xlu0 %v3677, 126
  %v3833 = vpop.permute.xlu0 %3832
  %3834 = vrot.lane.b32.xlu0 %v3678, 126
  %v3835 = vpop.permute.xlu0 %3834
  %3836 = vrot.lane.b32.xlu0 %v3679, 126
  %v3837 = vpop.permute.xlu0 %3836
  %3838 = vrot.lane.b32.xlu0 %v3680, 126
  %v3839 = vpop.permute.xlu0 %3838
  %3840 = vrot.lane.b32.xlu0 %v3681, 126
  %v3841 = vpop.permute.xlu0 %3840
  %3842 = vrot.lane.b32.xlu0 %v3682, 126
  %v3843 = vpop.permute.xlu0 %3842
  %3844 = vrot.lane.b32.xlu0 %v3683, 126
  %v3845 = vpop.permute.xlu0 %3844
  %3846 = vrot.lane.b32.xlu0 %v3684, 126
  %v3847 = vpop.permute.xlu0 %3846
  %3848 = vrot.lane.b32.xlu0 %v3685, 126
  %v3849 = vpop.permute.xlu0 %3848
  %3850 = vrot.lane.b32.xlu0 %v3686, 126
  %v3851 = vpop.permute.xlu0 %3850
  %3852 = vrot.lane.b32.xlu0 %v3687, 126
  %v3853 = vpop.permute.xlu0 %3852
  %3854 = vrot.lane.b32.xlu0 %v3688, 126
  %v3855 = vpop.permute.xlu0 %3854
  %3856 = vrot.lane.b32.xlu0 %v3689, 126
  %v3857 = vpop.permute.xlu0 %3856
  %3858 = vrot.lane.b32.xlu0 %v3690, 126
  %v3859 = vpop.permute.xlu0 %3858
  %3860 = vrot.lane.b32.xlu0 %v3691, 126
  %v3861 = vpop.permute.xlu0 %3860
  %3862 = vrot.lane.b32.xlu0 %v3692, 126
  %v3863 = vpop.permute.xlu0 %3862
  %3864 = vrot.lane.b32.xlu0 %v3693, 126
  %v3865 = vpop.permute.xlu0 %3864
  %3866 = vrot.lane.b32.xlu0 %v3694, 126
  %v3867 = vpop.permute.xlu0 %3866
  %3868 = vrot.lane.b32.xlu0 %v3695, 126
  %v3869 = vpop.permute.xlu0 %3868
  %3870 = vrot.lane.b32.xlu0 %v3696, 126
  %v3871 = vpop.permute.xlu0 %3870
  %3872 = vrot.lane.b32.xlu0 %v3697, 126
  %v3873 = vpop.permute.xlu0 %3872
  %3874 = vrot.lane.b32.xlu0 %v3698, 126
  %v3875 = vpop.permute.xlu0 %3874
  %3876 = vrot.lane.b32.xlu0 %v3699, 126
  %v3877 = vpop.permute.xlu0 %3876
  %3878 = vrot.lane.b32.xlu0 %v3700, 126
  %v3879 = vpop.permute.xlu0 %3878
  %3880 = vrot.lane.b32.xlu0 %v3701, 126
  %v3881 = vpop.permute.xlu0 %3880
  %3882 = vrot.lane.b32.xlu0 %v3702, 126
  %v3883 = vpop.permute.xlu0 %3882
  %3884 = vrot.lane.b32.xlu0 %v3703, 126
  %v3885 = vpop.permute.xlu0 %3884
  %3886 = vrot.lane.b32.xlu0 %v3704, 126
  %v3887 = vpop.permute.xlu0 %3886
  %3888 = vrot.lane.b32.xlu0 %v3705, 126
  %v3889 = vpop.permute.xlu0 %3888
  %3890 = vrot.lane.b32.xlu0 %v3706, 126
  %v3891 = vpop.permute.xlu0 %3890
  %3892 = vrot.lane.b32.xlu0 %v3707, 126
  %v3893 = vpop.permute.xlu0 %3892
  %3894 = vrot.lane.b32.xlu0 %v3708, 126
  %v3895 = vpop.permute.xlu0 %3894
  %3896 = vrot.lane.b32.xlu0 %v3709, 126
  %v3897 = vpop.permute.xlu0 %3896
  %3898 = vrot.lane.b32.xlu0 %v3710, 126
  %v3899 = vpop.permute.xlu0 %3898
  %3900 = vrot.lane.b32.xlu0 %v3711, 126
  %v3901 = vpop.permute.xlu0 %3900
  %3902 = vrot.lane.b32.xlu0 %v3712, 126
  %v3903 = vpop.permute.xlu0 %3902
  %3904 = vrot.lane.b32.xlu0 %v3713, 126
  %v3905 = vpop.permute.xlu0 %3904
  %3906 = vrot.lane.b32.xlu0 %v3714, 126
  %v3907 = vpop.permute.xlu0 %3906
  %3908 = vrot.lane.b32.xlu0 %v3715, 126
  %v3909 = vpop.permute.xlu0 %3908
  %3910 = vrot.lane.b32.xlu0 %v3716, 126
  %v3911 = vpop.permute.xlu0 %3910
  %3912 = vrot.lane.b32.xlu0 %v3717, 126
  %v3913 = vpop.permute.xlu0 %3912
  %3914 = vrot.lane.b32.xlu0 %v3718, 126
  %v3915 = vpop.permute.xlu0 %3914
  %3916 = vrot.lane.b32.xlu0 %v3719, 126
  %v3917 = vpop.permute.xlu0 %3916
  %3918 = vrot.lane.b32.xlu0 %v3720, 126
  %v3919 = vpop.permute.xlu0 %3918
  %3920 = vrot.lane.b32.xlu0 %v3721, 126
  %v3921 = vpop.permute.xlu0 %3920
  %3922 = vrot.lane.b32.xlu0 %v3722, 126
  %v3923 = vpop.permute.xlu0 %3922
  %3924 = vrot.lane.b32.xlu0 %v3723, 126
  %v3925 = vpop.permute.xlu0 %3924
  %3926 = vrot.lane.b32.xlu0 %v3724, 126
  %v3927 = vpop.permute.xlu0 %3926
  %3928 = vrot.lane.b32.xlu0 %v3725, 126
  %v3929 = vpop.permute.xlu0 %3928
  %v3998 = vsub.f32 %v3383, %v3795
  %v3999 = vsub.f32 %v3384, %v3797
  %v4000 = vsub.f32 %v3385, %v3799
  %v4001 = vsub.f32 %v3386, %v3801
  %v4002 = vsub.f32 %v3387, %v3803
  %v4003 = vsub.f32 %v3388, %v3805
  %v4004 = vsub.f32 %v3389, %v3807
  %v4005 = vsub.f32 %v3390, %v3809
  %v4006 = vsub.f32 %v3391, %v3811
  %v4007 = vsub.f32 %v3392, %v3813
  %v4008 = vsub.f32 %v3393, %v3815
  %v4009 = vsub.f32 %v3394, %v3817
  %v4010 = vsub.f32 %v3395, %v3819
  %v4011 = vsub.f32 %v3396, %v3821
  %v4012 = vsub.f32 %v3397, %v3823
  %v4013 = vsub.f32 %v3398, %v3825
  %v4014 = vsub.f32 %v3399, %v3827
  %v4015 = vsub.f32 %v3400, %v3829
  %v4016 = vsub.f32 %v3401, %v3831
  %v4017 = vsub.f32 %v3402, %v3833
  %v4018 = vsub.f32 %v3403, %v3835
  %v4019 = vsub.f32 %v3404, %v3837
  %v4020 = vsub.f32 %v3405, %v3839
  %v4021 = vsub.f32 %v3406, %v3841
  %v4022 = vsub.f32 %v3407, %v3843
  %v4023 = vsub.f32 %v3408, %v3845
  %v4024 = vsub.f32 %v3409, %v3847
  %v4025 = vsub.f32 %v3410, %v3849
  %v4026 = vsub.f32 %v3411, %v3851
  %v4027 = vsub.f32 %v3412, %v3853
  %v4028 = vsub.f32 %v3413, %v3855
  %v4029 = vsub.f32 %v3414, %v3857
  %v4030 = vsub.f32 %v3415, %v3859
  %v4031 = vsub.f32 %v3416, %v3861
  %v4032 = vsub.f32 %v3417, %v3863
  %v4033 = vsub.f32 %v3418, %v3865
  %v4034 = vsub.f32 %v3419, %v3867
  %v4035 = vsub.f32 %v3420, %v3869
  %v4036 = vsub.f32 %v3421, %v3871
  %v4037 = vsub.f32 %v3422, %v3873
  %v4038 = vsub.f32 %v3423, %v3875
  %v4039 = vsub.f32 %v3424, %v3877
  %v4040 = vsub.f32 %v3425, %v3879
  %v4041 = vsub.f32 %v3426, %v3881
  %v4042 = vsub.f32 %v3427, %v3883
  %v4043 = vsub.f32 %v3428, %v3885
  %v4044 = vsub.f32 %v3429, %v3887
  %v4045 = vsub.f32 %v3430, %v3889
  %v4046 = vsub.f32 %v3431, %v3891
  %v4047 = vsub.f32 %v3432, %v3893
  %v4048 = vsub.f32 %v3433, %v3895
  %v4049 = vsub.f32 %v3434, %v3897
  %v4050 = vsub.f32 %v3435, %v3899
  %v4051 = vsub.f32 %v3436, %v3901
  %v4052 = vsub.f32 %v3437, %v3903
  %v4053 = vsub.f32 %v3438, %v3905
  %v4054 = vsub.f32 %v3439, %v3907
  %v4055 = vsub.f32 %v3440, %v3909
  %v4056 = vsub.f32 %v3441, %v3911
  %v4057 = vsub.f32 %v3442, %v3913
  %v4058 = vsub.f32 %v3443, %v3915
  %v4059 = vsub.f32 %v3444, %v3917
  %v4060 = vsub.f32 %v3445, %v3919
  %v4061 = vsub.f32 %v3446, %v3921
  %v4062 = vsub.f32 %v3447, %v3923
  %v4063 = vsub.f32 %v3448, %v3925
  %v4064 = vsub.f32 %v3449, %v3927
  %v4065 = vsub.f32 %v3450, %v3929
  %v4066 = vadd.f32 %v3383, %v3795
  %v4067 = vadd.f32 %v3384, %v3797
  %v4068 = vadd.f32 %v3385, %v3799
  %v4069 = vadd.f32 %v3386, %v3801
  %v4070 = vadd.f32 %v3387, %v3803
  %v4071 = vadd.f32 %v3388, %v3805
  %v4072 = vadd.f32 %v3389, %v3807
  %v4073 = vadd.f32 %v3390, %v3809
  %v4074 = vadd.f32 %v3391, %v3811
  %v4075 = vadd.f32 %v3392, %v3813
  %v4076 = vadd.f32 %v3393, %v3815
  %v4077 = vadd.f32 %v3394, %v3817
  %v4078 = vadd.f32 %v3395, %v3819
  %v4079 = vadd.f32 %v3396, %v3821
  %v4080 = vadd.f32 %v3397, %v3823
  %v4081 = vadd.f32 %v3398, %v3825
  %v4082 = vadd.f32 %v3399, %v3827
  %v4083 = vadd.f32 %v3400, %v3829
  %v4084 = vadd.f32 %v3401, %v3831
  %v4085 = vadd.f32 %v3402, %v3833
  %v4086 = vadd.f32 %v3403, %v3835
  %v4087 = vadd.f32 %v3404, %v3837
  %v4088 = vadd.f32 %v3405, %v3839
  %v4089 = vadd.f32 %v3406, %v3841
  %v4090 = vadd.f32 %v3407, %v3843
  %v4091 = vadd.f32 %v3408, %v3845
  %v4092 = vadd.f32 %v3409, %v3847
  %v4093 = vadd.f32 %v3410, %v3849
  %v4094 = vadd.f32 %v3411, %v3851
  %v4095 = vadd.f32 %v3412, %v3853
  %v4096 = vadd.f32 %v3413, %v3855
  %v4097 = vadd.f32 %v3414, %v3857
  %v4098 = vadd.f32 %v3415, %v3859
  %v4099 = vadd.f32 %v3416, %v3861
  %v4100 = vadd.f32 %v3417, %v3863
  %v4101 = vadd.f32 %v3418, %v3865
  %v4102 = vadd.f32 %v3419, %v3867
  %v4103 = vadd.f32 %v3420, %v3869
  %v4104 = vadd.f32 %v3421, %v3871
  %v4105 = vadd.f32 %v3422, %v3873
  %v4106 = vadd.f32 %v3423, %v3875
  %v4107 = vadd.f32 %v3424, %v3877
  %v4108 = vadd.f32 %v3425, %v3879
  %v4109 = vadd.f32 %v3426, %v3881
  %v4110 = vadd.f32 %v3427, %v3883
  %v4111 = vadd.f32 %v3428, %v3885
  %v4112 = vadd.f32 %v3429, %v3887
  %v4113 = vadd.f32 %v3430, %v3889
  %v4114 = vadd.f32 %v3431, %v3891
  %v4115 = vadd.f32 %v3432, %v3893
  %v4116 = vadd.f32 %v3433, %v3895
  %v4117 = vadd.f32 %v3434, %v3897
  %v4118 = vadd.f32 %v3435, %v3899
  %v4119 = vadd.f32 %v3436, %v3901
  %v4120 = vadd.f32 %v3437, %v3903
  %v4121 = vadd.f32 %v3438, %v3905
  %v4122 = vadd.f32 %v3439, %v3907
  %v4123 = vadd.f32 %v3440, %v3909
  %v4124 = vadd.f32 %v3441, %v3911
  %v4125 = vadd.f32 %v3442, %v3913
  %v4126 = vadd.f32 %v3443, %v3915
  %v4127 = vadd.f32 %v3444, %v3917
  %v4128 = vadd.f32 %v3445, %v3919
  %v4129 = vadd.f32 %v3446, %v3921
  %v4130 = vadd.f32 %v3447, %v3923
  %v4131 = vadd.f32 %v3448, %v3925
  %v4132 = vadd.f32 %v3449, %v3927
  %v4133 = vadd.f32 %v3450, %v3929
  %4134 = vst [vmem:[%s4] sm:$0xff] 0.0
  %4135 = vst [vmem:[%s4 + $0x8] sm:$0xff] 0.0
  %4136 = vst [vmem:[%s4 + $0x10] sm:$0xff] 0.0
  %4137 = vst [vmem:[%s4 + $0x18] sm:$0xff] 0.0
  %4138 = vst [vmem:[%s4 + $0x20] sm:$0xff] 0.0
  %4139 = vst [vmem:[%s4 + $0x28] sm:$0xff] 0.0
  %4140 = vst [vmem:[%s4 + $0x30] sm:$0xff] 0.0
  %4141 = vst [vmem:[%s4 + $0x38] sm:$0xff] 0.0
  %4142 = vst [vmem:[%s4 + $0x40] sm:$0xff] 0.0
  %4143 = vst [vmem:[%s4 + $0x48] sm:$0xff] 0.0
  %4144 = vst [vmem:[%s4 + $0x50] sm:$0xff] 0.0
  %4145 = vst [vmem:[%s4 + $0x58] sm:$0xff] 0.0
  %4146 = vst [vmem:[%s4 + $0x60] sm:$0xff] 0.0
  %4147 = vst [vmem:[%s4 + $0x68] sm:$0xff] 0.0
  %4148 = vst [vmem:[%s4 + $0x70] sm:$0xff] 0.0
  %4149 = vst [vmem:[%s4 + $0x78] sm:$0xff] 0.0
  %4150 = vst [vmem:[%s4 + $0x80] sm:$0xff] 0.0
  %4151 = vst [vmem:[%s4 + $0x88] sm:$0xff] 0.0
  %4152 = vst [vmem:[%s4 + $0x90] sm:$0xff] 0.0
  %4153 = vst [vmem:[%s4 + $0x98] sm:$0xff] 0.0
  %4154 = vst [vmem:[%s4 + $0xa0] sm:$0xff] 0.0
  %4155 = vst [vmem:[%s4 + $0xa8] sm:$0xff] 0.0
  %4156 = vst [vmem:[%s4 + $0xb0] sm:$0xff] 0.0
  %4157 = vst [vmem:[%s4 + $0xb8] sm:$0xff] 0.0
  %4158 = vst [vmem:[%s4 + $0xc0] sm:$0xff] 0.0
  %4159 = vst [vmem:[%s4 + $0xc8] sm:$0xff] 0.0
  %4160 = vst [vmem:[%s4 + $0xd0] sm:$0xff] 0.0
  %4161 = vst [vmem:[%s4 + $0xd8] sm:$0xff] 0.0
  %4162 = vst [vmem:[%s4 + $0xe0] sm:$0xff] 0.0
  %4163 = vst [vmem:[%s4 + $0xe8] sm:$0xff] 0.0
  %4164 = vst [vmem:[%s4 + $0xf0] sm:$0xff] 0.0
  %4165 = vst [vmem:[%s4 + $0xf8] sm:$0xff] 0.0
  %4166 = vst [vmem:[%s4 + $0x100] sm:$0xff] 0.0
  %4167 = vst [vmem:[%s4 + $0x108] sm:$0xff] 0.0
  %4168 = vst [vmem:[%s4 + $0x110] sm:$0xff] 0.0
  %4169 = vst [vmem:[%s4 + $0x118] sm:$0xff] 0.0
  %4170 = vst [vmem:[%s4 + $0x120] sm:$0xff] 0.0
  %4171 = vst [vmem:[%s4 + $0x128] sm:$0xff] 0.0
  %4172 = vst [vmem:[%s4 + $0x130] sm:$0xff] 0.0
  %4173 = vst [vmem:[%s4 + $0x138] sm:$0xff] 0.0
  %4174 = vst [vmem:[%s4 + $0x140] sm:$0xff] 0.0
  %4175 = vst [vmem:[%s4 + $0x148] sm:$0xff] 0.0
  %4176 = vst [vmem:[%s4 + $0x150] sm:$0xff] 0.0
  %4177 = vst [vmem:[%s4 + $0x158] sm:$0xff] 0.0
  %4178 = vst [vmem:[%s4 + $0x160] sm:$0xff] 0.0
  %4179 = vst [vmem:[%s4 + $0x168] sm:$0xff] 0.0
  %4180 = vst [vmem:[%s4 + $0x170] sm:$0xff] 0.0
  %4181 = vst [vmem:[%s4 + $0x178] sm:$0xff] 0.0
  %4182 = vst [vmem:[%s4 + $0x180] sm:$0xff] 0.0
  %4183 = vst [vmem:[%s4 + $0x188] sm:$0xff] 0.0
  %4184 = vst [vmem:[%s4 + $0x190] sm:$0xff] 0.0
  %4185 = vst [vmem:[%s4 + $0x198] sm:$0xff] 0.0
  %4186 = vst [vmem:[%s4 + $0x1a0] sm:$0xff] 0.0
  %4187 = vst [vmem:[%s4 + $0x1a8] sm:$0xff] 0.0
  %4188 = vst [vmem:[%s4 + $0x1b0] sm:$0xff] 0.0
  %4189 = vst [vmem:[%s4 + $0x1b8] sm:$0xff] 0.0
  %4190 = vst [vmem:[%s4 + $0x1c0] sm:$0xff] 0.0
  %4191 = vst [vmem:[%s4 + $0x1c8] sm:$0xff] 0.0
  %4192 = vst [vmem:[%s4 + $0x1d0] sm:$0xff] 0.0
  %4193 = vst [vmem:[%s4 + $0x1d8] sm:$0xff] 0.0
  %4194 = vst [vmem:[%s4 + $0x1e0] sm:$0xff] 0.0
  %4195 = vst [vmem:[%s4 + $0x1e8] sm:$0xff] 0.0
  %4196 = vst [vmem:[%s4 + $0x1f0] sm:$0xff] 0.0
  %4197 = vst [vmem:[%s4 + $0x1f8] sm:$0xff] 0.0
  %4198 = vst [vmem:[%s4 + $0x200] sm:$0xff] 0.0
  %4199 = vst [vmem:[%s4 + $0x208] sm:$0xff] 0.0
  %4200 = vst [vmem:[%s4 + $0x210] sm:$0xff] 0.0
  %4201 = vst [vmem:[%s4 + $0x218] sm:$0xff] 0.0
  %vm4202 = vcmask 15360
  %4203 = vst.msk [vmem:[%s4] sm:$0xff] %vm4202, %v2293
  %4204 = vst.msk [vmem:[%s4 + $0x8] sm:$0xff] %vm4202, %v2298
  %4205 = vst.msk [vmem:[%s4 + $0x10] sm:$0xff] %vm4202, %v2303
  %4206 = vst.msk [vmem:[%s4 + $0x18] sm:$0xff] %vm4202, %v2308
  %4207 = vst.msk [vmem:[%s4 + $0x20] sm:$0xff] %vm4202, %v2313
  %4208 = vst.msk [vmem:[%s4 + $0x28] sm:$0xff] %vm4202, %v2318
  %4209 = vst.msk [vmem:[%s4 + $0x30] sm:$0xff] %vm4202, %v2323
  %4210 = vst.msk [vmem:[%s4 + $0x38] sm:$0xff] %vm4202, %v2328
  %4211 = vst.msk [vmem:[%s4 + $0x40] sm:$0xff] %vm4202, %v2333
  %4212 = vst.msk [vmem:[%s4 + $0x48] sm:$0xff] %vm4202, %v2338
  %4213 = vst.msk [vmem:[%s4 + $0x50] sm:$0xff] %vm4202, %v2343
  %4214 = vst.msk [vmem:[%s4 + $0x58] sm:$0xff] %vm4202, %v2348
  %4215 = vst.msk [vmem:[%s4 + $0x60] sm:$0xff] %vm4202, %v2353
  %4216 = vst.msk [vmem:[%s4 + $0x68] sm:$0xff] %vm4202, %v2358
  %4217 = vst.msk [vmem:[%s4 + $0x70] sm:$0xff] %vm4202, %v2363
  %4218 = vst.msk [vmem:[%s4 + $0x78] sm:$0xff] %vm4202, %v2368
  %4219 = vst.msk [vmem:[%s4 + $0x80] sm:$0xff] %vm4202, %v2373
  %4220 = vst.msk [vmem:[%s4 + $0x88] sm:$0xff] %vm4202, %v2378
  %4221 = vst.msk [vmem:[%s4 + $0x90] sm:$0xff] %vm4202, %v2383
  %4222 = vst.msk [vmem:[%s4 + $0x98] sm:$0xff] %vm4202, %v2388
  %4223 = vst.msk [vmem:[%s4 + $0xa0] sm:$0xff] %vm4202, %v2393
  %4224 = vst.msk [vmem:[%s4 + $0xa8] sm:$0xff] %vm4202, %v2398
  %4225 = vst.msk [vmem:[%s4 + $0xb0] sm:$0xff] %vm4202, %v2403
  %4226 = vst.msk [vmem:[%s4 + $0xb8] sm:$0xff] %vm4202, %v2408
  %4227 = vst.msk [vmem:[%s4 + $0xc0] sm:$0xff] %vm4202, %v2413
  %4228 = vst.msk [vmem:[%s4 + $0xc8] sm:$0xff] %vm4202, %v2418
  %4229 = vst.msk [vmem:[%s4 + $0xd0] sm:$0xff] %vm4202, %v2423
  %4230 = vst.msk [vmem:[%s4 + $0xd8] sm:$0xff] %vm4202, %v2428
  %4231 = vst.msk [vmem:[%s4 + $0xe0] sm:$0xff] %vm4202, %v2433
  %4232 = vst.msk [vmem:[%s4 + $0xe8] sm:$0xff] %vm4202, %v2438
  %4233 = vst.msk [vmem:[%s4 + $0xf0] sm:$0xff] %vm4202, %v2443
  %4234 = vst.msk [vmem:[%s4 + $0xf8] sm:$0xff] %vm4202, %v2448
  %4235 = vst.msk [vmem:[%s4 + $0x100] sm:$0xff] %vm4202, %v2453
  %4236 = vst.msk [vmem:[%s4 + $0x108] sm:$0xff] %vm4202, %v2458
  %4237 = vst.msk [vmem:[%s4 + $0x110] sm:$0xff] %vm4202, %v2463
  %4238 = vst.msk [vmem:[%s4 + $0x118] sm:$0xff] %vm4202, %v2468
  %4239 = vst.msk [vmem:[%s4 + $0x120] sm:$0xff] %vm4202, %v2473
  %4240 = vst.msk [vmem:[%s4 + $0x128] sm:$0xff] %vm4202, %v2478
  %4241 = vst.msk [vmem:[%s4 + $0x130] sm:$0xff] %vm4202, %v2483
  %4242 = vst.msk [vmem:[%s4 + $0x138] sm:$0xff] %vm4202, %v2488
  %4243 = vst.msk [vmem:[%s4 + $0x140] sm:$0xff] %vm4202, %v2493
  %4244 = vst.msk [vmem:[%s4 + $0x148] sm:$0xff] %vm4202, %v2498
  %4245 = vst.msk [vmem:[%s4 + $0x150] sm:$0xff] %vm4202, %v2503
  %4246 = vst.msk [vmem:[%s4 + $0x158] sm:$0xff] %vm4202, %v2508
  %4247 = vst.msk [vmem:[%s4 + $0x160] sm:$0xff] %vm4202, %v2513
  %4248 = vst.msk [vmem:[%s4 + $0x168] sm:$0xff] %vm4202, %v2518
  %4249 = vst.msk [vmem:[%s4 + $0x170] sm:$0xff] %vm4202, %v2523
  %4250 = vst.msk [vmem:[%s4 + $0x178] sm:$0xff] %vm4202, %v2528
  %4251 = vst.msk [vmem:[%s4 + $0x180] sm:$0xff] %vm4202, %v2533
  %4252 = vst.msk [vmem:[%s4 + $0x188] sm:$0xff] %vm4202, %v2538
  %4253 = vst.msk [vmem:[%s4 + $0x190] sm:$0xff] %vm4202, %v2543
  %4254 = vst.msk [vmem:[%s4 + $0x198] sm:$0xff] %vm4202, %v2548
  %4255 = vst.msk [vmem:[%s4 + $0x1a0] sm:$0xff] %vm4202, %v2553
  %4256 = vst.msk [vmem:[%s4 + $0x1a8] sm:$0xff] %vm4202, %v2558
  %4257 = vst.msk [vmem:[%s4 + $0x1b0] sm:$0xff] %vm4202, %v2563
  %4258 = vst.msk [vmem:[%s4 + $0x1b8] sm:$0xff] %vm4202, %v2568
  %4259 = vst.msk [vmem:[%s4 + $0x1c0] sm:$0xff] %vm4202, %v2573
  %4260 = vst.msk [vmem:[%s4 + $0x1c8] sm:$0xff] %vm4202, %v2578
  %4261 = vst.msk [vmem:[%s4 + $0x1d0] sm:$0xff] %vm4202, %v2583
  %4262 = vst.msk [vmem:[%s4 + $0x1d8] sm:$0xff] %vm4202, %v2588
  %4263 = vst.msk [vmem:[%s4 + $0x1e0] sm:$0xff] %vm4202, %v2593
  %4264 = vst.msk [vmem:[%s4 + $0x1e8] sm:$0xff] %vm4202, %v2598
  %4265 = vst.msk [vmem:[%s4 + $0x1f0] sm:$0xff] %vm4202, %v2603
  %4266 = vst.msk [vmem:[%s4 + $0x1f8] sm:$0xff] %vm4202, %v2608
  %4267 = vst.msk [vmem:[%s4 + $0x200] sm:$0xff] %vm4202, %v2613
  %4268 = vst.msk [vmem:[%s4 + $0x208] sm:$0xff] %vm4202, %v2618
  %4269 = vst.msk [vmem:[%s4 + $0x210] sm:$0xff] %vm4202, %v2623
  %4270 = vst.msk [vmem:[%s4 + $0x218] sm:$0xff] %vm4202, %v2628
  %v4271 = vxor.u32 %v2293, 2147483648
  %v4272 = vxor.u32 %v2298, 2147483648
  %v4273 = vxor.u32 %v2303, 2147483648
  %v4274 = vxor.u32 %v2308, 2147483648
  %v4275 = vxor.u32 %v2313, 2147483648
  %v4276 = vxor.u32 %v2318, 2147483648
  %v4277 = vxor.u32 %v2323, 2147483648
  %v4278 = vxor.u32 %v2328, 2147483648
  %v4279 = vxor.u32 %v2333, 2147483648
  %v4280 = vxor.u32 %v2338, 2147483648
  %v4281 = vxor.u32 %v2343, 2147483648
  %v4282 = vxor.u32 %v2348, 2147483648
  %v4283 = vxor.u32 %v2353, 2147483648
  %v4284 = vxor.u32 %v2358, 2147483648
  %v4285 = vxor.u32 %v2363, 2147483648
  %v4286 = vxor.u32 %v2368, 2147483648
  %v4287 = vxor.u32 %v2373, 2147483648
  %v4288 = vxor.u32 %v2378, 2147483648
  %v4289 = vxor.u32 %v2383, 2147483648
  %v4290 = vxor.u32 %v2388, 2147483648
  %v4291 = vxor.u32 %v2393, 2147483648
  %v4292 = vxor.u32 %v2398, 2147483648
  %v4293 = vxor.u32 %v2403, 2147483648
  %v4294 = vxor.u32 %v2408, 2147483648
  %v4295 = vxor.u32 %v2413, 2147483648
  %v4296 = vxor.u32 %v2418, 2147483648
  %v4297 = vxor.u32 %v2423, 2147483648
  %v4298 = vxor.u32 %v2428, 2147483648
  %v4299 = vxor.u32 %v2433, 2147483648
  %v4300 = vxor.u32 %v2438, 2147483648
  %v4301 = vxor.u32 %v2443, 2147483648
  %v4302 = vxor.u32 %v2448, 2147483648
  %v4303 = vxor.u32 %v2453, 2147483648
  %v4304 = vxor.u32 %v2458, 2147483648
  %v4305 = vxor.u32 %v2463, 2147483648
  %v4306 = vxor.u32 %v2468, 2147483648
  %v4307 = vxor.u32 %v2473, 2147483648
  %v4308 = vxor.u32 %v2478, 2147483648
  %v4309 = vxor.u32 %v2483, 2147483648
  %v4310 = vxor.u32 %v2488, 2147483648
  %v4311 = vxor.u32 %v2493, 2147483648
  %v4312 = vxor.u32 %v2498, 2147483648
  %v4313 = vxor.u32 %v2503, 2147483648
  %v4314 = vxor.u32 %v2508, 2147483648
  %v4315 = vxor.u32 %v2513, 2147483648
  %v4316 = vxor.u32 %v2518, 2147483648
  %v4317 = vxor.u32 %v2523, 2147483648
  %v4318 = vxor.u32 %v2528, 2147483648
  %v4319 = vxor.u32 %v2533, 2147483648
  %v4320 = vxor.u32 %v2538, 2147483648
  %v4321 = vxor.u32 %v2543, 2147483648
  %v4322 = vxor.u32 %v2548, 2147483648
  %v4323 = vxor.u32 %v2553, 2147483648
  %v4324 = vxor.u32 %v2558, 2147483648
  %v4325 = vxor.u32 %v2563, 2147483648
  %v4326 = vxor.u32 %v2568, 2147483648
  %v4327 = vxor.u32 %v2573, 2147483648
  %v4328 = vxor.u32 %v2578, 2147483648
  %v4329 = vxor.u32 %v2583, 2147483648
  %v4330 = vxor.u32 %v2588, 2147483648
  %v4331 = vxor.u32 %v2593, 2147483648
  %v4332 = vxor.u32 %v2598, 2147483648
  %v4333 = vxor.u32 %v2603, 2147483648
  %v4334 = vxor.u32 %v2608, 2147483648
  %v4335 = vxor.u32 %v2613, 2147483648
  %v4336 = vxor.u32 %v2618, 2147483648
  %v4337 = vxor.u32 %v2623, 2147483648
  %v4338 = vxor.u32 %v2628, 2147483648
  %v4339 = vmul.f32 %v4271, 1.442695
  %v4340 = vpow.pop %v4339
  %v4341 = vmul.f32 %v4272, 1.442695
  %v4342 = vpow.pop %v4341
  %v4343 = vmul.f32 %v4273, 1.442695
  %v4344 = vpow.pop %v4343
  %v4345 = vmul.f32 %v4274, 1.442695
  %v4346 = vpow.pop %v4345
  %v4347 = vmul.f32 %v4275, 1.442695
  %v4348 = vpow.pop %v4347
  %v4349 = vmul.f32 %v4276, 1.442695
  %v4350 = vpow.pop %v4349
  %v4351 = vmul.f32 %v4277, 1.442695
  %v4352 = vpow.pop %v4351
  %v4353 = vmul.f32 %v4278, 1.442695
  %v4354 = vpow.pop %v4353
  %v4355 = vmul.f32 %v4279, 1.442695
  %v4356 = vpow.pop %v4355
  %v4357 = vmul.f32 %v4280, 1.442695
  %v4358 = vpow.pop %v4357
  %v4359 = vmul.f32 %v4281, 1.442695
  %v4360 = vpow.pop %v4359
  %v4361 = vmul.f32 %v4282, 1.442695
  %v4362 = vpow.pop %v4361
  %v4363 = vmul.f32 %v4283, 1.442695
  %v4364 = vpow.pop %v4363
  %v4365 = vmul.f32 %v4284, 1.442695
  %v4366 = vpow.pop %v4365
  %v4367 = vmul.f32 %v4285, 1.442695
  %v4368 = vpow.pop %v4367
  %v4369 = vmul.f32 %v4286, 1.442695
  %v4370 = vpow.pop %v4369
  %v4371 = vmul.f32 %v4287, 1.442695
  %v4372 = vpow.pop %v4371
  %v4373 = vmul.f32 %v4288, 1.442695
  %v4374 = vpow.pop %v4373
  %v4375 = vmul.f32 %v4289, 1.442695
  %v4376 = vpow.pop %v4375
  %v4377 = vmul.f32 %v4290, 1.442695
  %v4378 = vpow.pop %v4377
  %v4379 = vmul.f32 %v4291, 1.442695
  %v4380 = vpow.pop %v4379
  %v4381 = vmul.f32 %v4292, 1.442695
  %v4382 = vpow.pop %v4381
  %v4383 = vmul.f32 %v4293, 1.442695
  %v4384 = vpow.pop %v4383
  %v4385 = vmul.f32 %v4294, 1.442695
  %v4386 = vpow.pop %v4385
  %v4387 = vmul.f32 %v4295, 1.442695
  %v4388 = vpow.pop %v4387
  %v4389 = vmul.f32 %v4296, 1.442695
  %v4390 = vpow.pop %v4389
  %v4391 = vmul.f32 %v4297, 1.442695
  %v4392 = vpow.pop %v4391
  %v4393 = vmul.f32 %v4298, 1.442695
  %v4394 = vpow.pop %v4393
  %v4395 = vmul.f32 %v4299, 1.442695
  %v4396 = vpow.pop %v4395
  %v4397 = vmul.f32 %v4300, 1.442695
  %v4398 = vpow.pop %v4397
  %v4399 = vmul.f32 %v4301, 1.442695
  %v4400 = vpow.pop %v4399
  %v4401 = vmul.f32 %v4302, 1.442695
  %v4402 = vpow.pop %v4401
  %v4403 = vmul.f32 %v4303, 1.442695
  %v4404 = vpow.pop %v4403
  %v4405 = vmul.f32 %v4304, 1.442695
  %v4406 = vpow.pop %v4405
  %v4407 = vmul.f32 %v4305, 1.442695
  %v4408 = vpow.pop %v4407
  %v4409 = vmul.f32 %v4306, 1.442695
  %v4410 = vpow.pop %v4409
  %v4411 = vmul.f32 %v4307, 1.442695
  %v4412 = vpow.pop %v4411
  %v4413 = vmul.f32 %v4308, 1.442695
  %v4414 = vpow.pop %v4413
  %v4415 = vmul.f32 %v4309, 1.442695
  %v4416 = vpow.pop %v4415
  %v4417 = vmul.f32 %v4310, 1.442695
  %v4418 = vpow.pop %v4417
  %v4419 = vmul.f32 %v4311, 1.442695
  %v4420 = vpow.pop %v4419
  %v4421 = vmul.f32 %v4312, 1.442695
  %v4422 = vpow.pop %v4421
  %v4423 = vmul.f32 %v4313, 1.442695
  %v4424 = vpow.pop %v4423
  %v4425 = vmul.f32 %v4314, 1.442695
  %v4426 = vpow.pop %v4425
  %v4427 = vmul.f32 %v4315, 1.442695
  %v4428 = vpow.pop %v4427
  %v4429 = vmul.f32 %v4316, 1.442695
  %v4430 = vpow.pop %v4429
  %v4431 = vmul.f32 %v4317, 1.442695
  %v4432 = vpow.pop %v4431
  %v4433 = vmul.f32 %v4318, 1.442695
  %v4434 = vpow.pop %v4433
  %v4435 = vmul.f32 %v4319, 1.442695
  %v4436 = vpow.pop %v4435
  %v4437 = vmul.f32 %v4320, 1.442695
  %v4438 = vpow.pop %v4437
  %v4439 = vmul.f32 %v4321, 1.442695
  %v4440 = vpow.pop %v4439
  %v4441 = vmul.f32 %v4322, 1.442695
  %v4442 = vpow.pop %v4441
  %v4443 = vmul.f32 %v4323, 1.442695
  %v4444 = vpow.pop %v4443
  %v4445 = vmul.f32 %v4324, 1.442695
  %v4446 = vpow.pop %v4445
  %v4447 = vmul.f32 %v4325, 1.442695
  %v4448 = vpow.pop %v4447
  %v4449 = vmul.f32 %v4326, 1.442695
  %v4450 = vpow.pop %v4449
  %v4451 = vmul.f32 %v4327, 1.442695
  %v4452 = vpow.pop %v4451
  %v4453 = vmul.f32 %v4328, 1.442695
  %v4454 = vpow.pop %v4453
  %v4455 = vmul.f32 %v4329, 1.442695
  %v4456 = vpow.pop %v4455
  %v4457 = vmul.f32 %v4330, 1.442695
  %v4458 = vpow.pop %v4457
  %v4459 = vmul.f32 %v4331, 1.442695
  %v4460 = vpow.pop %v4459
  %v4461 = vmul.f32 %v4332, 1.442695
  %v4462 = vpow.pop %v4461
  %v4463 = vmul.f32 %v4333, 1.442695
  %v4464 = vpow.pop %v4463
  %v4465 = vmul.f32 %v4334, 1.442695
  %v4466 = vpow.pop %v4465
  %v4467 = vmul.f32 %v4335, 1.442695
  %v4468 = vpow.pop %v4467
  %v4469 = vmul.f32 %v4336, 1.442695
  %v4470 = vpow.pop %v4469
  %v4471 = vmul.f32 %v4337, 1.442695
  %v4472 = vpow.pop %v4471
  %v4473 = vmul.f32 %v4338, 1.442695
  %v4474 = vpow.pop %v4473
  %v4475 = vadd.f32 %v4340, 1.0
  %v4476 = vadd.f32 %v4342, 1.0
  %v4477 = vadd.f32 %v4344, 1.0
  %v4478 = vadd.f32 %v4346, 1.0
  %v4479 = vadd.f32 %v4348, 1.0
  %v4480 = vadd.f32 %v4350, 1.0
  %v4481 = vadd.f32 %v4352, 1.0
  %v4482 = vadd.f32 %v4354, 1.0
  %v4483 = vadd.f32 %v4356, 1.0
  %v4484 = vadd.f32 %v4358, 1.0
  %v4485 = vadd.f32 %v4360, 1.0
  %v4486 = vadd.f32 %v4362, 1.0
  %v4487 = vadd.f32 %v4364, 1.0
  %v4488 = vadd.f32 %v4366, 1.0
  %v4489 = vadd.f32 %v4368, 1.0
  %v4490 = vadd.f32 %v4370, 1.0
  %v4491 = vadd.f32 %v4372, 1.0
  %v4492 = vadd.f32 %v4374, 1.0
  %v4493 = vadd.f32 %v4376, 1.0
  %v4494 = vadd.f32 %v4378, 1.0
  %v4495 = vadd.f32 %v4380, 1.0
  %v4496 = vadd.f32 %v4382, 1.0
  %v4497 = vadd.f32 %v4384, 1.0
  %v4498 = vadd.f32 %v4386, 1.0
  %v4499 = vadd.f32 %v4388, 1.0
  %v4500 = vadd.f32 %v4390, 1.0
  %v4501 = vadd.f32 %v4392, 1.0
  %v4502 = vadd.f32 %v4394, 1.0
  %v4503 = vadd.f32 %v4396, 1.0
  %v4504 = vadd.f32 %v4398, 1.0
  %v4505 = vadd.f32 %v4400, 1.0
  %v4506 = vadd.f32 %v4402, 1.0
  %v4507 = vadd.f32 %v4404, 1.0
  %v4508 = vadd.f32 %v4406, 1.0
  %v4509 = vadd.f32 %v4408, 1.0
  %v4510 = vadd.f32 %v4410, 1.0
  %v4511 = vadd.f32 %v4412, 1.0
  %v4512 = vadd.f32 %v4414, 1.0
  %v4513 = vadd.f32 %v4416, 1.0
  %v4514 = vadd.f32 %v4418, 1.0
  %v4515 = vadd.f32 %v4420, 1.0
  %v4516 = vadd.f32 %v4422, 1.0
  %v4517 = vadd.f32 %v4424, 1.0
  %v4518 = vadd.f32 %v4426, 1.0
  %v4519 = vadd.f32 %v4428, 1.0
  %v4520 = vadd.f32 %v4430, 1.0
  %v4521 = vadd.f32 %v4432, 1.0
  %v4522 = vadd.f32 %v4434, 1.0
  %v4523 = vadd.f32 %v4436, 1.0
  %v4524 = vadd.f32 %v4438, 1.0
  %v4525 = vadd.f32 %v4440, 1.0
  %v4526 = vadd.f32 %v4442, 1.0
  %v4527 = vadd.f32 %v4444, 1.0
  %v4528 = vadd.f32 %v4446, 1.0
  %v4529 = vadd.f32 %v4448, 1.0
  %v4530 = vadd.f32 %v4450, 1.0
  %v4531 = vadd.f32 %v4452, 1.0
  %v4532 = vadd.f32 %v4454, 1.0
  %v4533 = vadd.f32 %v4456, 1.0
  %v4534 = vadd.f32 %v4458, 1.0
  %v4535 = vadd.f32 %v4460, 1.0
  %v4536 = vadd.f32 %v4462, 1.0
  %v4537 = vadd.f32 %v4464, 1.0
  %v4538 = vadd.f32 %v4466, 1.0
  %v4539 = vadd.f32 %v4468, 1.0
  %v4540 = vadd.f32 %v4470, 1.0
  %v4541 = vadd.f32 %v4472, 1.0
  %v4542 = vadd.f32 %v4474, 1.0
  %v4543 = vrcp.pop %v4475
  %v4544 = vmul.f32 1.0, %v4543
  %v4545 = vrcp.pop %v4476
  %v4546 = vmul.f32 1.0, %v4545
  %v4547 = vrcp.pop %v4477
  %v4548 = vmul.f32 1.0, %v4547
  %v4549 = vrcp.pop %v4478
  %v4550 = vmul.f32 1.0, %v4549
  %v4551 = vrcp.pop %v4479
  %v4552 = vmul.f32 1.0, %v4551
  %v4553 = vrcp.pop %v4480
  %v4554 = vmul.f32 1.0, %v4553
  %v4555 = vrcp.pop %v4481
  %v4556 = vmul.f32 1.0, %v4555
  %v4557 = vrcp.pop %v4482
  %v4558 = vmul.f32 1.0, %v4557
  %v4559 = vrcp.pop %v4483
  %v4560 = vmul.f32 1.0, %v4559
  %v4561 = vrcp.pop %v4484
  %v4562 = vmul.f32 1.0, %v4561
  %v4563 = vrcp.pop %v4485
  %v4564 = vmul.f32 1.0, %v4563
  %v4565 = vrcp.pop %v4486
  %v4566 = vmul.f32 1.0, %v4565
  %v4567 = vrcp.pop %v4487
  %v4568 = vmul.f32 1.0, %v4567
  %v4569 = vrcp.pop %v4488
  %v4570 = vmul.f32 1.0, %v4569
  %v4571 = vrcp.pop %v4489
  %v4572 = vmul.f32 1.0, %v4571
  %v4573 = vrcp.pop %v4490
  %v4574 = vmul.f32 1.0, %v4573
  %v4575 = vrcp.pop %v4491
  %v4576 = vmul.f32 1.0, %v4575
  %v4577 = vrcp.pop %v4492
  %v4578 = vmul.f32 1.0, %v4577
  %v4579 = vrcp.pop %v4493
  %v4580 = vmul.f32 1.0, %v4579
  %v4581 = vrcp.pop %v4494
  %v4582 = vmul.f32 1.0, %v4581
  %v4583 = vrcp.pop %v4495
  %v4584 = vmul.f32 1.0, %v4583
  %v4585 = vrcp.pop %v4496
  %v4586 = vmul.f32 1.0, %v4585
  %v4587 = vrcp.pop %v4497
  %v4588 = vmul.f32 1.0, %v4587
  %v4589 = vrcp.pop %v4498
  %v4590 = vmul.f32 1.0, %v4589
  %v4591 = vrcp.pop %v4499
  %v4592 = vmul.f32 1.0, %v4591
  %v4593 = vrcp.pop %v4500
  %v4594 = vmul.f32 1.0, %v4593
  %v4595 = vrcp.pop %v4501
  %v4596 = vmul.f32 1.0, %v4595
  %v4597 = vrcp.pop %v4502
  %v4598 = vmul.f32 1.0, %v4597
  %v4599 = vrcp.pop %v4503
  %v4600 = vmul.f32 1.0, %v4599
  %v4601 = vrcp.pop %v4504
  %v4602 = vmul.f32 1.0, %v4601
  %v4603 = vrcp.pop %v4505
  %v4604 = vmul.f32 1.0, %v4603
  %v4605 = vrcp.pop %v4506
  %v4606 = vmul.f32 1.0, %v4605
  %v4607 = vrcp.pop %v4507
  %v4608 = vmul.f32 1.0, %v4607
  %v4609 = vrcp.pop %v4508
  %v4610 = vmul.f32 1.0, %v4609
  %v4611 = vrcp.pop %v4509
  %v4612 = vmul.f32 1.0, %v4611
  %v4613 = vrcp.pop %v4510
  %v4614 = vmul.f32 1.0, %v4613
  %v4615 = vrcp.pop %v4511
  %v4616 = vmul.f32 1.0, %v4615
  %v4617 = vrcp.pop %v4512
  %v4618 = vmul.f32 1.0, %v4617
  %v4619 = vrcp.pop %v4513
  %v4620 = vmul.f32 1.0, %v4619
  %v4621 = vrcp.pop %v4514
  %v4622 = vmul.f32 1.0, %v4621
  %v4623 = vrcp.pop %v4515
  %v4624 = vmul.f32 1.0, %v4623
  %v4625 = vrcp.pop %v4516
  %v4626 = vmul.f32 1.0, %v4625
  %v4627 = vrcp.pop %v4517
  %v4628 = vmul.f32 1.0, %v4627
  %v4629 = vrcp.pop %v4518
  %v4630 = vmul.f32 1.0, %v4629
  %v4631 = vrcp.pop %v4519
  %v4632 = vmul.f32 1.0, %v4631
  %v4633 = vrcp.pop %v4520
  %v4634 = vmul.f32 1.0, %v4633
  %v4635 = vrcp.pop %v4521
  %v4636 = vmul.f32 1.0, %v4635
  %v4637 = vrcp.pop %v4522
  %v4638 = vmul.f32 1.0, %v4637
  %v4639 = vrcp.pop %v4523
  %v4640 = vmul.f32 1.0, %v4639
  %v4641 = vrcp.pop %v4524
  %v4642 = vmul.f32 1.0, %v4641
  %v4643 = vrcp.pop %v4525
  %v4644 = vmul.f32 1.0, %v4643
  %v4645 = vrcp.pop %v4526
  %v4646 = vmul.f32 1.0, %v4645
  %v4647 = vrcp.pop %v4527
  %v4648 = vmul.f32 1.0, %v4647
  %v4649 = vrcp.pop %v4528
  %v4650 = vmul.f32 1.0, %v4649
  %v4651 = vrcp.pop %v4529
  %v4652 = vmul.f32 1.0, %v4651
  %v4653 = vrcp.pop %v4530
  %v4654 = vmul.f32 1.0, %v4653
  %v4655 = vrcp.pop %v4531
  %v4656 = vmul.f32 1.0, %v4655
  %v4657 = vrcp.pop %v4532
  %v4658 = vmul.f32 1.0, %v4657
  %v4659 = vrcp.pop %v4533
  %v4660 = vmul.f32 1.0, %v4659
  %v4661 = vrcp.pop %v4534
  %v4662 = vmul.f32 1.0, %v4661
  %v4663 = vrcp.pop %v4535
  %v4664 = vmul.f32 1.0, %v4663
  %v4665 = vrcp.pop %v4536
  %v4666 = vmul.f32 1.0, %v4665
  %v4667 = vrcp.pop %v4537
  %v4668 = vmul.f32 1.0, %v4667
  %v4669 = vrcp.pop %v4538
  %v4670 = vmul.f32 1.0, %v4669
  %v4671 = vrcp.pop %v4539
  %v4672 = vmul.f32 1.0, %v4671
  %v4673 = vrcp.pop %v4540
  %v4674 = vmul.f32 1.0, %v4673
  %v4675 = vrcp.pop %v4541
  %v4676 = vmul.f32 1.0, %v4675
  %v4677 = vrcp.pop %v4542
  %v4678 = vmul.f32 1.0, %v4677
  %4747 = vrot.lane.b32.xlu0 %v4544, 2
  %v4748 = vpop.permute.xlu0 %4747
  %4749 = vrot.lane.b32.xlu0 %v4546, 2
  %v4750 = vpop.permute.xlu0 %4749
  %4751 = vrot.lane.b32.xlu0 %v4548, 2
  %v4752 = vpop.permute.xlu0 %4751
  %4753 = vrot.lane.b32.xlu0 %v4550, 2
  %v4754 = vpop.permute.xlu0 %4753
  %4755 = vrot.lane.b32.xlu0 %v4552, 2
  %v4756 = vpop.permute.xlu0 %4755
  %4757 = vrot.lane.b32.xlu0 %v4554, 2
  %v4758 = vpop.permute.xlu0 %4757
  %4759 = vrot.lane.b32.xlu0 %v4556, 2
  %v4760 = vpop.permute.xlu0 %4759
  %4761 = vrot.lane.b32.xlu0 %v4558, 2
  %v4762 = vpop.permute.xlu0 %4761
  %4763 = vrot.lane.b32.xlu0 %v4560, 2
  %v4764 = vpop.permute.xlu0 %4763
  %4765 = vrot.lane.b32.xlu0 %v4562, 2
  %v4766 = vpop.permute.xlu0 %4765
  %4767 = vrot.lane.b32.xlu0 %v4564, 2
  %v4768 = vpop.permute.xlu0 %4767
  %4769 = vrot.lane.b32.xlu0 %v4566, 2
  %v4770 = vpop.permute.xlu0 %4769
  %4771 = vrot.lane.b32.xlu0 %v4568, 2
  %v4772 = vpop.permute.xlu0 %4771
  %4773 = vrot.lane.b32.xlu0 %v4570, 2
  %v4774 = vpop.permute.xlu0 %4773
  %4775 = vrot.lane.b32.xlu0 %v4572, 2
  %v4776 = vpop.permute.xlu0 %4775
  %4777 = vrot.lane.b32.xlu0 %v4574, 2
  %v4778 = vpop.permute.xlu0 %4777
  %4779 = vrot.lane.b32.xlu0 %v4576, 2
  %v4780 = vpop.permute.xlu0 %4779
  %4781 = vrot.lane.b32.xlu0 %v4578, 2
  %v4782 = vpop.permute.xlu0 %4781
  %4783 = vrot.lane.b32.xlu0 %v4580, 2
  %v4784 = vpop.permute.xlu0 %4783
  %4785 = vrot.lane.b32.xlu0 %v4582, 2
  %v4786 = vpop.permute.xlu0 %4785
  %4787 = vrot.lane.b32.xlu0 %v4584, 2
  %v4788 = vpop.permute.xlu0 %4787
  %4789 = vrot.lane.b32.xlu0 %v4586, 2
  %v4790 = vpop.permute.xlu0 %4789
  %4791 = vrot.lane.b32.xlu0 %v4588, 2
  %v4792 = vpop.permute.xlu0 %4791
  %4793 = vrot.lane.b32.xlu0 %v4590, 2
  %v4794 = vpop.permute.xlu0 %4793
  %4795 = vrot.lane.b32.xlu0 %v4592, 2
  %v4796 = vpop.permute.xlu0 %4795
  %4797 = vrot.lane.b32.xlu0 %v4594, 2
  %v4798 = vpop.permute.xlu0 %4797
  %4799 = vrot.lane.b32.xlu0 %v4596, 2
  %v4800 = vpop.permute.xlu0 %4799
  %4801 = vrot.lane.b32.xlu0 %v4598, 2
  %v4802 = vpop.permute.xlu0 %4801
  %4803 = vrot.lane.b32.xlu0 %v4600, 2
  %v4804 = vpop.permute.xlu0 %4803
  %4805 = vrot.lane.b32.xlu0 %v4602, 2
  %v4806 = vpop.permute.xlu0 %4805
  %4807 = vrot.lane.b32.xlu0 %v4604, 2
  %v4808 = vpop.permute.xlu0 %4807
  %4809 = vrot.lane.b32.xlu0 %v4606, 2
  %v4810 = vpop.permute.xlu0 %4809
  %4811 = vrot.lane.b32.xlu0 %v4608, 2
  %v4812 = vpop.permute.xlu0 %4811
  %4813 = vrot.lane.b32.xlu0 %v4610, 2
  %v4814 = vpop.permute.xlu0 %4813
  %4815 = vrot.lane.b32.xlu0 %v4612, 2
  %v4816 = vpop.permute.xlu0 %4815
  %4817 = vrot.lane.b32.xlu0 %v4614, 2
  %v4818 = vpop.permute.xlu0 %4817
  %4819 = vrot.lane.b32.xlu0 %v4616, 2
  %v4820 = vpop.permute.xlu0 %4819
  %4821 = vrot.lane.b32.xlu0 %v4618, 2
  %v4822 = vpop.permute.xlu0 %4821
  %4823 = vrot.lane.b32.xlu0 %v4620, 2
  %v4824 = vpop.permute.xlu0 %4823
  %4825 = vrot.lane.b32.xlu0 %v4622, 2
  %v4826 = vpop.permute.xlu0 %4825
  %4827 = vrot.lane.b32.xlu0 %v4624, 2
  %v4828 = vpop.permute.xlu0 %4827
  %4829 = vrot.lane.b32.xlu0 %v4626, 2
  %v4830 = vpop.permute.xlu0 %4829
  %4831 = vrot.lane.b32.xlu0 %v4628, 2
  %v4832 = vpop.permute.xlu0 %4831
  %4833 = vrot.lane.b32.xlu0 %v4630, 2
  %v4834 = vpop.permute.xlu0 %4833
  %4835 = vrot.lane.b32.xlu0 %v4632, 2
  %v4836 = vpop.permute.xlu0 %4835
  %4837 = vrot.lane.b32.xlu0 %v4634, 2
  %v4838 = vpop.permute.xlu0 %4837
  %4839 = vrot.lane.b32.xlu0 %v4636, 2
  %v4840 = vpop.permute.xlu0 %4839
  %4841 = vrot.lane.b32.xlu0 %v4638, 2
  %v4842 = vpop.permute.xlu0 %4841
  %4843 = vrot.lane.b32.xlu0 %v4640, 2
  %v4844 = vpop.permute.xlu0 %4843
  %4845 = vrot.lane.b32.xlu0 %v4642, 2
  %v4846 = vpop.permute.xlu0 %4845
  %4847 = vrot.lane.b32.xlu0 %v4644, 2
  %v4848 = vpop.permute.xlu0 %4847
  %4849 = vrot.lane.b32.xlu0 %v4646, 2
  %v4850 = vpop.permute.xlu0 %4849
  %4851 = vrot.lane.b32.xlu0 %v4648, 2
  %v4852 = vpop.permute.xlu0 %4851
  %4853 = vrot.lane.b32.xlu0 %v4650, 2
  %v4854 = vpop.permute.xlu0 %4853
  %4855 = vrot.lane.b32.xlu0 %v4652, 2
  %v4856 = vpop.permute.xlu0 %4855
  %4857 = vrot.lane.b32.xlu0 %v4654, 2
  %v4858 = vpop.permute.xlu0 %4857
  %4859 = vrot.lane.b32.xlu0 %v4656, 2
  %v4860 = vpop.permute.xlu0 %4859
  %4861 = vrot.lane.b32.xlu0 %v4658, 2
  %v4862 = vpop.permute.xlu0 %4861
  %4863 = vrot.lane.b32.xlu0 %v4660, 2
  %v4864 = vpop.permute.xlu0 %4863
  %4865 = vrot.lane.b32.xlu0 %v4662, 2
  %v4866 = vpop.permute.xlu0 %4865
  %4867 = vrot.lane.b32.xlu0 %v4664, 2
  %v4868 = vpop.permute.xlu0 %4867
  %4869 = vrot.lane.b32.xlu0 %v4666, 2
  %v4870 = vpop.permute.xlu0 %4869
  %4871 = vrot.lane.b32.xlu0 %v4668, 2
  %v4872 = vpop.permute.xlu0 %4871
  %4873 = vrot.lane.b32.xlu0 %v4670, 2
  %v4874 = vpop.permute.xlu0 %4873
  %4875 = vrot.lane.b32.xlu0 %v4672, 2
  %v4876 = vpop.permute.xlu0 %4875
  %4877 = vrot.lane.b32.xlu0 %v4674, 2
  %v4878 = vpop.permute.xlu0 %4877
  %4879 = vrot.lane.b32.xlu0 %v4676, 2
  %v4880 = vpop.permute.xlu0 %4879
  %4881 = vrot.lane.b32.xlu0 %v4678, 2
  %v4882 = vpop.permute.xlu0 %4881
  %vm4951 = vcmask 31760
  %4952 = vst.msk [vmem:[%s4] sm:$0xff] %vm4951, %v4748
  %4953 = vst.msk [vmem:[%s4 + $0x8] sm:$0xff] %vm4951, %v4750
  %4954 = vst.msk [vmem:[%s4 + $0x10] sm:$0xff] %vm4951, %v4752
  %4955 = vst.msk [vmem:[%s4 + $0x18] sm:$0xff] %vm4951, %v4754
  %4956 = vst.msk [vmem:[%s4 + $0x20] sm:$0xff] %vm4951, %v4756
  %4957 = vst.msk [vmem:[%s4 + $0x28] sm:$0xff] %vm4951, %v4758
  %4958 = vst.msk [vmem:[%s4 + $0x30] sm:$0xff] %vm4951, %v4760
  %4959 = vst.msk [vmem:[%s4 + $0x38] sm:$0xff] %vm4951, %v4762
  %4960 = vst.msk [vmem:[%s4 + $0x40] sm:$0xff] %vm4951, %v4764
  %4961 = vst.msk [vmem:[%s4 + $0x48] sm:$0xff] %vm4951, %v4766
  %4962 = vst.msk [vmem:[%s4 + $0x50] sm:$0xff] %vm4951, %v4768
  %4963 = vst.msk [vmem:[%s4 + $0x58] sm:$0xff] %vm4951, %v4770
  %4964 = vst.msk [vmem:[%s4 + $0x60] sm:$0xff] %vm4951, %v4772
  %4965 = vst.msk [vmem:[%s4 + $0x68] sm:$0xff] %vm4951, %v4774
  %4966 = vst.msk [vmem:[%s4 + $0x70] sm:$0xff] %vm4951, %v4776
  %4967 = vst.msk [vmem:[%s4 + $0x78] sm:$0xff] %vm4951, %v4778
  %4968 = vst.msk [vmem:[%s4 + $0x80] sm:$0xff] %vm4951, %v4780
  %4969 = vst.msk [vmem:[%s4 + $0x88] sm:$0xff] %vm4951, %v4782
  %4970 = vst.msk [vmem:[%s4 + $0x90] sm:$0xff] %vm4951, %v4784
  %4971 = vst.msk [vmem:[%s4 + $0x98] sm:$0xff] %vm4951, %v4786
  %4972 = vst.msk [vmem:[%s4 + $0xa0] sm:$0xff] %vm4951, %v4788
  %4973 = vst.msk [vmem:[%s4 + $0xa8] sm:$0xff] %vm4951, %v4790
  %4974 = vst.msk [vmem:[%s4 + $0xb0] sm:$0xff] %vm4951, %v4792
  %4975 = vst.msk [vmem:[%s4 + $0xb8] sm:$0xff] %vm4951, %v4794
  %4976 = vst.msk [vmem:[%s4 + $0xc0] sm:$0xff] %vm4951, %v4796
  %4977 = vst.msk [vmem:[%s4 + $0xc8] sm:$0xff] %vm4951, %v4798
  %4978 = vst.msk [vmem:[%s4 + $0xd0] sm:$0xff] %vm4951, %v4800
  %4979 = vst.msk [vmem:[%s4 + $0xd8] sm:$0xff] %vm4951, %v4802
  %4980 = vst.msk [vmem:[%s4 + $0xe0] sm:$0xff] %vm4951, %v4804
  %4981 = vst.msk [vmem:[%s4 + $0xe8] sm:$0xff] %vm4951, %v4806
  %4982 = vst.msk [vmem:[%s4 + $0xf0] sm:$0xff] %vm4951, %v4808
  %4983 = vst.msk [vmem:[%s4 + $0xf8] sm:$0xff] %vm4951, %v4810
  %4984 = vst.msk [vmem:[%s4 + $0x100] sm:$0xff] %vm4951, %v4812
  %4985 = vst.msk [vmem:[%s4 + $0x108] sm:$0xff] %vm4951, %v4814
  %4986 = vst.msk [vmem:[%s4 + $0x110] sm:$0xff] %vm4951, %v4816
  %4987 = vst.msk [vmem:[%s4 + $0x118] sm:$0xff] %vm4951, %v4818
  %4988 = vst.msk [vmem:[%s4 + $0x120] sm:$0xff] %vm4951, %v4820
  %4989 = vst.msk [vmem:[%s4 + $0x128] sm:$0xff] %vm4951, %v4822
  %4990 = vst.msk [vmem:[%s4 + $0x130] sm:$0xff] %vm4951, %v4824
  %4991 = vst.msk [vmem:[%s4 + $0x138] sm:$0xff] %vm4951, %v4826
  %4992 = vst.msk [vmem:[%s4 + $0x140] sm:$0xff] %vm4951, %v4828
  %4993 = vst.msk [vmem:[%s4 + $0x148] sm:$0xff] %vm4951, %v4830
  %4994 = vst.msk [vmem:[%s4 + $0x150] sm:$0xff] %vm4951, %v4832
  %4995 = vst.msk [vmem:[%s4 + $0x158] sm:$0xff] %vm4951, %v4834
  %4996 = vst.msk [vmem:[%s4 + $0x160] sm:$0xff] %vm4951, %v4836
  %4997 = vst.msk [vmem:[%s4 + $0x168] sm:$0xff] %vm4951, %v4838
  %4998 = vst.msk [vmem:[%s4 + $0x170] sm:$0xff] %vm4951, %v4840
  %4999 = vst.msk [vmem:[%s4 + $0x178] sm:$0xff] %vm4951, %v4842
  %5000 = vst.msk [vmem:[%s4 + $0x180] sm:$0xff] %vm4951, %v4844
  %5001 = vst.msk [vmem:[%s4 + $0x188] sm:$0xff] %vm4951, %v4846
  %5002 = vst.msk [vmem:[%s4 + $0x190] sm:$0xff] %vm4951, %v4848
  %5003 = vst.msk [vmem:[%s4 + $0x198] sm:$0xff] %vm4951, %v4850
  %5004 = vst.msk [vmem:[%s4 + $0x1a0] sm:$0xff] %vm4951, %v4852
  %5005 = vst.msk [vmem:[%s4 + $0x1a8] sm:$0xff] %vm4951, %v4854
  %5006 = vst.msk [vmem:[%s4 + $0x1b0] sm:$0xff] %vm4951, %v4856
  %5007 = vst.msk [vmem:[%s4 + $0x1b8] sm:$0xff] %vm4951, %v4858
  %5008 = vst.msk [vmem:[%s4 + $0x1c0] sm:$0xff] %vm4951, %v4860
  %5009 = vst.msk [vmem:[%s4 + $0x1c8] sm:$0xff] %vm4951, %v4862
  %5010 = vst.msk [vmem:[%s4 + $0x1d0] sm:$0xff] %vm4951, %v4864
  %5011 = vst.msk [vmem:[%s4 + $0x1d8] sm:$0xff] %vm4951, %v4866
  %5012 = vst.msk [vmem:[%s4 + $0x1e0] sm:$0xff] %vm4951, %v4868
  %5013 = vst.msk [vmem:[%s4 + $0x1e8] sm:$0xff] %vm4951, %v4870
  %5014 = vst.msk [vmem:[%s4 + $0x1f0] sm:$0xff] %vm4951, %v4872
  %5015 = vst.msk [vmem:[%s4 + $0x1f8] sm:$0xff] %vm4951, %v4874
  %5016 = vst.msk [vmem:[%s4 + $0x200] sm:$0xff] %vm4951, %v4876
  %5017 = vst.msk [vmem:[%s4 + $0x208] sm:$0xff] %vm4951, %v4878
  %5018 = vst.msk [vmem:[%s4 + $0x210] sm:$0xff] %vm4951, %v4880
  %5019 = vst.msk [vmem:[%s4 + $0x218] sm:$0xff] %vm4951, %v4882
  %5088 = vrot.lane.b32.xlu0 %v3998, 2
  %v5089 = vpop.permute.xlu0 %5088
  %5090 = vrot.lane.b32.xlu0 %v3999, 2
  %v5091 = vpop.permute.xlu0 %5090
  %5092 = vrot.lane.b32.xlu0 %v4000, 2
  %v5093 = vpop.permute.xlu0 %5092
  %5094 = vrot.lane.b32.xlu0 %v4001, 2
  %v5095 = vpop.permute.xlu0 %5094
  %5096 = vrot.lane.b32.xlu0 %v4002, 2
  %v5097 = vpop.permute.xlu0 %5096
  %5098 = vrot.lane.b32.xlu0 %v4003, 2
  %v5099 = vpop.permute.xlu0 %5098
  %5100 = vrot.lane.b32.xlu0 %v4004, 2
  %v5101 = vpop.permute.xlu0 %5100
  %5102 = vrot.lane.b32.xlu0 %v4005, 2
  %v5103 = vpop.permute.xlu0 %5102
  %5104 = vrot.lane.b32.xlu0 %v4006, 2
  %v5105 = vpop.permute.xlu0 %5104
  %5106 = vrot.lane.b32.xlu0 %v4007, 2
  %v5107 = vpop.permute.xlu0 %5106
  %5108 = vrot.lane.b32.xlu0 %v4008, 2
  %v5109 = vpop.permute.xlu0 %5108
  %5110 = vrot.lane.b32.xlu0 %v4009, 2
  %v5111 = vpop.permute.xlu0 %5110
  %5112 = vrot.lane.b32.xlu0 %v4010, 2
  %v5113 = vpop.permute.xlu0 %5112
  %5114 = vrot.lane.b32.xlu0 %v4011, 2
  %v5115 = vpop.permute.xlu0 %5114
  %5116 = vrot.lane.b32.xlu0 %v4012, 2
  %v5117 = vpop.permute.xlu0 %5116
  %5118 = vrot.lane.b32.xlu0 %v4013, 2
  %v5119 = vpop.permute.xlu0 %5118
  %5120 = vrot.lane.b32.xlu0 %v4014, 2
  %v5121 = vpop.permute.xlu0 %5120
  %5122 = vrot.lane.b32.xlu0 %v4015, 2
  %v5123 = vpop.permute.xlu0 %5122
  %5124 = vrot.lane.b32.xlu0 %v4016, 2
  %v5125 = vpop.permute.xlu0 %5124
  %5126 = vrot.lane.b32.xlu0 %v4017, 2
  %v5127 = vpop.permute.xlu0 %5126
  %5128 = vrot.lane.b32.xlu0 %v4018, 2
  %v5129 = vpop.permute.xlu0 %5128
  %5130 = vrot.lane.b32.xlu0 %v4019, 2
  %v5131 = vpop.permute.xlu0 %5130
  %5132 = vrot.lane.b32.xlu0 %v4020, 2
  %v5133 = vpop.permute.xlu0 %5132
  %5134 = vrot.lane.b32.xlu0 %v4021, 2
  %v5135 = vpop.permute.xlu0 %5134
  %5136 = vrot.lane.b32.xlu0 %v4022, 2
  %v5137 = vpop.permute.xlu0 %5136
  %5138 = vrot.lane.b32.xlu0 %v4023, 2
  %v5139 = vpop.permute.xlu0 %5138
  %5140 = vrot.lane.b32.xlu0 %v4024, 2
  %v5141 = vpop.permute.xlu0 %5140
  %5142 = vrot.lane.b32.xlu0 %v4025, 2
  %v5143 = vpop.permute.xlu0 %5142
  %5144 = vrot.lane.b32.xlu0 %v4026, 2
  %v5145 = vpop.permute.xlu0 %5144
  %5146 = vrot.lane.b32.xlu0 %v4027, 2
  %v5147 = vpop.permute.xlu0 %5146
  %5148 = vrot.lane.b32.xlu0 %v4028, 2
  %v5149 = vpop.permute.xlu0 %5148
  %5150 = vrot.lane.b32.xlu0 %v4029, 2
  %v5151 = vpop.permute.xlu0 %5150
  %5152 = vrot.lane.b32.xlu0 %v4030, 2
  %v5153 = vpop.permute.xlu0 %5152
  %5154 = vrot.lane.b32.xlu0 %v4031, 2
  %v5155 = vpop.permute.xlu0 %5154
  %5156 = vrot.lane.b32.xlu0 %v4032, 2
  %v5157 = vpop.permute.xlu0 %5156
  %5158 = vrot.lane.b32.xlu0 %v4033, 2
  %v5159 = vpop.permute.xlu0 %5158
  %5160 = vrot.lane.b32.xlu0 %v4034, 2
  %v5161 = vpop.permute.xlu0 %5160
  %5162 = vrot.lane.b32.xlu0 %v4035, 2
  %v5163 = vpop.permute.xlu0 %5162
  %5164 = vrot.lane.b32.xlu0 %v4036, 2
  %v5165 = vpop.permute.xlu0 %5164
  %5166 = vrot.lane.b32.xlu0 %v4037, 2
  %v5167 = vpop.permute.xlu0 %5166
  %5168 = vrot.lane.b32.xlu0 %v4038, 2
  %v5169 = vpop.permute.xlu0 %5168
  %5170 = vrot.lane.b32.xlu0 %v4039, 2
  %v5171 = vpop.permute.xlu0 %5170
  %5172 = vrot.lane.b32.xlu0 %v4040, 2
  %v5173 = vpop.permute.xlu0 %5172
  %5174 = vrot.lane.b32.xlu0 %v4041, 2
  %v5175 = vpop.permute.xlu0 %5174
  %5176 = vrot.lane.b32.xlu0 %v4042, 2
  %v5177 = vpop.permute.xlu0 %5176
  %5178 = vrot.lane.b32.xlu0 %v4043, 2
  %v5179 = vpop.permute.xlu0 %5178
  %5180 = vrot.lane.b32.xlu0 %v4044, 2
  %v5181 = vpop.permute.xlu0 %5180
  %5182 = vrot.lane.b32.xlu0 %v4045, 2
  %v5183 = vpop.permute.xlu0 %5182
  %5184 = vrot.lane.b32.xlu0 %v4046, 2
  %v5185 = vpop.permute.xlu0 %5184
  %5186 = vrot.lane.b32.xlu0 %v4047, 2
  %v5187 = vpop.permute.xlu0 %5186
  %5188 = vrot.lane.b32.xlu0 %v4048, 2
  %v5189 = vpop.permute.xlu0 %5188
  %5190 = vrot.lane.b32.xlu0 %v4049, 2
  %v5191 = vpop.permute.xlu0 %5190
  %5192 = vrot.lane.b32.xlu0 %v4050, 2
  %v5193 = vpop.permute.xlu0 %5192
  %5194 = vrot.lane.b32.xlu0 %v4051, 2
  %v5195 = vpop.permute.xlu0 %5194
  %5196 = vrot.lane.b32.xlu0 %v4052, 2
  %v5197 = vpop.permute.xlu0 %5196
  %5198 = vrot.lane.b32.xlu0 %v4053, 2
  %v5199 = vpop.permute.xlu0 %5198
  %5200 = vrot.lane.b32.xlu0 %v4054, 2
  %v5201 = vpop.permute.xlu0 %5200
  %5202 = vrot.lane.b32.xlu0 %v4055, 2
  %v5203 = vpop.permute.xlu0 %5202
  %5204 = vrot.lane.b32.xlu0 %v4056, 2
  %v5205 = vpop.permute.xlu0 %5204
  %5206 = vrot.lane.b32.xlu0 %v4057, 2
  %v5207 = vpop.permute.xlu0 %5206
  %5208 = vrot.lane.b32.xlu0 %v4058, 2
  %v5209 = vpop.permute.xlu0 %5208
  %5210 = vrot.lane.b32.xlu0 %v4059, 2
  %v5211 = vpop.permute.xlu0 %5210
  %5212 = vrot.lane.b32.xlu0 %v4060, 2
  %v5213 = vpop.permute.xlu0 %5212
  %5214 = vrot.lane.b32.xlu0 %v4061, 2
  %v5215 = vpop.permute.xlu0 %5214
  %5216 = vrot.lane.b32.xlu0 %v4062, 2
  %v5217 = vpop.permute.xlu0 %5216
  %5218 = vrot.lane.b32.xlu0 %v4063, 2
  %v5219 = vpop.permute.xlu0 %5218
  %5220 = vrot.lane.b32.xlu0 %v4064, 2
  %v5221 = vpop.permute.xlu0 %5220
  %5222 = vrot.lane.b32.xlu0 %v4065, 2
  %v5223 = vpop.permute.xlu0 %5222
  %vm5292 = vcmask 48160
  %5293 = vst.msk [vmem:[%s4] sm:$0xff] %vm5292, %v5089
  %5294 = vst.msk [vmem:[%s4 + $0x8] sm:$0xff] %vm5292, %v5091
  %5295 = vst.msk [vmem:[%s4 + $0x10] sm:$0xff] %vm5292, %v5093
  %5296 = vst.msk [vmem:[%s4 + $0x18] sm:$0xff] %vm5292, %v5095
  %5297 = vst.msk [vmem:[%s4 + $0x20] sm:$0xff] %vm5292, %v5097
  %5298 = vst.msk [vmem:[%s4 + $0x28] sm:$0xff] %vm5292, %v5099
  %5299 = vst.msk [vmem:[%s4 + $0x30] sm:$0xff] %vm5292, %v5101
  %5300 = vst.msk [vmem:[%s4 + $0x38] sm:$0xff] %vm5292, %v5103
  %5301 = vst.msk [vmem:[%s4 + $0x40] sm:$0xff] %vm5292, %v5105
  %5302 = vst.msk [vmem:[%s4 + $0x48] sm:$0xff] %vm5292, %v5107
  %5303 = vst.msk [vmem:[%s4 + $0x50] sm:$0xff] %vm5292, %v5109
  %5304 = vst.msk [vmem:[%s4 + $0x58] sm:$0xff] %vm5292, %v5111
  %5305 = vst.msk [vmem:[%s4 + $0x60] sm:$0xff] %vm5292, %v5113
  %5306 = vst.msk [vmem:[%s4 + $0x68] sm:$0xff] %vm5292, %v5115
  %5307 = vst.msk [vmem:[%s4 + $0x70] sm:$0xff] %vm5292, %v5117
  %5308 = vst.msk [vmem:[%s4 + $0x78] sm:$0xff] %vm5292, %v5119
  %5309 = vst.msk [vmem:[%s4 + $0x80] sm:$0xff] %vm5292, %v5121
  %5310 = vst.msk [vmem:[%s4 + $0x88] sm:$0xff] %vm5292, %v5123
  %5311 = vst.msk [vmem:[%s4 + $0x90] sm:$0xff] %vm5292, %v5125
  %5312 = vst.msk [vmem:[%s4 + $0x98] sm:$0xff] %vm5292, %v5127
  %5313 = vst.msk [vmem:[%s4 + $0xa0] sm:$0xff] %vm5292, %v5129
  %5314 = vst.msk [vmem:[%s4 + $0xa8] sm:$0xff] %vm5292, %v5131
  %5315 = vst.msk [vmem:[%s4 + $0xb0] sm:$0xff] %vm5292, %v5133
  %5316 = vst.msk [vmem:[%s4 + $0xb8] sm:$0xff] %vm5292, %v5135
  %5317 = vst.msk [vmem:[%s4 + $0xc0] sm:$0xff] %vm5292, %v5137
  %5318 = vst.msk [vmem:[%s4 + $0xc8] sm:$0xff] %vm5292, %v5139
  %5319 = vst.msk [vmem:[%s4 + $0xd0] sm:$0xff] %vm5292, %v5141
  %5320 = vst.msk [vmem:[%s4 + $0xd8] sm:$0xff] %vm5292, %v5143
  %5321 = vst.msk [vmem:[%s4 + $0xe0] sm:$0xff] %vm5292, %v5145
  %5322 = vst.msk [vmem:[%s4 + $0xe8] sm:$0xff] %vm5292, %v5147
  %5323 = vst.msk [vmem:[%s4 + $0xf0] sm:$0xff] %vm5292, %v5149
  %5324 = vst.msk [vmem:[%s4 + $0xf8] sm:$0xff] %vm5292, %v5151
  %5325 = vst.msk [vmem:[%s4 + $0x100] sm:$0xff] %vm5292, %v5153
  %5326 = vst.msk [vmem:[%s4 + $0x108] sm:$0xff] %vm5292, %v5155
  %5327 = vst.msk [vmem:[%s4 + $0x110] sm:$0xff] %vm5292, %v5157
  %5328 = vst.msk [vmem:[%s4 + $0x118] sm:$0xff] %vm5292, %v5159
  %5329 = vst.msk [vmem:[%s4 + $0x120] sm:$0xff] %vm5292, %v5161
  %5330 = vst.msk [vmem:[%s4 + $0x128] sm:$0xff] %vm5292, %v5163
  %5331 = vst.msk [vmem:[%s4 + $0x130] sm:$0xff] %vm5292, %v5165
  %5332 = vst.msk [vmem:[%s4 + $0x138] sm:$0xff] %vm5292, %v5167
  %5333 = vst.msk [vmem:[%s4 + $0x140] sm:$0xff] %vm5292, %v5169
  %5334 = vst.msk [vmem:[%s4 + $0x148] sm:$0xff] %vm5292, %v5171
  %5335 = vst.msk [vmem:[%s4 + $0x150] sm:$0xff] %vm5292, %v5173
  %5336 = vst.msk [vmem:[%s4 + $0x158] sm:$0xff] %vm5292, %v5175
  %5337 = vst.msk [vmem:[%s4 + $0x160] sm:$0xff] %vm5292, %v5177
  %5338 = vst.msk [vmem:[%s4 + $0x168] sm:$0xff] %vm5292, %v5179
  %5339 = vst.msk [vmem:[%s4 + $0x170] sm:$0xff] %vm5292, %v5181
  %5340 = vst.msk [vmem:[%s4 + $0x178] sm:$0xff] %vm5292, %v5183
  %5341 = vst.msk [vmem:[%s4 + $0x180] sm:$0xff] %vm5292, %v5185
  %5342 = vst.msk [vmem:[%s4 + $0x188] sm:$0xff] %vm5292, %v5187
  %5343 = vst.msk [vmem:[%s4 + $0x190] sm:$0xff] %vm5292, %v5189
  %5344 = vst.msk [vmem:[%s4 + $0x198] sm:$0xff] %vm5292, %v5191
  %5345 = vst.msk [vmem:[%s4 + $0x1a0] sm:$0xff] %vm5292, %v5193
  %5346 = vst.msk [vmem:[%s4 + $0x1a8] sm:$0xff] %vm5292, %v5195
  %5347 = vst.msk [vmem:[%s4 + $0x1b0] sm:$0xff] %vm5292, %v5197
  %5348 = vst.msk [vmem:[%s4 + $0x1b8] sm:$0xff] %vm5292, %v5199
  %5349 = vst.msk [vmem:[%s4 + $0x1c0] sm:$0xff] %vm5292, %v5201
  %5350 = vst.msk [vmem:[%s4 + $0x1c8] sm:$0xff] %vm5292, %v5203
  %5351 = vst.msk [vmem:[%s4 + $0x1d0] sm:$0xff] %vm5292, %v5205
  %5352 = vst.msk [vmem:[%s4 + $0x1d8] sm:$0xff] %vm5292, %v5207
  %5353 = vst.msk [vmem:[%s4 + $0x1e0] sm:$0xff] %vm5292, %v5209
  %5354 = vst.msk [vmem:[%s4 + $0x1e8] sm:$0xff] %vm5292, %v5211
  %5355 = vst.msk [vmem:[%s4 + $0x1f0] sm:$0xff] %vm5292, %v5213
  %5356 = vst.msk [vmem:[%s4 + $0x1f8] sm:$0xff] %vm5292, %v5215
  %5357 = vst.msk [vmem:[%s4 + $0x200] sm:$0xff] %vm5292, %v5217
  %5358 = vst.msk [vmem:[%s4 + $0x208] sm:$0xff] %vm5292, %v5219
  %5359 = vst.msk [vmem:[%s4 + $0x210] sm:$0xff] %vm5292, %v5221
  %5360 = vst.msk [vmem:[%s4 + $0x218] sm:$0xff] %vm5292, %v5223
  %5429 = vrot.lane.b32.xlu0 %v4066, 4
  %v5430 = vpop.permute.xlu0 %5429
  %5431 = vrot.lane.b32.xlu0 %v4067, 4
  %v5432 = vpop.permute.xlu0 %5431
  %5433 = vrot.lane.b32.xlu0 %v4068, 4
  %v5434 = vpop.permute.xlu0 %5433
  %5435 = vrot.lane.b32.xlu0 %v4069, 4
  %v5436 = vpop.permute.xlu0 %5435
  %5437 = vrot.lane.b32.xlu0 %v4070, 4
  %v5438 = vpop.permute.xlu0 %5437
  %5439 = vrot.lane.b32.xlu0 %v4071, 4
  %v5440 = vpop.permute.xlu0 %5439
  %5441 = vrot.lane.b32.xlu0 %v4072, 4
  %v5442 = vpop.permute.xlu0 %5441
  %5443 = vrot.lane.b32.xlu0 %v4073, 4
  %v5444 = vpop.permute.xlu0 %5443
  %5445 = vrot.lane.b32.xlu0 %v4074, 4
  %v5446 = vpop.permute.xlu0 %5445
  %5447 = vrot.lane.b32.xlu0 %v4075, 4
  %v5448 = vpop.permute.xlu0 %5447
  %5449 = vrot.lane.b32.xlu0 %v4076, 4
  %v5450 = vpop.permute.xlu0 %5449
  %5451 = vrot.lane.b32.xlu0 %v4077, 4
  %v5452 = vpop.permute.xlu0 %5451
  %5453 = vrot.lane.b32.xlu0 %v4078, 4
  %v5454 = vpop.permute.xlu0 %5453
  %5455 = vrot.lane.b32.xlu0 %v4079, 4
  %v5456 = vpop.permute.xlu0 %5455
  %5457 = vrot.lane.b32.xlu0 %v4080, 4
  %v5458 = vpop.permute.xlu0 %5457
  %5459 = vrot.lane.b32.xlu0 %v4081, 4
  %v5460 = vpop.permute.xlu0 %5459
  %5461 = vrot.lane.b32.xlu0 %v4082, 4
  %v5462 = vpop.permute.xlu0 %5461
  %5463 = vrot.lane.b32.xlu0 %v4083, 4
  %v5464 = vpop.permute.xlu0 %5463
  %5465 = vrot.lane.b32.xlu0 %v4084, 4
  %v5466 = vpop.permute.xlu0 %5465
  %5467 = vrot.lane.b32.xlu0 %v4085, 4
  %v5468 = vpop.permute.xlu0 %5467
  %5469 = vrot.lane.b32.xlu0 %v4086, 4
  %v5470 = vpop.permute.xlu0 %5469
  %5471 = vrot.lane.b32.xlu0 %v4087, 4
  %v5472 = vpop.permute.xlu0 %5471
  %5473 = vrot.lane.b32.xlu0 %v4088, 4
  %v5474 = vpop.permute.xlu0 %5473
  %5475 = vrot.lane.b32.xlu0 %v4089, 4
  %v5476 = vpop.permute.xlu0 %5475
  %5477 = vrot.lane.b32.xlu0 %v4090, 4
  %v5478 = vpop.permute.xlu0 %5477
  %5479 = vrot.lane.b32.xlu0 %v4091, 4
  %v5480 = vpop.permute.xlu0 %5479
  %5481 = vrot.lane.b32.xlu0 %v4092, 4
  %v5482 = vpop.permute.xlu0 %5481
  %5483 = vrot.lane.b32.xlu0 %v4093, 4
  %v5484 = vpop.permute.xlu0 %5483
  %5485 = vrot.lane.b32.xlu0 %v4094, 4
  %v5486 = vpop.permute.xlu0 %5485
  %5487 = vrot.lane.b32.xlu0 %v4095, 4
  %v5488 = vpop.permute.xlu0 %5487
  %5489 = vrot.lane.b32.xlu0 %v4096, 4
  %v5490 = vpop.permute.xlu0 %5489
  %5491 = vrot.lane.b32.xlu0 %v4097, 4
  %v5492 = vpop.permute.xlu0 %5491
  %5493 = vrot.lane.b32.xlu0 %v4098, 4
  %v5494 = vpop.permute.xlu0 %5493
  %5495 = vrot.lane.b32.xlu0 %v4099, 4
  %v5496 = vpop.permute.xlu0 %5495
  %5497 = vrot.lane.b32.xlu0 %v4100, 4
  %v5498 = vpop.permute.xlu0 %5497
  %5499 = vrot.lane.b32.xlu0 %v4101, 4
  %v5500 = vpop.permute.xlu0 %5499
  %5501 = vrot.lane.b32.xlu0 %v4102, 4
  %v5502 = vpop.permute.xlu0 %5501
  %5503 = vrot.lane.b32.xlu0 %v4103, 4
  %v5504 = vpop.permute.xlu0 %5503
  %5505 = vrot.lane.b32.xlu0 %v4104, 4
  %v5506 = vpop.permute.xlu0 %5505
  %5507 = vrot.lane.b32.xlu0 %v4105, 4
  %v5508 = vpop.permute.xlu0 %5507
  %5509 = vrot.lane.b32.xlu0 %v4106, 4
  %v5510 = vpop.permute.xlu0 %5509
  %5511 = vrot.lane.b32.xlu0 %v4107, 4
  %v5512 = vpop.permute.xlu0 %5511
  %5513 = vrot.lane.b32.xlu0 %v4108, 4
  %v5514 = vpop.permute.xlu0 %5513
  %5515 = vrot.lane.b32.xlu0 %v4109, 4
  %v5516 = vpop.permute.xlu0 %5515
  %5517 = vrot.lane.b32.xlu0 %v4110, 4
  %v5518 = vpop.permute.xlu0 %5517
  %5519 = vrot.lane.b32.xlu0 %v4111, 4
  %v5520 = vpop.permute.xlu0 %5519
  %5521 = vrot.lane.b32.xlu0 %v4112, 4
  %v5522 = vpop.permute.xlu0 %5521
  %5523 = vrot.lane.b32.xlu0 %v4113, 4
  %v5524 = vpop.permute.xlu0 %5523
  %5525 = vrot.lane.b32.xlu0 %v4114, 4
  %v5526 = vpop.permute.xlu0 %5525
  %5527 = vrot.lane.b32.xlu0 %v4115, 4
  %v5528 = vpop.permute.xlu0 %5527
  %5529 = vrot.lane.b32.xlu0 %v4116, 4
  %v5530 = vpop.permute.xlu0 %5529
  %5531 = vrot.lane.b32.xlu0 %v4117, 4
  %v5532 = vpop.permute.xlu0 %5531
  %5533 = vrot.lane.b32.xlu0 %v4118, 4
  %v5534 = vpop.permute.xlu0 %5533
  %5535 = vrot.lane.b32.xlu0 %v4119, 4
  %v5536 = vpop.permute.xlu0 %5535
  %5537 = vrot.lane.b32.xlu0 %v4120, 4
  %v5538 = vpop.permute.xlu0 %5537
  %5539 = vrot.lane.b32.xlu0 %v4121, 4
  %v5540 = vpop.permute.xlu0 %5539
  %5541 = vrot.lane.b32.xlu0 %v4122, 4
  %v5542 = vpop.permute.xlu0 %5541
  %5543 = vrot.lane.b32.xlu0 %v4123, 4
  %v5544 = vpop.permute.xlu0 %5543
  %5545 = vrot.lane.b32.xlu0 %v4124, 4
  %v5546 = vpop.permute.xlu0 %5545
  %5547 = vrot.lane.b32.xlu0 %v4125, 4
  %v5548 = vpop.permute.xlu0 %5547
  %5549 = vrot.lane.b32.xlu0 %v4126, 4
  %v5550 = vpop.permute.xlu0 %5549
  %5551 = vrot.lane.b32.xlu0 %v4127, 4
  %v5552 = vpop.permute.xlu0 %5551
  %5553 = vrot.lane.b32.xlu0 %v4128, 4
  %v5554 = vpop.permute.xlu0 %5553
  %5555 = vrot.lane.b32.xlu0 %v4129, 4
  %v5556 = vpop.permute.xlu0 %5555
  %5557 = vrot.lane.b32.xlu0 %v4130, 4
  %v5558 = vpop.permute.xlu0 %5557
  %5559 = vrot.lane.b32.xlu0 %v4131, 4
  %v5560 = vpop.permute.xlu0 %5559
  %5561 = vrot.lane.b32.xlu0 %v4132, 4
  %v5562 = vpop.permute.xlu0 %5561
  %5563 = vrot.lane.b32.xlu0 %v4133, 4
  %v5564 = vpop.permute.xlu0 %5563
  %vm5633 = vcmask 64560
  %5634 = vst.msk [vmem:[%s4] sm:$0xff] %vm5633, %v5430
  %5635 = vst.msk [vmem:[%s4 + $0x8] sm:$0xff] %vm5633, %v5432
  %5636 = vst.msk [vmem:[%s4 + $0x10] sm:$0xff] %vm5633, %v5434
  %5637 = vst.msk [vmem:[%s4 + $0x18] sm:$0xff] %vm5633, %v5436
  %5638 = vst.msk [vmem:[%s4 + $0x20] sm:$0xff] %vm5633, %v5438
  %5639 = vst.msk [vmem:[%s4 + $0x28] sm:$0xff] %vm5633, %v5440
  %5640 = vst.msk [vmem:[%s4 + $0x30] sm:$0xff] %vm5633, %v5442
  %5641 = vst.msk [vmem:[%s4 + $0x38] sm:$0xff] %vm5633, %v5444
  %5642 = vst.msk [vmem:[%s4 + $0x40] sm:$0xff] %vm5633, %v5446
  %5643 = vst.msk [vmem:[%s4 + $0x48] sm:$0xff] %vm5633, %v5448
  %5644 = vst.msk [vmem:[%s4 + $0x50] sm:$0xff] %vm5633, %v5450
  %5645 = vst.msk [vmem:[%s4 + $0x58] sm:$0xff] %vm5633, %v5452
  %5646 = vst.msk [vmem:[%s4 + $0x60] sm:$0xff] %vm5633, %v5454
  %5647 = vst.msk [vmem:[%s4 + $0x68] sm:$0xff] %vm5633, %v5456
  %5648 = vst.msk [vmem:[%s4 + $0x70] sm:$0xff] %vm5633, %v5458
  %5649 = vst.msk [vmem:[%s4 + $0x78] sm:$0xff] %vm5633, %v5460
  %5650 = vst.msk [vmem:[%s4 + $0x80] sm:$0xff] %vm5633, %v5462
  %5651 = vst.msk [vmem:[%s4 + $0x88] sm:$0xff] %vm5633, %v5464
  %5652 = vst.msk [vmem:[%s4 + $0x90] sm:$0xff] %vm5633, %v5466
  %5653 = vst.msk [vmem:[%s4 + $0x98] sm:$0xff] %vm5633, %v5468
  %5654 = vst.msk [vmem:[%s4 + $0xa0] sm:$0xff] %vm5633, %v5470
  %5655 = vst.msk [vmem:[%s4 + $0xa8] sm:$0xff] %vm5633, %v5472
  %5656 = vst.msk [vmem:[%s4 + $0xb0] sm:$0xff] %vm5633, %v5474
  %5657 = vst.msk [vmem:[%s4 + $0xb8] sm:$0xff] %vm5633, %v5476
  %5658 = vst.msk [vmem:[%s4 + $0xc0] sm:$0xff] %vm5633, %v5478
  %5659 = vst.msk [vmem:[%s4 + $0xc8] sm:$0xff] %vm5633, %v5480
  %5660 = vst.msk [vmem:[%s4 + $0xd0] sm:$0xff] %vm5633, %v5482
  %5661 = vst.msk [vmem:[%s4 + $0xd8] sm:$0xff] %vm5633, %v5484
  %5662 = vst.msk [vmem:[%s4 + $0xe0] sm:$0xff] %vm5633, %v5486
  %5663 = vst.msk [vmem:[%s4 + $0xe8] sm:$0xff] %vm5633, %v5488
  %5664 = vst.msk [vmem:[%s4 + $0xf0] sm:$0xff] %vm5633, %v5490
  %5665 = vst.msk [vmem:[%s4 + $0xf8] sm:$0xff] %vm5633, %v5492
  %5666 = vst.msk [vmem:[%s4 + $0x100] sm:$0xff] %vm5633, %v5494
  %5667 = vst.msk [vmem:[%s4 + $0x108] sm:$0xff] %vm5633, %v5496
  %5668 = vst.msk [vmem:[%s4 + $0x110] sm:$0xff] %vm5633, %v5498
  %5669 = vst.msk [vmem:[%s4 + $0x118] sm:$0xff] %vm5633, %v5500
  %5670 = vst.msk [vmem:[%s4 + $0x120] sm:$0xff] %vm5633, %v5502
  %5671 = vst.msk [vmem:[%s4 + $0x128] sm:$0xff] %vm5633, %v5504
  %5672 = vst.msk [vmem:[%s4 + $0x130] sm:$0xff] %vm5633, %v5506
  %5673 = vst.msk [vmem:[%s4 + $0x138] sm:$0xff] %vm5633, %v5508
  %5674 = vst.msk [vmem:[%s4 + $0x140] sm:$0xff] %vm5633, %v5510
  %5675 = vst.msk [vmem:[%s4 + $0x148] sm:$0xff] %vm5633, %v5512
  %5676 = vst.msk [vmem:[%s4 + $0x150] sm:$0xff] %vm5633, %v5514
  %5677 = vst.msk [vmem:[%s4 + $0x158] sm:$0xff] %vm5633, %v5516
  %5678 = vst.msk [vmem:[%s4 + $0x160] sm:$0xff] %vm5633, %v5518
  %5679 = vst.msk [vmem:[%s4 + $0x168] sm:$0xff] %vm5633, %v5520
  %5680 = vst.msk [vmem:[%s4 + $0x170] sm:$0xff] %vm5633, %v5522
  %5681 = vst.msk [vmem:[%s4 + $0x178] sm:$0xff] %vm5633, %v5524
  %5682 = vst.msk [vmem:[%s4 + $0x180] sm:$0xff] %vm5633, %v5526
  %5683 = vst.msk [vmem:[%s4 + $0x188] sm:$0xff] %vm5633, %v5528
  %5684 = vst.msk [vmem:[%s4 + $0x190] sm:$0xff] %vm5633, %v5530
  %5685 = vst.msk [vmem:[%s4 + $0x198] sm:$0xff] %vm5633, %v5532
  %5686 = vst.msk [vmem:[%s4 + $0x1a0] sm:$0xff] %vm5633, %v5534
  %5687 = vst.msk [vmem:[%s4 + $0x1a8] sm:$0xff] %vm5633, %v5536
  %5688 = vst.msk [vmem:[%s4 + $0x1b0] sm:$0xff] %vm5633, %v5538
  %5689 = vst.msk [vmem:[%s4 + $0x1b8] sm:$0xff] %vm5633, %v5540
  %5690 = vst.msk [vmem:[%s4 + $0x1c0] sm:$0xff] %vm5633, %v5542
  %5691 = vst.msk [vmem:[%s4 + $0x1c8] sm:$0xff] %vm5633, %v5544
  %5692 = vst.msk [vmem:[%s4 + $0x1d0] sm:$0xff] %vm5633, %v5546
  %5693 = vst.msk [vmem:[%s4 + $0x1d8] sm:$0xff] %vm5633, %v5548
  %5694 = vst.msk [vmem:[%s4 + $0x1e0] sm:$0xff] %vm5633, %v5550
  %5695 = vst.msk [vmem:[%s4 + $0x1e8] sm:$0xff] %vm5633, %v5552
  %5696 = vst.msk [vmem:[%s4 + $0x1f0] sm:$0xff] %vm5633, %v5554
  %5697 = vst.msk [vmem:[%s4 + $0x1f8] sm:$0xff] %vm5633, %v5556
  %5698 = vst.msk [vmem:[%s4 + $0x200] sm:$0xff] %vm5633, %v5558
  %5699 = vst.msk [vmem:[%s4 + $0x208] sm:$0xff] %vm5633, %v5560
  %5700 = vst.msk [vmem:[%s4 + $0x210] sm:$0xff] %vm5633, %v5562
  %5701 = vst.msk [vmem:[%s4 + $0x218] sm:$0xff] %vm5633, %v5564
  // Predicated region
  $region18: #{_rpn_forward_impl.1} parent=0 // pred_check
    _
  $region19: #{_rpn_forward_impl.1} parent=0 // pred_check_branch
    %5703 = sbr.rel (0) target = $region21
  $region20: #{_rpn_forward_impl.1} parent=0 // pred_region
    _
  $region21: #{_rpn_forward_impl.1} parent=0 // pred_fallthru
    _
  // Predicated region
  $region22: #{_rpn_forward_impl.1} parent=0 // pred_check
    _
  $region23: #{_rpn_forward_impl.1} parent=0 // pred_check_branch
    %5705 = sbr.rel (0) target = $region25
  $region24: #{_rpn_forward_impl.1} parent=0 // pred_region
    _
  $region25: #{_rpn_forward_impl.1} parent=0 // pred_fallthru
    _

</llo_original>
